<compile_context>
chip_gen: v6e
topology: v6e:2x2x1
jax: 0.10.0
libtpu: 0.0.40
codegen_flags: <defaults>
</compile_context>

<pallas_src>
import jax
import jax.numpy as jnp
from jax.experimental import pallas as pl
from jax.experimental.pallas import tpu as pltpu


# ----------------------------- small helpers -----------------------------

def _round_up(v, m):
    return ((v + m - 1) // m) * m


def _pad_axis(a, axis, target):
    if a.shape[axis] == target:
        return a
    pads = [(0, 0)] * a.ndim
    pads[axis] = (0, target - a.shape[axis])
    return jnp.pad(a, pads)


def _chunk_rows(TH, W):
    """Spatial rows per inner chunk: ~512 flattened rows, dividing TH."""
    cy = min(TH, max(1, 512 // W))
    while TH % cy != 0:
        cy -= 1
    return cy


def _vmem_capacity_bytes():
    try:
        return int(pltpu.get_tpu_info().vmem_capacity_bytes)
    except Exception:
        return 64 * 1024 * 1024            # conservative (v7x per-TC VMEM)


def _vmem_estimate(TH, W, Cp, Cmp, out_bytes):
    in_tile = 2 * TH * W * Cp * 2           # bf16 interior, double-buffered
    halos = 2 * 2 * W * Cp * 2              # two 1-row halos, double-buffered
    out_tile = 2 * TH * W * Cp * out_bytes  # output, double-buffered
    consts = 2 * (Cp * Cmp * 2 + 9 * Cmp * Cp * 2 + 4 * 4 * (Cmp + Cp))
    mid = (TH + 2) * W * Cmp * 2            # bf16 mid scratch
    transient = 4 << 20                     # chunk accumulators / temporaries
    return in_tile + halos + out_tile + consts + mid + transient


def _pick_tile_rows(N, H, W, Cp, Cmp, out_bytes, budget):
    divisors = [d for d in range(1, H + 1) if H % d == 0]
    th = 1
    for d in sorted(divisors, reverse=True):
        if _vmem_estimate(d, W, Cp, Cmp, out_bytes) <= budget:
            th = d
            break
    # v7x has 2 TensorCores per chip: make sure the "parallel" grid has >= 2
    # steps to shard across them when H allows it.
    if N * (H // th) < 2:
        smaller = [d for d in divisors if d < th]
        if smaller:
            th = max(smaller)
    return th


# -------------------------------- kernel --------------------------------

def darknet_block_kernel(x_ref, xt_ref, xb_ref, w1_ref, s1_ref, b1_ref,
                         w2_ref, s2_ref, b2_ref, o_ref, mid_ref):
    _, TH, W, Cp = x_ref.shape              # interior tile (bf16)
    Cmp = w1_ref.shape[1]
    CY = _chunk_rows(TH, W)                 # spatial rows per inner chunk
    n_chunks = TH // CY
    rows = CY * W                           # flattened rows per chunk
    w_align = min(W & -W, 128)              # largest pow2 dividing W
    unroll = n_chunks <= 8

    h = pl.program_id(1)
    nH = pl.num_programs(1)

    s1 = s1_ref[...]                        # (1, Cmp) f32
    b1 = b1_ref[...]
    s2 = s2_ref[...]                        # (1, Cp)  f32
    b2 = b2_ref[...]

    # ------------- conv1 (1x1) + folded BN + ReLU -> bf16 mid scratch -------------
    # Chunked so the f32 intermediate stays small (no whole-tile sweeps).
    def conv1_chunk(c, carry):
        xc = x_ref[0, pl.ds(c * CY, CY)].reshape(rows, Cp)          # bf16
        m = jnp.dot(xc, w1_ref[...], preferred_element_type=jnp.float32)
        m = jnp.maximum(m * s1 + b1, 0.0)
        dst = pl.multiple_of(W + c * rows, w_align)
        mid_ref[pl.ds(dst, rows), :] = m.astype(mid_ref.dtype)
        return carry

    jax.lax.fori_loop(0, n_chunks, conv1_chunk, 0, unroll=unroll)

    # Halo rows (row just above / below the tile).  Outside the image the 3x3
    # conv sees zero-padded *mid*, so zero the computed halo there.
    def halo_mid(row, valid):
        m = jnp.dot(row, w1_ref[...], preferred_element_type=jnp.float32)
        m = jnp.maximum(m * s1 + b1, 0.0)
        return (m * valid.astype(jnp.float32)).astype(mid_ref.dtype)

    mid_ref[0:W, :] = halo_mid(xt_ref[0, 0], h > 0)
    mid_ref[(TH + 1) * W:(TH + 2) * W, :] = halo_mid(xb_ref[0, 0], h < nH - 1)

    # ------------- conv2 (3x3, pad=1) + folded BN + ReLU + residual -------------
    # In-kernel column masks (cheap iota) instead of streamed mask inputs.
    idx = jax.lax.broadcasted_iota(jnp.int32, (rows, 1), 0)
    if (W & (W - 1)) == 0:
        col = jnp.bitwise_and(idx, W - 1)
    else:
        col = jax.lax.rem(idx, W)
    left_ok = col > 0                      # zero where out column == 0
    right_ok = col < (W - 1)               # zero where out column == W-1

    def conv2_chunk(c, carry):
        base = c * rows
        # One matmul per dy with tap-packed weights (N = 3*Cp): columns are
        # [center | left | right] partial sums.
        acc = jnp.zeros((rows, 3 * Cp), jnp.float32)
        for dy in range(3):
            src = pl.multiple_of(base + dy * W, w_align)
            slab = mid_ref[pl.ds(src, rows), :]                      # bf16
            acc = acc + jnp.dot(slab, w2_ref[dy],
                                preferred_element_type=jnp.float32)
        out = acc[:, :Cp]
        # Horizontal +-1 taps: roll the partial sums by one flattened row and
        # mask the wrapped border column (== conv2 zero padding on W).  Roll
        # shifts must be non-negative: -1 == rows-1 circularly.
        out = out + jnp.where(left_ok, pltpu.roll(acc[:, Cp:2 * Cp], 1, 0), 0.0)
        out = out + jnp.where(right_ok,
                              pltpu.roll(acc[:, 2 * Cp:3 * Cp], rows - 1, 0), 0.0)
        out = jnp.maximum(out * s2 + b2, 0.0)
        # residual add + store this chunk
        xc = x_ref[0, pl.ds(c * CY, CY)].reshape(rows, Cp).astype(jnp.float32)
        o_ref[0, pl.ds(c * CY, CY)] = (xc + out).reshape(CY, W, Cp).astype(o_ref.dtype)
        return carry

    jax.lax.fori_loop(0, n_chunks, conv2_chunk, 0, unroll=unroll)


# ------------------------------- wrappers -------------------------------

def darknet_block_nhwc(x_nhwc, params, tile_rows=None, out_dtype=None):
    """DarknetBlock forward, NHWC layout (the performance path)."""
    w1, s1, b1, w2, s2, b2 = params
    N, H, W, C = x_nhwc.shape
    Cm = w1.shape[1]
    # Sublane alignment of the flattened mid scratch; W % 16 == 0 additionally
    # avoids bf16 repack passes on the per-dy slabs.
    assert W % 8 == 0, "W must be a multiple of 8"

    out_dtype = x_nhwc.dtype if out_dtype is None else out_dtype

    # lane-dense channel padding (no-op when C / Cm are multiples of 128)
    Cp = _round_up(C, 128)
    Cmp = _round_up(Cm, 128)

    x_p = _pad_axis(x_nhwc, 3, Cp).astype(jnp.bfloat16)
    w1_p = _pad_axis(_pad_axis(w1, 0, Cp), 1, Cmp).astype(jnp.bfloat16)
    s1_p = _pad_axis(s1, 1, Cmp).astype(jnp.float32)
    b1_p = _pad_axis(b1, 1, Cmp).astype(jnp.float32)
    w2_p = _pad_axis(_pad_axis(w2, 2, Cmp), 3, Cp).astype(jnp.bfloat16)
    s2_p = _pad_axis(s2, 1, Cp).astype(jnp.float32)
    b2_p = _pad_axis(b2, 1, Cp).astype(jnp.float32)

    # Tap-packed 3x3 weights: (3, Cmp, 3*Cp) = [center | left | right] along N.
    w2_packed = jnp.concatenate([w2_p[:, 1], w2_p[:, 0], w2_p[:, 2]], axis=-1)

    # Generation-aware VMEM budget / tile size.
    vmem_cap = _vmem_capacity_bytes()
    vmem_limit = int(vmem_cap * 0.8)
    if tile_rows is None:
        tile_rows = _pick_tile_rows(N, H, W, Cp, Cmp,
                                    jnp.dtype(out_dtype).itemsize,
                                    budget=(vmem_limit * 3) // 4)
    TH = tile_rows
    # TODO(synk): ragged H (H % TH != 0) would need a masked last tile.
    assert H % TH == 0, "tile_rows must divide H"
    nH = H // TH

    const2 = lambda n, h: (0, 0)
    const3 = lambda n, h: (0, 0, 0)

    def _run(const_pipeline_mode):
        ckw = ({} if const_pipeline_mode is None
               else {"pipeline_mode": const_pipeline_mode})
        in_specs = [
            # interior rows of this tile
            pl.BlockSpec((1, TH, W, Cp), lambda n, h: (n, h, 0, 0)),
            # 1-row halos just above / below the tile (clamped at the image
            # border; the kernel zeroes the resulting mid rows there)
            pl.BlockSpec((1, 1, W, Cp),
                         lambda n, h: (n, jnp.maximum(h * TH - 1, 0), 0, 0)),
            pl.BlockSpec((1, 1, W, Cp),
                         lambda n, h: (n, jnp.minimum(h * TH + TH, H - 1), 0, 0)),
            # constant operands: single-buffered when supported
            pl.BlockSpec((Cp, Cmp), const2, **ckw),
            pl.BlockSpec((1, Cmp), const2, **ckw),
            pl.BlockSpec((1, Cmp), const2, **ckw),
            pl.BlockSpec((3, Cmp, 3 * Cp), const3, **ckw),
            pl.BlockSpec((1, Cp), const2, **ckw),
            pl.BlockSpec((1, Cp), const2, **ckw),
        ]
        return pl.pallas_call(
            darknet_block_kernel,
            out_shape=jax.ShapeDtypeStruct((N, H, W, Cp), out_dtype),
            grid_spec=pltpu.PrefetchScalarGridSpec(
                num_scalar_prefetch=0,
                grid=(N, nH),
                in_specs=in_specs,
                out_specs=pl.BlockSpec((1, TH, W, Cp), lambda n, h: (n, h, 0, 0)),
                scratch_shapes=[pltpu.VMEM(((TH + 2) * W, Cmp), jnp.bfloat16)],
            ),
            compiler_params=pltpu.CompilerParams(
                dimension_semantics=("parallel", "parallel"),
                vmem_limit_bytes=vmem_limit,
            ),
        )(x_p, x_p, x_p, w1_p, s1_p, b1_p, w2_packed, s2_p, b2_p)

    buffered = getattr(pl, "Buffered", None)
    if buffered is not None:
        try:
            out = jax.block_until_ready(_run(buffered(1)))
        except Exception:
            # Fallback for environments that reject single-buffered constants.
            out = jax.block_until_ready(_run(None))
    else:
        out = jax.block_until_ready(_run(None))

    if Cp != C:
        out = out[..., :C]
    return out


def darknet_block(x_nchw, params, tile_rows=None, out_dtype=None):
    """PyTorch-interface adapter (NCHW). In production keep the whole model
    NHWC and call darknet_block_nhwc directly to avoid these transposes."""
    x = jnp.transpose(x_nchw, (0, 2, 3, 1))
    y = darknet_block_nhwc(x, params, tile_rows=tile_rows, out_dtype=out_dtype)
    return jnp.transpose(y, (0, 3, 1, 2))


# --------------------------- params & reference ---------------------------

def init_params(key, in_channels, expansion=0.5, dtype=jnp.float32):
    """Deterministic synthetic params. BN (eval mode) folded to scale/bias."""
    mid = int(in_channels * expansion)
    eps = 1e-5
    ks = jax.random.split(key, 10)

    # conv1: PyTorch weight (mid, in, 1, 1) -> stored as (in, mid)
    w1 = jax.random.normal(ks[0], (in_channels, mid), dtype) * 0.1
    g1 = jax.random.uniform(ks[1], (mid,), dtype, 0.5, 1.5)
    beta1 = jax.random.normal(ks[2], (mid,), dtype) * 0.1
    mean1 = jax.random.normal(ks[3], (mid,), dtype) * 0.1
    var1 = jax.random.uniform(ks[4], (mid,), dtype, 0.5, 1.5)
    s1 = (g1 / jnp.sqrt(var1 + eps)).reshape(1, mid)
    b1 = (beta1 - mean1 * g1 / jnp.sqrt(var1 + eps)).reshape(1, mid)

    # conv2: PyTorch weight (in, mid, 3, 3) -> stored HWIO (3, 3, mid, in)
    w2 = jax.random.normal(ks[5], (3, 3, mid, in_channels), dtype) * 0.1
    g2 = jax.random.uniform(ks[6], (in_channels,), dtype, 0.5, 1.5)
    beta2 = jax.random.normal(ks[7], (in_channels,), dtype) * 0.1
    mean2 = jax.random.normal(ks[8], (in_channels,), dtype) * 0.1
    var2 = jax.random.uniform(ks[9], (in_channels,), dtype, 0.5, 1.5)
    s2 = (g2 / jnp.sqrt(var2 + eps)).reshape(1, in_channels)
    b2 = (beta2 - mean2 * g2 / jnp.sqrt(var2 + eps)).reshape(1, in_channels)

    return (w1, s1, b1, w2, s2, b2)


def reference(x_nhwc, params):
    """Pure-JAX reference (lax conv), with x / weights cast through bf16 to
    match what the kernel actually consumes (f32 math otherwise).  The kernel
    additionally rounds mid through bf16 (covered by the test tolerance)."""
    w1, s1, b1, w2, s2, b2 = params
    f32 = jnp.float32
    x = x_nhwc.astype(jnp.bfloat16).astype(f32)
    w1 = w1.astype(jnp.bfloat16).astype(f32)
    w2 = w2.astype(jnp.bfloat16).astype(f32)
    dn = ("NHWC", "HWIO", "NHWC")
    mid = jax.lax.conv_general_dilated(
        x, w1.reshape(1, 1, *w1.shape), (1, 1), "VALID", dimension_numbers=dn)
    mid = jnp.maximum(mid * s1 + b1, 0.0)
    out = jax.lax.conv_general_dilated(
        mid, w2, (1, 1), "SAME", dimension_numbers=dn)
    out = jnp.maximum(out * s2 + b2, 0.0)
    return x + out


if __name__ == "__main__":
    key = jax.random.PRNGKey(0)
    k_x, k_p = jax.random.split(key)

    N, C, H, W = 2, 4, 16, 16            # in_channels=4, expansion=0.5 -> mid=2
    x_nchw = jax.random.normal(k_x, (N, C, H, W), jnp.float32)
    params = init_params(k_p, in_channels=C, expansion=0.5)

    # NHWC performance path (tile_rows=8 -> 2 row-tiles per image, halo path
    # exercised)
    x_nhwc = jnp.transpose(x_nchw, (0, 2, 3, 1))
    y = darknet_block_nhwc(x_nhwc, params, tile_rows=8)
    y = jax.block_until_ready(y)

    y_ref = reference(x_nhwc, params)
    assert y.shape == x_nhwc.shape and y.dtype == x_nhwc.dtype
    err = float(jnp.max(jnp.abs(y - y_ref)))
    assert jnp.allclose(y, y_ref, atol=1e-2, rtol=1e-2), (
        f"mismatch vs reference (max abs err {err})")

    # PyTorch-interface (NCHW) adapter gives the same result
    y_nchw = darknet_block(x_nchw, params, tile_rows=8)
    y_nchw = jax.block_until_ready(y_nchw)
    assert jnp.allclose(jnp.transpose(y_nchw, (0, 2, 3, 1)), y,
                        atol=1e-6, rtol=1e-6)

    print("KERNEL_OK")
</pallas_src>

<mosaic_0001>
module attributes {stable_mosaic.version = 11 : i64} {
  func.func @darknet_block_kernel(%arg0: i32, %arg1: i32, %arg2: memref<1x8x16x128xbf16, #tpu.memory_space<vmem>>, %arg3: memref<1x1x16x128xbf16, #tpu.memory_space<vmem>>, %arg4: memref<1x1x16x128xbf16, #tpu.memory_space<vmem>>, %arg5: memref<128x128xbf16, #tpu.memory_space<vmem>>, %arg6: memref<1x128xf32, #tpu.memory_space<vmem>>, %arg7: memref<1x128xf32, #tpu.memory_space<vmem>>, %arg8: memref<3x128x384xbf16, #tpu.memory_space<vmem>>, %arg9: memref<1x128xf32, #tpu.memory_space<vmem>>, %arg10: memref<1x128xf32, #tpu.memory_space<vmem>>, %arg11: memref<1x8x16x128xf32, #tpu.memory_space<vmem>>, %arg12: memref<160x128xbf16, #tpu.memory_space<vmem>>) attributes {dimension_semantics = [#tpu.dimension_semantics<parallel>, #tpu.dimension_semantics<parallel>], iteration_bounds = array<i64: 2, 2>, scalar_prefetch = 0 : i64, scratch_operands = 1 : i64, tpu.core_type = #tpu.core_type<tc>, window_params = [{transform_indices = @transform_0, window_bounds = array<i64: 1, 8, 16, 128>}, {transform_indices = @transform_1, window_bounds = array<i64: 1, 1, 16, 128>}, {transform_indices = @transform_2, window_bounds = array<i64: 1, 1, 16, 128>}, {pipeline_mode = #tpu.pipeline_mode<synchronous>, transform_indices = @transform_3, window_bounds = array<i64: 128, 128>}, {pipeline_mode = #tpu.pipeline_mode<synchronous>, transform_indices = @transform_4, window_bounds = array<i64: 1, 128>}, {pipeline_mode = #tpu.pipeline_mode<synchronous>, transform_indices = @transform_5, window_bounds = array<i64: 1, 128>}, {pipeline_mode = #tpu.pipeline_mode<synchronous>, transform_indices = @transform_6, window_bounds = array<i64: 3, 128, 384>}, {pipeline_mode = #tpu.pipeline_mode<synchronous>, transform_indices = @transform_7, window_bounds = array<i64: 1, 128>}, {pipeline_mode = #tpu.pipeline_mode<synchronous>, transform_indices = @transform_8, window_bounds = array<i64: 1, 128>}, {transform_indices = @transform_9, window_bounds = array<i64: 1, 8, 16, 128>}]} {
    %c0 = arith.constant 0 : index
    %c0_0 = arith.constant 0 : index
    %0 = vector.load %arg6[%c0, %c0_0] : memref<1x128xf32, #tpu.memory_space<vmem>>, vector<1x128xf32>
    %c0_1 = arith.constant 0 : index
    %c0_2 = arith.constant 0 : index
    %1 = vector.load %arg7[%c0_1, %c0_2] : memref<1x128xf32, #tpu.memory_space<vmem>>, vector<1x128xf32>
    %c0_3 = arith.constant 0 : index
    %c0_4 = arith.constant 0 : index
    %2 = vector.load %arg9[%c0_3, %c0_4] : memref<1x128xf32, #tpu.memory_space<vmem>>, vector<1x128xf32>
    %c0_5 = arith.constant 0 : index
    %c0_6 = arith.constant 0 : index
    %3 = vector.load %arg10[%c0_5, %c0_6] : memref<1x128xf32, #tpu.memory_space<vmem>>, vector<1x128xf32>
    %c0_i32 = arith.constant 0 : i32
    %c8_i32 = arith.constant 8 : i32
    %4 = arith.muli %c0_i32, %c8_i32 : i32
    %c0_7 = arith.constant 0 : index
    %5 = arith.index_cast %4 : i32 to index
    %c0_8 = arith.constant 0 : index
    %c0_9 = arith.constant 0 : index
    %6 = vector.load %arg2[%c0_7, %5, %c0_8, %c0_9] : memref<1x8x16x128xbf16, #tpu.memory_space<vmem>>, vector<1x8x16x128xbf16>
    %7 = vector.shape_cast %6 : vector<1x8x16x128xbf16> to vector<8x16x128xbf16>
    %8 = vector.shape_cast %7 : vector<8x16x128xbf16> to vector<128x128xbf16>
    %c0_10 = arith.constant 0 : index
    %c0_11 = arith.constant 0 : index
    %9 = vector.load %arg5[%c0_10, %c0_11] : memref<128x128xbf16, #tpu.memory_space<vmem>>, vector<128x128xbf16>
    %cst = arith.constant dense<0.000000e+00> : vector<128x128xf32>
    %10 = tpu.matmul %8, %9, %cst {dimension_numbers = #tpu.dot_dimension_numbers<[1], [0], [0], [1], [0, 0, 1, 1], [], []>} : vector<128x128xbf16>, vector<128x128xbf16>, vector<128x128xf32> -> vector<128x128xf32>
    %11 = vector.broadcast %0 : vector<1x128xf32> to vector<128x128xf32>
    %12 = arith.mulf %10, %11 : vector<128x128xf32>
    %13 = vector.broadcast %1 : vector<1x128xf32> to vector<128x128xf32>
    %14 = arith.addf %12, %13 : vector<128x128xf32>
    %cst_12 = arith.constant 0.000000e+00 : f32
    %15 = vector.broadcast %cst_12 : f32 to vector<128x128xf32>
    %16 = arith.maximumf %14, %15 : vector<128x128xf32>
    %c128_i32 = arith.constant 128 : i32
    %17 = arith.muli %c0_i32, %c128_i32 : i32
    %c16_i32 = arith.constant 16 : i32
    %18 = arith.addi %c16_i32, %17 : i32
    %19 = tpu.assume_multiple %18, 16 : i32
    %20 = arith.truncf %16 : vector<128x128xf32> to vector<128x128xbf16>
    %21 = arith.index_cast %19 : i32 to index
    %c0_13 = arith.constant 0 : index
    %22 = vector.load %arg12[%21, %c0_13] : memref<160x128xbf16, #tpu.memory_space<vmem>>, vector<128x128xbf16>
    tpu.vector_store %arg12[%21, %c0_13], %20 {strides = array<i32>} : memref<160x128xbf16, #tpu.memory_space<vmem>>, vector<128x128xbf16>,
    %c1_i32 = arith.constant 1 : i32
    %c0_14 = arith.constant 0 : index
    %c0_15 = arith.constant 0 : index
    %c0_16 = arith.constant 0 : index
    %c0_17 = arith.constant 0 : index
    %23 = vector.load %arg3[%c0_14, %c0_15, %c0_16, %c0_17] : memref<1x1x16x128xbf16, #tpu.memory_space<vmem>>, vector<1x1x16x128xbf16>
    %24 = vector.shape_cast %23 : vector<1x1x16x128xbf16> to vector<16x128xbf16>
    %c0_i32_18 = arith.constant 0 : i32
    %25 = arith.cmpi sgt, %arg1, %c0_i32_18 : i32
    %c0_19 = arith.constant 0 : index
    %c0_20 = arith.constant 0 : index
    %26 = vector.load %arg5[%c0_19, %c0_20] : memref<128x128xbf16, #tpu.memory_space<vmem>>, vector<128x128xbf16>
    %cst_21 = arith.constant dense<0.000000e+00> : vector<16x128xf32>
    %27 = tpu.matmul %24, %26, %cst_21 {dimension_numbers = #tpu.dot_dimension_numbers<[1], [0], [0], [1], [0, 0, 1, 1], [], []>} : vector<16x128xbf16>, vector<128x128xbf16>, vector<16x128xf32> -> vector<16x128xf32>
    %28 = vector.broadcast %0 : vector<1x128xf32> to vector<16x128xf32>
    %29 = arith.mulf %27, %28 : vector<16x128xf32>
    %30 = vector.broadcast %1 : vector<1x128xf32> to vector<16x128xf32>
    %31 = arith.addf %29, %30 : vector<16x128xf32>
    %cst_22 = arith.constant 0.000000e+00 : f32
    %32 = vector.broadcast %cst_22 : f32 to vector<16x128xf32>
    %33 = arith.maximumf %31, %32 : vector<16x128xf32>
    %34 = arith.extui %25 : i1 to i32
    %35 = arith.sitofp %34 : i32 to f32
    %36 = vector.broadcast %35 : f32 to vector<16x128xf32>
    %37 = arith.mulf %33, %36 : vector<16x128xf32>
    %38 = arith.truncf %37 : vector<16x128xf32> to vector<16x128xbf16>
    %c0_23 = arith.constant 0 : index
    %c0_24 = arith.constant 0 : index
    %39 = vector.load %arg12[%c0_23, %c0_24] : memref<160x128xbf16, #tpu.memory_space<vmem>>, vector<16x128xbf16>
    tpu.vector_store %arg12[%c0_23, %c0_24], %38 {strides = array<i32>} : memref<160x128xbf16, #tpu.memory_space<vmem>>, vector<16x128xbf16>,
    %c0_25 = arith.constant 0 : index
    %c0_26 = arith.constant 0 : index
    %c0_27 = arith.constant 0 : index
    %c0_28 = arith.constant 0 : index
    %40 = vector.load %arg4[%c0_25, %c0_26, %c0_27, %c0_28] : memref<1x1x16x128xbf16, #tpu.memory_space<vmem>>, vector<1x1x16x128xbf16>
    %41 = vector.shape_cast %40 : vector<1x1x16x128xbf16> to vector<16x128xbf16>
    %c1_i32_29 = arith.constant 1 : i32
    %42 = arith.cmpi slt, %arg1, %c1_i32_29 : i32
    %c0_30 = arith.constant 0 : index
    %c0_31 = arith.constant 0 : index
    %43 = vector.load %arg5[%c0_30, %c0_31] : memref<128x128xbf16, #tpu.memory_space<vmem>>, vector<128x128xbf16>
    %cst_32 = arith.constant dense<0.000000e+00> : vector<16x128xf32>
    %44 = tpu.matmul %41, %43, %cst_32 {dimension_numbers = #tpu.dot_dimension_numbers<[1], [0], [0], [1], [0, 0, 1, 1], [], []>} : vector<16x128xbf16>, vector<128x128xbf16>, vector<16x128xf32> -> vector<16x128xf32>
    %45 = vector.broadcast %0 : vector<1x128xf32> to vector<16x128xf32>
    %46 = arith.mulf %44, %45 : vector<16x128xf32>
    %47 = vector.broadcast %1 : vector<1x128xf32> to vector<16x128xf32>
    %48 = arith.addf %46, %47 : vector<16x128xf32>
    %cst_33 = arith.constant 0.000000e+00 : f32
    %49 = vector.broadcast %cst_33 : f32 to vector<16x128xf32>
    %50 = arith.maximumf %48, %49 : vector<16x128xf32>
    %51 = arith.extui %42 : i1 to i32
    %52 = arith.sitofp %51 : i32 to f32
    %53 = vector.broadcast %52 : f32 to vector<16x128xf32>
    %54 = arith.mulf %50, %53 : vector<16x128xf32>
    %55 = arith.truncf %54 : vector<16x128xf32> to vector<16x128xbf16>
    %c144 = arith.constant 144 : index
    %c0_34 = arith.constant 0 : index
    %56 = vector.load %arg12[%c144, %c0_34] : memref<160x128xbf16, #tpu.memory_space<vmem>>, vector<16x128xbf16>
    tpu.vector_store %arg12[%c144, %c0_34], %55 {strides = array<i32>} : memref<160x128xbf16, #tpu.memory_space<vmem>>, vector<16x128xbf16>,
    %57 = tpu.iota {dimensions = array<i32: 0>} : vector<128x1xi32>
    %c15_i32 = arith.constant 15 : i32
    %58 = vector.broadcast %c15_i32 : i32 to vector<128x1xi32>
    %59 = arith.andi %57, %58 : vector<128x1xi32>
    %c0_i32_35 = arith.constant 0 : i32
    %60 = vector.broadcast %c0_i32_35 : i32 to vector<128x1xi32>
    %61 = arith.cmpi sgt, %59, %60 : vector<128x1xi32>
    %c15_i32_36 = arith.constant 15 : i32
    %62 = vector.broadcast %c15_i32_36 : i32 to vector<128x1xi32>
    %63 = arith.cmpi slt, %59, %62 : vector<128x1xi32>
    %c0_i32_37 = arith.constant 0 : i32
    %c128_i32_38 = arith.constant 128 : i32
    %64 = arith.muli %c0_i32_37, %c128_i32_38 : i32
    %cst_39 = arith.constant 0.000000e+00 : f32
    %65 = vector.broadcast %cst_39 : f32 to vector<128x384xf32>
    %c0_i32_40 = arith.constant 0 : i32
    %66 = arith.addi %64, %c0_i32_40 : i32
    %67 = tpu.assume_multiple %66, 16 : i32
    %68 = arith.index_cast %67 : i32 to index
    %c0_41 = arith.constant 0 : index
    %69 = vector.load %arg12[%68, %c0_41] : memref<160x128xbf16, #tpu.memory_space<vmem>>, vector<128x128xbf16>
    %c0_42 = arith.constant 0 : index
    %c0_43 = arith.constant 0 : index
    %c0_44 = arith.constant 0 : index
    %70 = vector.load %arg8[%c0_42, %c0_43, %c0_44] : memref<3x128x384xbf16, #tpu.memory_space<vmem>>, vector<1x128x384xbf16>
    %71 = vector.shape_cast %70 : vector<1x128x384xbf16> to vector<128x384xbf16>
    %cst_45 = arith.constant dense<0.000000e+00> : vector<128x384xf32>
    %72 = tpu.matmul %69, %71, %cst_45 {dimension_numbers = #tpu.dot_dimension_numbers<[1], [0], [0], [1], [0, 0, 1, 1], [], []>} : vector<128x128xbf16>, vector<128x384xbf16>, vector<128x384xf32> -> vector<128x384xf32>
    %73 = arith.addf %65, %72 : vector<128x384xf32>
    %c16_i32_46 = arith.constant 16 : i32
    %74 = arith.addi %64, %c16_i32_46 : i32
    %75 = tpu.assume_multiple %74, 16 : i32
    %76 = arith.index_cast %75 : i32 to index
    %c0_47 = arith.constant 0 : index
    %77 = vector.load %arg12[%76, %c0_47] : memref<160x128xbf16, #tpu.memory_space<vmem>>, vector<128x128xbf16>
    %c1 = arith.constant 1 : index
    %c0_48 = arith.constant 0 : index
    %c0_49 = arith.constant 0 : index
    %78 = vector.load %arg8[%c1, %c0_48, %c0_49] : memref<3x128x384xbf16, #tpu.memory_space<vmem>>, vector<1x128x384xbf16>
    %79 = vector.shape_cast %78 : vector<1x128x384xbf16> to vector<128x384xbf16>
    %cst_50 = arith.constant dense<0.000000e+00> : vector<128x384xf32>
    %80 = tpu.matmul %77, %79, %cst_50 {dimension_numbers = #tpu.dot_dimension_numbers<[1], [0], [0], [1], [0, 0, 1, 1], [], []>} : vector<128x128xbf16>, vector<128x384xbf16>, vector<128x384xf32> -> vector<128x384xf32>
    %81 = arith.addf %73, %80 : vector<128x384xf32>
    %c32_i32 = arith.constant 32 : i32
    %82 = arith.addi %64, %c32_i32 : i32
    %83 = tpu.assume_multiple %82, 16 : i32
    %84 = arith.index_cast %83 : i32 to index
    %c0_51 = arith.constant 0 : index
    %85 = vector.load %arg12[%84, %c0_51] : memref<160x128xbf16, #tpu.memory_space<vmem>>, vector<128x128xbf16>
    %c2 = arith.constant 2 : index
    %c0_52 = arith.constant 0 : index
    %c0_53 = arith.constant 0 : index
    %86 = vector.load %arg8[%c2, %c0_52, %c0_53] : memref<3x128x384xbf16, #tpu.memory_space<vmem>>, vector<1x128x384xbf16>
    %87 = vector.shape_cast %86 : vector<1x128x384xbf16> to vector<128x384xbf16>
    %cst_54 = arith.constant dense<0.000000e+00> : vector<128x384xf32>
    %88 = tpu.matmul %85, %87, %cst_54 {dimension_numbers = #tpu.dot_dimension_numbers<[1], [0], [0], [1], [0, 0, 1, 1], [], []>} : vector<128x128xbf16>, vector<128x384xbf16>, vector<128x384xf32> -> vector<128x384xf32>
    %89 = arith.addf %81, %88 : vector<128x384xf32>
    %90 = vector.extract_strided_slice %89 {offsets = [0, 0], sizes = [128, 128], strides = [1, 1]} : vector<128x384xf32> to vector<128x128xf32>
    %91 = vector.extract_strided_slice %89 {offsets = [0, 128], sizes = [128, 128], strides = [1, 1]} : vector<128x384xf32> to vector<128x128xf32>
    %c1_i32_55 = arith.constant 1 : i32
    %92 = tpu.dynamic_rotate %91 by %c1_i32_55 dim 0 : vector<128x128xf32>, i32 -> vector<128x128xf32>
    %cst_56 = arith.constant 0.000000e+00 : f32
    %93 = vector.shape_cast %61 : vector<128x1xi1> to vector<128x1xi1>
    %94 = vector.broadcast %93 : vector<128x1xi1> to vector<128x128xi1>
    %95 = vector.broadcast %cst_56 : f32 to vector<128x128xf32>
    %96 = arith.select %94, %92, %95 : vector<128x128xi1>, vector<128x128xf32>
    %97 = arith.addf %90, %96 : vector<128x128xf32>
    %98 = vector.extract_strided_slice %89 {offsets = [0, 256], sizes = [128, 128], strides = [1, 1]} : vector<128x384xf32> to vector<128x128xf32>
    %c127_i32 = arith.constant 127 : i32
    %99 = tpu.dynamic_rotate %98 by %c127_i32 dim 0 : vector<128x128xf32>, i32 -> vector<128x128xf32>
    %cst_57 = arith.constant 0.000000e+00 : f32
    %100 = vector.shape_cast %63 : vector<128x1xi1> to vector<128x1xi1>
    %101 = vector.broadcast %100 : vector<128x1xi1> to vector<128x128xi1>
    %102 = vector.broadcast %cst_57 : f32 to vector<128x128xf32>
    %103 = arith.select %101, %99, %102 : vector<128x128xi1>, vector<128x128xf32>
    %104 = arith.addf %97, %103 : vector<128x128xf32>
    %105 = vector.broadcast %2 : vector<1x128xf32> to vector<128x128xf32>
    %106 = arith.mulf %104, %105 : vector<128x128xf32>
    %107 = vector.broadcast %3 : vector<1x128xf32> to vector<128x128xf32>
    %108 = arith.addf %106, %107 : vector<128x128xf32>
    %cst_58 = arith.constant 0.000000e+00 : f32
    %109 = vector.broadcast %cst_58 : f32 to vector<128x128xf32>
    %110 = arith.maximumf %108, %109 : vector<128x128xf32>
    %c8_i32_59 = arith.constant 8 : i32
    %111 = arith.muli %c0_i32_37, %c8_i32_59 : i32
    %c0_60 = arith.constant 0 : index
    %112 = arith.index_cast %111 : i32 to index
    %c0_61 = arith.constant 0 : index
    %c0_62 = arith.constant 0 : index
    %113 = vector.load %arg2[%c0_60, %112, %c0_61, %c0_62] : memref<1x8x16x128xbf16, #tpu.memory_space<vmem>>, vector<1x8x16x128xbf16>
    %114 = vector.shape_cast %113 : vector<1x8x16x128xbf16> to vector<8x16x128xbf16>
    %115 = vector.shape_cast %114 : vector<8x16x128xbf16> to vector<128x128xbf16>
    %116 = arith.extf %115 : vector<128x128xbf16> to vector<128x128xf32>
    %117 = arith.addf %116, %110 : vector<128x128xf32>
    %118 = vector.shape_cast %117 : vector<128x128xf32> to vector<8x16x128xf32>
    %c8_i32_63 = arith.constant 8 : i32
    %119 = arith.muli %c0_i32_37, %c8_i32_63 : i32
    %c0_64 = arith.constant 0 : index
    %120 = arith.index_cast %119 : i32 to index
    %c0_65 = arith.constant 0 : index
    %c0_66 = arith.constant 0 : index
    %121 = vector.load %arg11[%c0_64, %120, %c0_65, %c0_66] : memref<1x8x16x128xf32, #tpu.memory_space<vmem>>, vector<1x8x16x128xf32>
    %122 = vector.shape_cast %121 : vector<1x8x16x128xf32> to vector<8x16x128xf32>
    %123 = vector.shape_cast %118 : vector<8x16x128xf32> to vector<1x8x16x128xf32>
    tpu.vector_store %arg11[%c0_64, %120, %c0_65, %c0_66], %123 {strides = array<i32>} : memref<1x8x16x128xf32, #tpu.memory_space<vmem>>, vector<1x8x16x128xf32>,
    %c1_i32_67 = arith.constant 1 : i32
    return
  }
  func.func @transform_0(%arg0: i32, %arg1: i32) -> (i32, i32, i32, i32) {
    %c0_i32 = arith.constant 0 : i32
    %c0_i32_0 = arith.constant 0 : i32
    %c0_i32_1 = arith.constant 0 : i32
    return %arg0, %arg1, %c0_i32, %c0_i32_0 : i32, i32, i32, i32
  }
  func.func @transform_1(%arg0: i32, %arg1: i32) -> (i32, i32, i32, i32) {
    %c8_i32 = arith.constant 8 : i32
    %0 = arith.muli %arg1, %c8_i32 : i32
    %c1_i32 = arith.constant 1 : i32
    %1 = arith.subi %0, %c1_i32 : i32
    %c0_i32 = arith.constant 0 : i32
    %2 = arith.maxsi %1, %c0_i32 : i32
    %c0_i32_0 = arith.constant 0 : i32
    %c0_i32_1 = arith.constant 0 : i32
    %c0_i32_2 = arith.constant 0 : i32
    return %arg0, %2, %c0_i32_0, %c0_i32_1 : i32, i32, i32, i32
  }
  func.func @transform_2(%arg0: i32, %arg1: i32) -> (i32, i32, i32, i32) {
    %c8_i32 = arith.constant 8 : i32
    %0 = arith.muli %arg1, %c8_i32 : i32
    %c8_i32_0 = arith.constant 8 : i32
    %1 = arith.addi %0, %c8_i32_0 : i32
    %c15_i32 = arith.constant 15 : i32
    %2 = arith.minsi %1, %c15_i32 : i32
    %c0_i32 = arith.constant 0 : i32
    %c0_i32_1 = arith.constant 0 : i32
    %c0_i32_2 = arith.constant 0 : i32
    return %arg0, %2, %c0_i32, %c0_i32_1 : i32, i32, i32, i32
  }
  func.func @transform_3(%arg0: i32, %arg1: i32) -> (i32, i32) {
    %c0_i32 = arith.constant 0 : i32
    %c0_i32_0 = arith.constant 0 : i32
    %c0_i32_1 = arith.constant 0 : i32
    return %c0_i32, %c0_i32_0 : i32, i32
  }
  func.func @transform_4(%arg0: i32, %arg1: i32) -> (i32, i32) {
    %c0_i32 = arith.constant 0 : i32
    %c0_i32_0 = arith.constant 0 : i32
    %c0_i32_1 = arith.constant 0 : i32
    return %c0_i32, %c0_i32_0 : i32, i32
  }
  func.func @transform_5(%arg0: i32, %arg1: i32) -> (i32, i32) {
    %c0_i32 = arith.constant 0 : i32
    %c0_i32_0 = arith.constant 0 : i32
    %c0_i32_1 = arith.constant 0 : i32
    return %c0_i32, %c0_i32_0 : i32, i32
  }
  func.func @transform_6(%arg0: i32, %arg1: i32) -> (i32, i32, i32) {
    %c0_i32 = arith.constant 0 : i32
    %c0_i32_0 = arith.constant 0 : i32
    %c0_i32_1 = arith.constant 0 : i32
    %c0_i32_2 = arith.constant 0 : i32
    return %c0_i32, %c0_i32_0, %c0_i32_1 : i32, i32, i32
  }
  func.func @transform_7(%arg0: i32, %arg1: i32) -> (i32, i32) {
    %c0_i32 = arith.constant 0 : i32
    %c0_i32_0 = arith.constant 0 : i32
    %c0_i32_1 = arith.constant 0 : i32
    return %c0_i32, %c0_i32_0 : i32, i32
  }
  func.func @transform_8(%arg0: i32, %arg1: i32) -> (i32, i32) {
    %c0_i32 = arith.constant 0 : i32
    %c0_i32_0 = arith.constant 0 : i32
    %c0_i32_1 = arith.constant 0 : i32
    return %c0_i32, %c0_i32_0 : i32, i32
  }
  func.func @transform_9(%arg0: i32, %arg1: i32) -> (i32, i32, i32, i32) {
    %c0_i32 = arith.constant 0 : i32
    %c0_i32_0 = arith.constant 0 : i32
    %c0_i32_1 = arith.constant 0 : i32
    return %arg0, %arg1, %c0_i32, %c0_i32_0 : i32, i32, i32, i32
  }
}

module attributes {stable_mosaic.version = 11 : i64} {
  func.func @darknet_block_kernel(%arg0: i32, %arg1: i32, %arg2: memref<1x8x16x128xbf16, #tpu.memory_space<vmem>>, %arg3: memref<1x1x16x128xbf16, #tpu.memory_space<vmem>>, %arg4: memref<1x1x16x128xbf16, #tpu.memory_space<vmem>>, %arg5: memref<128x128xbf16, #tpu.memory_space<vmem>>, %arg6: memref<1x128xf32, #tpu.memory_space<vmem>>, %arg7: memref<1x128xf32, #tpu.memory_space<vmem>>, %arg8: memref<3x128x384xbf16, #tpu.memory_space<vmem>>, %arg9: memref<1x128xf32, #tpu.memory_space<vmem>>, %arg10: memref<1x128xf32, #tpu.memory_space<vmem>>, %arg11: memref<1x8x16x128xf32, #tpu.memory_space<vmem>>, %arg12: memref<160x128xbf16, #tpu.memory_space<vmem>>) attributes {dimension_semantics = [#tpu.dimension_semantics<parallel>, #tpu.dimension_semantics<parallel>], iteration_bounds = array<i64: 2, 2>, scalar_prefetch = 0 : i64, scratch_operands = 1 : i64, tpu.core_type = #tpu.core_type<tc>, window_params = [{transform_indices = @transform_0, window_bounds = array<i64: 1, 8, 16, 128>}, {transform_indices = @transform_1, window_bounds = array<i64: 1, 1, 16, 128>}, {transform_indices = @transform_2, window_bounds = array<i64: 1, 1, 16, 128>}, {pipeline_mode = #tpu.pipeline_mode<synchronous>, transform_indices = @transform_3, window_bounds = array<i64: 128, 128>}, {pipeline_mode = #tpu.pipeline_mode<synchronous>, transform_indices = @transform_4, window_bounds = array<i64: 1, 128>}, {pipeline_mode = #tpu.pipeline_mode<synchronous>, transform_indices = @transform_5, window_bounds = array<i64: 1, 128>}, {pipeline_mode = #tpu.pipeline_mode<synchronous>, transform_indices = @transform_6, window_bounds = array<i64: 3, 128, 384>}, {pipeline_mode = #tpu.pipeline_mode<synchronous>, transform_indices = @transform_7, window_bounds = array<i64: 1, 128>}, {pipeline_mode = #tpu.pipeline_mode<synchronous>, transform_indices = @transform_8, window_bounds = array<i64: 1, 128>}, {transform_indices = @transform_9, window_bounds = array<i64: 1, 8, 16, 128>}]} {
    %c0 = arith.constant 0 : index
    %c0_0 = arith.constant 0 : index
    %0 = vector.load %arg6[%c0, %c0_0] : memref<1x128xf32, #tpu.memory_space<vmem>>, vector<1x128xf32>
    %c0_1 = arith.constant 0 : index
    %c0_2 = arith.constant 0 : index
    %1 = vector.load %arg7[%c0_1, %c0_2] : memref<1x128xf32, #tpu.memory_space<vmem>>, vector<1x128xf32>
    %c0_3 = arith.constant 0 : index
    %c0_4 = arith.constant 0 : index
    %2 = vector.load %arg9[%c0_3, %c0_4] : memref<1x128xf32, #tpu.memory_space<vmem>>, vector<1x128xf32>
    %c0_5 = arith.constant 0 : index
    %c0_6 = arith.constant 0 : index
    %3 = vector.load %arg10[%c0_5, %c0_6] : memref<1x128xf32, #tpu.memory_space<vmem>>, vector<1x128xf32>
    %c0_i32 = arith.constant 0 : i32
    %c8_i32 = arith.constant 8 : i32
    %4 = arith.muli %c0_i32, %c8_i32 : i32
    %c0_7 = arith.constant 0 : index
    %5 = arith.index_cast %4 : i32 to index
    %c0_8 = arith.constant 0 : index
    %c0_9 = arith.constant 0 : index
    %6 = vector.load %arg2[%c0_7, %5, %c0_8, %c0_9] : memref<1x8x16x128xbf16, #tpu.memory_space<vmem>>, vector<1x8x16x128xbf16>
    %7 = vector.shape_cast %6 : vector<1x8x16x128xbf16> to vector<8x16x128xbf16>
    %8 = vector.shape_cast %7 : vector<8x16x128xbf16> to vector<128x128xbf16>
    %c0_10 = arith.constant 0 : index
    %c0_11 = arith.constant 0 : index
    %9 = vector.load %arg5[%c0_10, %c0_11] : memref<128x128xbf16, #tpu.memory_space<vmem>>, vector<128x128xbf16>
    %cst = arith.constant dense<0.000000e+00> : vector<128x128xf32>
    %10 = tpu.matmul %8, %9, %cst {dimension_numbers = #tpu.dot_dimension_numbers<[1], [0], [0], [1], [0, 0, 1, 1], [], []>} : vector<128x128xbf16>, vector<128x128xbf16>, vector<128x128xf32> -> vector<128x128xf32>
    %11 = vector.broadcast %0 : vector<1x128xf32> to vector<128x128xf32>
    %12 = arith.mulf %10, %11 : vector<128x128xf32>
    %13 = vector.broadcast %1 : vector<1x128xf32> to vector<128x128xf32>
    %14 = arith.addf %12, %13 : vector<128x128xf32>
    %cst_12 = arith.constant 0.000000e+00 : f32
    %15 = vector.broadcast %cst_12 : f32 to vector<128x128xf32>
    %16 = arith.maximumf %14, %15 : vector<128x128xf32>
    %c128_i32 = arith.constant 128 : i32
    %17 = arith.muli %c0_i32, %c128_i32 : i32
    %c16_i32 = arith.constant 16 : i32
    %18 = arith.addi %c16_i32, %17 : i32
    %19 = tpu.assume_multiple %18, 16 : i32
    %20 = arith.truncf %16 : vector<128x128xf32> to vector<128x128xbf16>
    %21 = arith.index_cast %19 : i32 to index
    %c0_13 = arith.constant 0 : index
    %22 = vector.load %arg12[%21, %c0_13] : memref<160x128xbf16, #tpu.memory_space<vmem>>, vector<128x128xbf16>
    tpu.vector_store %arg12[%21, %c0_13], %20 {strides = array<i32>} : memref<160x128xbf16, #tpu.memory_space<vmem>>, vector<128x128xbf16>,
    %c1_i32 = arith.constant 1 : i32
    %c0_14 = arith.constant 0 : index
    %c0_15 = arith.constant 0 : index
    %c0_16 = arith.constant 0 : index
    %c0_17 = arith.constant 0 : index
    %23 = vector.load %arg3[%c0_14, %c0_15, %c0_16, %c0_17] : memref<1x1x16x128xbf16, #tpu.memory_space<vmem>>, vector<1x1x16x128xbf16>
    %24 = vector.shape_cast %23 : vector<1x1x16x128xbf16> to vector<16x128xbf16>
    %c0_i32_18 = arith.constant 0 : i32
    %25 = arith.cmpi sgt, %arg1, %c0_i32_18 : i32
    %c0_19 = arith.constant 0 : index
    %c0_20 = arith.constant 0 : index
    %26 = vector.load %arg5[%c0_19, %c0_20] : memref<128x128xbf16, #tpu.memory_space<vmem>>, vector<128x128xbf16>
    %cst_21 = arith.constant dense<0.000000e+00> : vector<16x128xf32>
    %27 = tpu.matmul %24, %26, %cst_21 {dimension_numbers = #tpu.dot_dimension_numbers<[1], [0], [0], [1], [0, 0, 1, 1], [], []>} : vector<16x128xbf16>, vector<128x128xbf16>, vector<16x128xf32> -> vector<16x128xf32>
    %28 = vector.broadcast %0 : vector<1x128xf32> to vector<16x128xf32>
    %29 = arith.mulf %27, %28 : vector<16x128xf32>
    %30 = vector.broadcast %1 : vector<1x128xf32> to vector<16x128xf32>
    %31 = arith.addf %29, %30 : vector<16x128xf32>
    %cst_22 = arith.constant 0.000000e+00 : f32
    %32 = vector.broadcast %cst_22 : f32 to vector<16x128xf32>
    %33 = arith.maximumf %31, %32 : vector<16x128xf32>
    %34 = arith.extui %25 : i1 to i32
    %35 = arith.sitofp %34 : i32 to f32
    %36 = vector.broadcast %35 : f32 to vector<16x128xf32>
    %37 = arith.mulf %33, %36 : vector<16x128xf32>
    %38 = arith.truncf %37 : vector<16x128xf32> to vector<16x128xbf16>
    %c0_23 = arith.constant 0 : index
    %c0_24 = arith.constant 0 : index
    %39 = vector.load %arg12[%c0_23, %c0_24] : memref<160x128xbf16, #tpu.memory_space<vmem>>, vector<16x128xbf16>
    tpu.vector_store %arg12[%c0_23, %c0_24], %38 {strides = array<i32>} : memref<160x128xbf16, #tpu.memory_space<vmem>>, vector<16x128xbf16>,
    %c0_25 = arith.constant 0 : index
    %c0_26 = arith.constant 0 : index
    %c0_27 = arith.constant 0 : index
    %c0_28 = arith.constant 0 : index
    %40 = vector.load %arg4[%c0_25, %c0_26, %c0_27, %c0_28] : memref<1x1x16x128xbf16, #tpu.memory_space<vmem>>, vector<1x1x16x128xbf16>
    %41 = vector.shape_cast %40 : vector<1x1x16x128xbf16> to vector<16x128xbf16>
    %c1_i32_29 = arith.constant 1 : i32
    %42 = arith.cmpi slt, %arg1, %c1_i32_29 : i32
    %c0_30 = arith.constant 0 : index
    %c0_31 = arith.constant 0 : index
    %43 = vector.load %arg5[%c0_30, %c0_31] : memref<128x128xbf16, #tpu.memory_space<vmem>>, vector<128x128xbf16>
    %cst_32 = arith.constant dense<0.000000e+00> : vector<16x128xf32>
    %44 = tpu.matmul %41, %43, %cst_32 {dimension_numbers = #tpu.dot_dimension_numbers<[1], [0], [0], [1], [0, 0, 1, 1], [], []>} : vector<16x128xbf16>, vector<128x128xbf16>, vector<16x128xf32> -> vector<16x128xf32>
    %45 = vector.broadcast %0 : vector<1x128xf32> to vector<16x128xf32>
    %46 = arith.mulf %44, %45 : vector<16x128xf32>
    %47 = vector.broadcast %1 : vector<1x128xf32> to vector<16x128xf32>
    %48 = arith.addf %46, %47 : vector<16x128xf32>
    %cst_33 = arith.constant 0.000000e+00 : f32
    %49 = vector.broadcast %cst_33 : f32 to vector<16x128xf32>
    %50 = arith.maximumf %48, %49 : vector<16x128xf32>
    %51 = arith.extui %42 : i1 to i32
    %52 = arith.sitofp %51 : i32 to f32
    %53 = vector.broadcast %52 : f32 to vector<16x128xf32>
    %54 = arith.mulf %50, %53 : vector<16x128xf32>
    %55 = arith.truncf %54 : vector<16x128xf32> to vector<16x128xbf16>
    %c144 = arith.constant 144 : index
    %c0_34 = arith.constant 0 : index
    %56 = vector.load %arg12[%c144, %c0_34] : memref<160x128xbf16, #tpu.memory_space<vmem>>, vector<16x128xbf16>
    tpu.vector_store %arg12[%c144, %c0_34], %55 {strides = array<i32>} : memref<160x128xbf16, #tpu.memory_space<vmem>>, vector<16x128xbf16>,
    %57 = tpu.iota {dimensions = array<i32: 0>} : vector<128x1xi32>
    %c15_i32 = arith.constant 15 : i32
    %58 = vector.broadcast %c15_i32 : i32 to vector<128x1xi32>
    %59 = arith.andi %57, %58 : vector<128x1xi32>
    %c0_i32_35 = arith.constant 0 : i32
    %60 = vector.broadcast %c0_i32_35 : i32 to vector<128x1xi32>
    %61 = arith.cmpi sgt, %59, %60 : vector<128x1xi32>
    %c15_i32_36 = arith.constant 15 : i32
    %62 = vector.broadcast %c15_i32_36 : i32 to vector<128x1xi32>
    %63 = arith.cmpi slt, %59, %62 : vector<128x1xi32>
    %c0_i32_37 = arith.constant 0 : i32
    %c128_i32_38 = arith.constant 128 : i32
    %64 = arith.muli %c0_i32_37, %c128_i32_38 : i32
    %cst_39 = arith.constant 0.000000e+00 : f32
    %65 = vector.broadcast %cst_39 : f32 to vector<128x384xf32>
    %c0_i32_40 = arith.constant 0 : i32
    %66 = arith.addi %64, %c0_i32_40 : i32
    %67 = tpu.assume_multiple %66, 16 : i32
    %68 = arith.index_cast %67 : i32 to index
    %c0_41 = arith.constant 0 : index
    %69 = vector.load %arg12[%68, %c0_41] : memref<160x128xbf16, #tpu.memory_space<vmem>>, vector<128x128xbf16>
    %c0_42 = arith.constant 0 : index
    %c0_43 = arith.constant 0 : index
    %c0_44 = arith.constant 0 : index
    %70 = vector.load %arg8[%c0_42, %c0_43, %c0_44] : memref<3x128x384xbf16, #tpu.memory_space<vmem>>, vector<1x128x384xbf16>
    %71 = vector.shape_cast %70 : vector<1x128x384xbf16> to vector<128x384xbf16>
    %cst_45 = arith.constant dense<0.000000e+00> : vector<128x384xf32>
    %72 = tpu.matmul %69, %71, %cst_45 {dimension_numbers = #tpu.dot_dimension_numbers<[1], [0], [0], [1], [0, 0, 1, 1], [], []>} : vector<128x128xbf16>, vector<128x384xbf16>, vector<128x384xf32> -> vector<128x384xf32>
    %73 = arith.addf %65, %72 : vector<128x384xf32>
    %c16_i32_46 = arith.constant 16 : i32
    %74 = arith.addi %64, %c16_i32_46 : i32
    %75 = tpu.assume_multiple %74, 16 : i32
    %76 = arith.index_cast %75 : i32 to index
    %c0_47 = arith.constant 0 : index
    %77 = vector.load %arg12[%76, %c0_47] : memref<160x128xbf16, #tpu.memory_space<vmem>>, vector<128x128xbf16>
    %c1 = arith.constant 1 : index
    %c0_48 = arith.constant 0 : index
    %c0_49 = arith.constant 0 : index
    %78 = vector.load %arg8[%c1, %c0_48, %c0_49] : memref<3x128x384xbf16, #tpu.memory_space<vmem>>, vector<1x128x384xbf16>
    %79 = vector.shape_cast %78 : vector<1x128x384xbf16> to vector<128x384xbf16>
    %cst_50 = arith.constant dense<0.000000e+00> : vector<128x384xf32>
    %80 = tpu.matmul %77, %79, %cst_50 {dimension_numbers = #tpu.dot_dimension_numbers<[1], [0], [0], [1], [0, 0, 1, 1], [], []>} : vector<128x128xbf16>, vector<128x384xbf16>, vector<128x384xf32> -> vector<128x384xf32>
    %81 = arith.addf %73, %80 : vector<128x384xf32>
    %c32_i32 = arith.constant 32 : i32
    %82 = arith.addi %64, %c32_i32 : i32
    %83 = tpu.assume_multiple %82, 16 : i32
    %84 = arith.index_cast %83 : i32 to index
    %c0_51 = arith.constant 0 : index
    %85 = vector.load %arg12[%84, %c0_51] : memref<160x128xbf16, #tpu.memory_space<vmem>>, vector<128x128xbf16>
    %c2 = arith.constant 2 : index
    %c0_52 = arith.constant 0 : index
    %c0_53 = arith.constant 0 : index
    %86 = vector.load %arg8[%c2, %c0_52, %c0_53] : memref<3x128x384xbf16, #tpu.memory_space<vmem>>, vector<1x128x384xbf16>
    %87 = vector.shape_cast %86 : vector<1x128x384xbf16> to vector<128x384xbf16>
    %cst_54 = arith.constant dense<0.000000e+00> : vector<128x384xf32>
    %88 = tpu.matmul %85, %87, %cst_54 {dimension_numbers = #tpu.dot_dimension_numbers<[1], [0], [0], [1], [0, 0, 1, 1], [], []>} : vector<128x128xbf16>, vector<128x384xbf16>, vector<128x384xf32> -> vector<128x384xf32>
    %89 = arith.addf %81, %88 : vector<128x384xf32>
    %90 = vector.extract_strided_slice %89 {offsets = [0, 0], sizes = [128, 128], strides = [1, 1]} : vector<128x384xf32> to vector<128x128xf32>
    %91 = vector.extract_strided_slice %89 {offsets = [0, 128], sizes = [128, 128], strides = [1, 1]} : vector<128x384xf32> to vector<128x128xf32>
    %c1_i32_55 = arith.constant 1 : i32
    %92 = tpu.dynamic_rotate %91 by %c1_i32_55 dim 0 : vector<128x128xf32>, i32 -> vector<128x128xf32>
    %cst_56 = arith.constant 0.000000e+00 : f32
    %93 = vector.shape_cast %61 : vector<128x1xi1> to vector<128x1xi1>
    %94 = vector.broadcast %93 : vector<128x1xi1> to vector<128x128xi1>
    %95 = vector.broadcast %cst_56 : f32 to vector<128x128xf32>
    %96 = arith.select %94, %92, %95 : vector<128x128xi1>, vector<128x128xf32>
    %97 = arith.addf %90, %96 : vector<128x128xf32>
    %98 = vector.extract_strided_slice %89 {offsets = [0, 256], sizes = [128, 128], strides = [1, 1]} : vector<128x384xf32> to vector<128x128xf32>
    %c127_i32 = arith.constant 127 : i32
    %99 = tpu.dynamic_rotate %98 by %c127_i32 dim 0 : vector<128x128xf32>, i32 -> vector<128x128xf32>
    %cst_57 = arith.constant 0.000000e+00 : f32
    %100 = vector.shape_cast %63 : vector<128x1xi1> to vector<128x1xi1>
    %101 = vector.broadcast %100 : vector<128x1xi1> to vector<128x128xi1>
    %102 = vector.broadcast %cst_57 : f32 to vector<128x128xf32>
    %103 = arith.select %101, %99, %102 : vector<128x128xi1>, vector<128x128xf32>
    %104 = arith.addf %97, %103 : vector<128x128xf32>
    %105 = vector.broadcast %2 : vector<1x128xf32> to vector<128x128xf32>
    %106 = arith.mulf %104, %105 : vector<128x128xf32>
    %107 = vector.broadcast %3 : vector<1x128xf32> to vector<128x128xf32>
    %108 = arith.addf %106, %107 : vector<128x128xf32>
    %cst_58 = arith.constant 0.000000e+00 : f32
    %109 = vector.broadcast %cst_58 : f32 to vector<128x128xf32>
    %110 = arith.maximumf %108, %109 : vector<128x128xf32>
    %c8_i32_59 = arith.constant 8 : i32
    %111 = arith.muli %c0_i32_37, %c8_i32_59 : i32
    %c0_60 = arith.constant 0 : index
    %112 = arith.index_cast %111 : i32 to index
    %c0_61 = arith.constant 0 : index
    %c0_62 = arith.constant 0 : index
    %113 = vector.load %arg2[%c0_60, %112, %c0_61, %c0_62] : memref<1x8x16x128xbf16, #tpu.memory_space<vmem>>, vector<1x8x16x128xbf16>
    %114 = vector.shape_cast %113 : vector<1x8x16x128xbf16> to vector<8x16x128xbf16>
    %115 = vector.shape_cast %114 : vector<8x16x128xbf16> to vector<128x128xbf16>
    %116 = arith.extf %115 : vector<128x128xbf16> to vector<128x128xf32>
    %117 = arith.addf %116, %110 : vector<128x128xf32>
    %118 = vector.shape_cast %117 : vector<128x128xf32> to vector<8x16x128xf32>
    %c8_i32_63 = arith.constant 8 : i32
    %119 = arith.muli %c0_i32_37, %c8_i32_63 : i32
    %c0_64 = arith.constant 0 : index
    %120 = arith.index_cast %119 : i32 to index
    %c0_65 = arith.constant 0 : index
    %c0_66 = arith.constant 0 : index
    %121 = vector.load %arg11[%c0_64, %120, %c0_65, %c0_66] : memref<1x8x16x128xf32, #tpu.memory_space<vmem>>, vector<1x8x16x128xf32>
    %122 = vector.shape_cast %121 : vector<1x8x16x128xf32> to vector<8x16x128xf32>
    %123 = vector.shape_cast %118 : vector<8x16x128xf32> to vector<1x8x16x128xf32>
    tpu.vector_store %arg11[%c0_64, %120, %c0_65, %c0_66], %123 {strides = array<i32>} : memref<1x8x16x128xf32, #tpu.memory_space<vmem>>, vector<1x8x16x128xf32>,
    %c1_i32_67 = arith.constant 1 : i32
    return
  }
  func.func @transform_0(%arg0: i32, %arg1: i32) -> (i32, i32, i32, i32) {
    %c0_i32 = arith.constant 0 : i32
    %c0_i32_0 = arith.constant 0 : i32
    %c0_i32_1 = arith.constant 0 : i32
    return %arg0, %arg1, %c0_i32, %c0_i32_0 : i32, i32, i32, i32
  }
  func.func @transform_1(%arg0: i32, %arg1: i32) -> (i32, i32, i32, i32) {
    %c8_i32 = arith.constant 8 : i32
    %0 = arith.muli %arg1, %c8_i32 : i32
    %c1_i32 = arith.constant 1 : i32
    %1 = arith.subi %0, %c1_i32 : i32
    %c0_i32 = arith.constant 0 : i32
    %2 = arith.maxsi %1, %c0_i32 : i32
    %c0_i32_0 = arith.constant 0 : i32
    %c0_i32_1 = arith.constant 0 : i32
    %c0_i32_2 = arith.constant 0 : i32
    return %arg0, %2, %c0_i32_0, %c0_i32_1 : i32, i32, i32, i32
  }
  func.func @transform_2(%arg0: i32, %arg1: i32) -> (i32, i32, i32, i32) {
    %c8_i32 = arith.constant 8 : i32
    %0 = arith.muli %arg1, %c8_i32 : i32
    %c8_i32_0 = arith.constant 8 : i32
    %1 = arith.addi %0, %c8_i32_0 : i32
    %c15_i32 = arith.constant 15 : i32
    %2 = arith.minsi %1, %c15_i32 : i32
    %c0_i32 = arith.constant 0 : i32
    %c0_i32_1 = arith.constant 0 : i32
    %c0_i32_2 = arith.constant 0 : i32
    return %arg0, %2, %c0_i32, %c0_i32_1 : i32, i32, i32, i32
  }
  func.func @transform_3(%arg0: i32, %arg1: i32) -> (i32, i32) {
    %c0_i32 = arith.constant 0 : i32
    %c0_i32_0 = arith.constant 0 : i32
    %c0_i32_1 = arith.constant 0 : i32
    return %c0_i32, %c0_i32_0 : i32, i32
  }
  func.func @transform_4(%arg0: i32, %arg1: i32) -> (i32, i32) {
    %c0_i32 = arith.constant 0 : i32
    %c0_i32_0 = arith.constant 0 : i32
    %c0_i32_1 = arith.constant 0 : i32
    return %c0_i32, %c0_i32_0 : i32, i32
  }
  func.func @transform_5(%arg0: i32, %arg1: i32) -> (i32, i32) {
    %c0_i32 = arith.constant 0 : i32
    %c0_i32_0 = arith.constant 0 : i32
    %c0_i32_1 = arith.constant 0 : i32
    return %c0_i32, %c0_i32_0 : i32, i32
  }
  func.func @transform_6(%arg0: i32, %arg1: i32) -> (i32, i32, i32) {
    %c0_i32 = arith.constant 0 : i32
    %c0_i32_0 = arith.constant 0 : i32
    %c0_i32_1 = arith.constant 0 : i32
    %c0_i32_2 = arith.constant 0 : i32
    return %c0_i32, %c0_i32_0, %c0_i32_1 : i32, i32, i32
  }
  func.func @transform_7(%arg0: i32, %arg1: i32) -> (i32, i32) {
    %c0_i32 = arith.constant 0 : i32
    %c0_i32_0 = arith.constant 0 : i32
    %c0_i32_1 = arith.constant 0 : i32
    return %c0_i32, %c0_i32_0 : i32, i32
  }
  func.func @transform_8(%arg0: i32, %arg1: i32) -> (i32, i32) {
    %c0_i32 = arith.constant 0 : i32
    %c0_i32_0 = arith.constant 0 : i32
    %c0_i32_1 = arith.constant 0 : i32
    return %c0_i32, %c0_i32_0 : i32, i32
  }
  func.func @transform_9(%arg0: i32, %arg1: i32) -> (i32, i32, i32, i32) {
    %c0_i32 = arith.constant 0 : i32
    %c0_i32_0 = arith.constant 0 : i32
    %c0_i32_1 = arith.constant 0 : i32
    return %arg0, %arg1, %c0_i32, %c0_i32_0 : i32, i32, i32, i32
  }
}

</mosaic_0001>

<llo_original>
// kernel: tpu_custom_call.1
$region0: #{tpu_custom_call.1}
  #allocation0 [shape = 'u32[]', space=smem, size = 0x4, offset = 0x4, fixed_abs, tag = 'smem constant byte address 0x4 - core index']
  #allocation1 [shape = 'u32[144,128]{1,0:T(1,128)}', space=vmem, size = 0x12000, scoped, tag = 'internal scratch']
  #allocation2 [shape = 'bf16[160,128]{1,0:T(8,128)(2,1)}', space=vmem, size = 0xa000, scoped, tag = 'scratch operand']
  %s0 = inlined_call_operand.hbm [shape: bf16[2,16,16,128], index: 0, kind: input, shape index: {}]
  %s1 = inlined_call_operand.hbm [shape: bf16[2,16,16,128], index: 1, kind: input, shape index: {}]
  %s2 = inlined_call_operand.hbm [shape: bf16[2,16,16,128], index: 2, kind: input, shape index: {}]
  %s3 = inlined_call_operand.hbm [shape: bf16[128,128], index: 3, kind: input, shape index: {}]
  %s4 = inlined_call_operand.vmem [shape: f32[1,128], index: 4, kind: input, shape index: {}]
  %s5 = inlined_call_operand.vmem [shape: f32[1,128], index: 5, kind: input, shape index: {}]
  %s6 = inlined_call_operand.hbm [shape: bf16[3,128,384], index: 6, kind: input, shape index: {}]
  %s7 = inlined_call_operand.vmem [shape: f32[1,128], index: 7, kind: input, shape index: {}]
  %s8 = inlined_call_operand.vmem [shape: f32[1,128], index: 8, kind: input, shape index: {}]
  %s9 = inlined_call_operand.hbm [shape: f32[2,16,16,128], index: 9, kind: output, shape index: {}]
  %s10 = sld [smem:[#allocation0]]
  $region89: #{tpu_custom_call.1} parent=0
    _
  %s12 = ssub.s32 1, %s10
  %s13 = scalar_select 0, %s12, %s10
  $region1: #{tpu_custom_call.1} parent=0
    #allocation3 [shape = 'u8[65536]{0}', space=vmem, size = 0x10000, scoped, tag = 'input window, operand 0']
    #allocation4 [shape = 's32[2]{0}', space=sflag, size = 0x8, scoped, tag = 'scoped memory for tpu_custom_call.1']
    #allocation5 [shape = 's32[2]{0}', space=sflag, size = 0x8, scoped, tag = 'scoped memory for tpu_custom_call.1']
    #allocation6 [shape = 'u8[8192]{0}', space=vmem, size = 0x2000, scoped, tag = 'input window, operand 1']
    #allocation7 [shape = 's32[2]{0}', space=sflag, size = 0x8, scoped, tag = 'scoped memory for tpu_custom_call.1']
    #allocation8 [shape = 'u8[8192]{0}', space=vmem, size = 0x2000, scoped, tag = 'input window, operand 2']
    #allocation9 [shape = 'u8[32768]{0}', space=vmem, size = 0x8000, scoped, tag = 'input window, operand 3, single buffered']
    #allocation10 [shape = 's32[1]{0}', space=sflag, size = 0x4, scoped, tag = 'scoped memory for tpu_custom_call.1']
    #allocation11 [shape = 'u8[294912]{0}', space=vmem, size = 0x48000, scoped, tag = 'input window, operand 6, single buffered']
    #allocation12 [shape = 'u8[131072]{0}', space=vmem, size = 0x20000, scoped, tag = 'output window, operand 0']
    %14 = vsyncpa [#allocation4], 0
    %s15 = scalar_lea.sflag [#allocation4], 1
    %16 = vsyncpa %s15, 0
    %17 = vsyncpa [#allocation7], 0
    %s18 = scalar_lea.sflag [#allocation7], 1
    %19 = vsyncpa %s18, 0
    %20 = vsyncpa [#allocation10], 0
    %21 = vsyncpa [#allocation5], 0
    %s22 = scalar_lea.sflag [#allocation5], 1
    %23 = vsyncpa %s22, 0
    loop: start=0, step=1, limit=6
    $region2: #{tpu_custom_call.1} parent=1 // loop_pre_header
      _
    $region3: #{tpu_custom_call.1} parent=1 // loop_header
      %s25 = sphi 0, %s29
      %p26 = scmp.ge.s32.totalorder %s25, 6
      %s32 = sphi 0, %s44
      %s33 = sphi 0, %s40
      %s34 = sphi 0, %s32
      %s35 = sphi 0, %s33
      %s36 = sphi 0, %s34
      %s37 = sphi 0, %s35
      %s49 = sphi 0, %s51
      %s52 = sphi 0, %s49
      %s53 = sphi 0, %s52
      %s69 = sphi 0, %s53
      %s85 = sphi 0, %s87
      %s88 = sphi 0, %s85
      %s89 = sphi 0, %s88
      %s105 = sphi 0, %s89
      %s121 = sphi 0, %s123
      %s124 = sphi 0, %s121
      %s125 = sphi 0, %s124
      %s141 = sphi 0, %s125
      %s145 = sphi 0, %s145
      %s147 = sphi 0, %s145
      %s148 = sphi 0, %s147
      %s162 = sphi 0, %s148
      %s166 = sphi 0, %s166
      %s168 = sphi 0, %s166
      %s169 = sphi 0, %s168
      %s183 = sphi 0, %s169
      %s187 = sphi 0, %s187
      %s189 = sphi 0, %s187
      %s190 = sphi 0, %s189
      %s204 = sphi 0, %s190
      %s208 = sphi 0, %s208
      %s210 = sphi 0, %s208
      %s211 = sphi 0, %s210
      %s225 = sphi 0, %s211
      %s229 = sphi 0, %s229
      %s231 = sphi 0, %s229
      %s232 = sphi 0, %s231
      %s246 = sphi 0, %s232
      %s250 = sphi 0, %s250
      %s252 = sphi 0, %s250
      %s253 = sphi 0, %s252
      %s267 = sphi 0, %s253
      %s275 = sphi 0, %s277
      %s278 = sphi 0, %s275
      %s279 = sphi 0, %s278
      %s295 = sphi 0, %s279
    $region4: #{tpu_custom_call.1} parent=1 // loop_header_branch
      %28 = sbr.rel (%p26) target = $region8
    $region5: #{tpu_custom_call.1} parent=1 // loop_body
      %s30 = ssub.s32 %s25, 1
      %s31 = ssub.s32 %s25, 2
      %s38 = sadd.s32 1, %s33
      %p39 = scmp.ge.s32.totalorder %s38, 2
      %s40 = scalar_select %p39, 0, %s38
      %s41 = sadd.s32 1, %s32
      %s42 = scalar_select %p39, %s41, %s32
      %p43 = scmp.ge.s32.totalorder %s42, 2
      %s44 = scalar_select %p43, 0, %s42
      %s45 = ssub.s32 %s32, %s44
      %s46 = ssub.s32 %s33, %s40
      %s47 = sor.u32 %s45, %s46
      %p48 = scmp.eq.s32.totalorder %s47, 0
      %s50 = sadd.s32 %s49, 1
      %s51 = scalar_select %p48, %s49, %s50
      %p54 = pneg %p48
      %p55 = scmp.eq.s32.totalorder %s25, 3
      %p56 = por %p54, %p55
      %p57 = scmp.ne.s32.totalorder %s49, %s52
      %p58 = scmp.eq.s32.totalorder %s25, 0
      %p59 = por %p57, %p58
      %p60 = scmp.ne.s32.totalorder %s49, %s52
      %p61 = scmp.eq.s32.totalorder %s30, 3
      %p62 = por %p60, %p61
      %p63 = scmp.ne.s32.totalorder %s52, %s53
      %p64 = scmp.eq.s32.totalorder %s30, 0
      %p65 = por %p63, %p64
      %p66 = scmp.ne.s32.totalorder %s52, %s53
      %p67 = scmp.eq.s32.totalorder %s31, 3
      %p68 = por %p66, %p67
      %p70 = scmp.ne.s32.totalorder %s53, %s69
      %p71 = scmp.eq.s32.totalorder %s31, 0
      %p72 = por %p70, %p71
      %s73 = smul.u32 %s33, 8
      %s74 = ssub.s32 %s73, 1
      %p75 = scmp.gt.s32.totalorder %s74, 0
      %s76 = scalar_select %p75, %s74, 0
      %s77 = smul.u32 %s40, 8
      %s78 = ssub.s32 %s77, 1
      %p79 = scmp.gt.s32.totalorder %s78, 0
      %s80 = scalar_select %p79, %s78, 0
      %s81 = ssub.s32 %s32, %s44
      %s82 = ssub.s32 %s76, %s80
      %s83 = sor.u32 %s81, %s82
      %p84 = scmp.eq.s32.totalorder %s83, 0
      %s86 = sadd.s32 %s85, 1
      %s87 = scalar_select %p84, %s85, %s86
      %p90 = pneg %p84
      %p91 = scmp.eq.s32.totalorder %s25, 3
      %p92 = por %p90, %p91
      %p93 = scmp.ne.s32.totalorder %s85, %s88
      %p94 = scmp.eq.s32.totalorder %s25, 0
      %p95 = por %p93, %p94
      %p96 = scmp.ne.s32.totalorder %s85, %s88
      %p97 = scmp.eq.s32.totalorder %s30, 3
      %p98 = por %p96, %p97
      %p99 = scmp.ne.s32.totalorder %s88, %s89
      %p100 = scmp.eq.s32.totalorder %s30, 0
      %p101 = por %p99, %p100
      %p102 = scmp.ne.s32.totalorder %s88, %s89
      %p103 = scmp.eq.s32.totalorder %s31, 3
      %p104 = por %p102, %p103
      %p106 = scmp.ne.s32.totalorder %s89, %s105
      %p107 = scmp.eq.s32.totalorder %s31, 0
      %p108 = por %p106, %p107
      %s109 = smul.u32 %s33, 8
      %s110 = sadd.s32 %s109, 8
      %p111 = scmp.lt.s32.totalorder %s110, 15
      %s112 = scalar_select %p111, %s110, 15
      %s113 = smul.u32 %s40, 8
      %s114 = sadd.s32 %s113, 8
      %p115 = scmp.lt.s32.totalorder %s114, 15
      %s116 = scalar_select %p115, %s114, 15
      %s117 = ssub.s32 %s32, %s44
      %s118 = ssub.s32 %s112, %s116
      %s119 = sor.u32 %s117, %s118
      %p120 = scmp.eq.s32.totalorder %s119, 0
      %s122 = sadd.s32 %s121, 1
      %s123 = scalar_select %p120, %s121, %s122
      %p126 = pneg %p120
      %p127 = scmp.eq.s32.totalorder %s25, 3
      %p128 = por %p126, %p127
      %p129 = scmp.ne.s32.totalorder %s121, %s124
      %p130 = scmp.eq.s32.totalorder %s25, 0
      %p131 = por %p129, %p130
      %p132 = scmp.ne.s32.totalorder %s121, %s124
      %p133 = scmp.eq.s32.totalorder %s30, 3
      %p134 = por %p132, %p133
      %p135 = scmp.ne.s32.totalorder %s124, %s125
      %p136 = scmp.eq.s32.totalorder %s30, 0
      %p137 = por %p135, %p136
      %p138 = scmp.ne.s32.totalorder %s124, %s125
      %p139 = scmp.eq.s32.totalorder %s31, 3
      %p140 = por %p138, %p139
      %p142 = scmp.ne.s32.totalorder %s125, %s141
      %p143 = scmp.eq.s32.totalorder %s31, 0
      %p144 = por %p142, %p143
      %s146 = sadd.s32 %s145, 1
      %p149 = scmp.eq.s32.totalorder %s25, 3
      %p150 = scmp.ne.s32.totalorder %s145, %s147
      %p151 = scmp.eq.s32.totalorder %s25, 0
      %p152 = por %p150, %p151
      %p153 = scmp.ne.s32.totalorder %s145, %s147
      %p154 = scmp.eq.s32.totalorder %s30, 3
      %p155 = por %p153, %p154
      %p156 = scmp.ne.s32.totalorder %s147, %s148
      %p157 = scmp.eq.s32.totalorder %s30, 0
      %p158 = por %p156, %p157
      %p159 = scmp.ne.s32.totalorder %s147, %s148
      %p160 = scmp.eq.s32.totalorder %s31, 3
      %p161 = por %p159, %p160
      %p163 = scmp.ne.s32.totalorder %s148, %s162
      %p164 = scmp.eq.s32.totalorder %s31, 0
      %p165 = por %p163, %p164
      %s167 = sadd.s32 %s166, 1
      %p170 = scmp.eq.s32.totalorder %s25, 3
      %p171 = scmp.ne.s32.totalorder %s166, %s168
      %p172 = scmp.eq.s32.totalorder %s25, 0
      %p173 = por %p171, %p172
      %p174 = scmp.ne.s32.totalorder %s166, %s168
      %p175 = scmp.eq.s32.totalorder %s30, 3
      %p176 = por %p174, %p175
      %p177 = scmp.ne.s32.totalorder %s168, %s169
      %p178 = scmp.eq.s32.totalorder %s30, 0
      %p179 = por %p177, %p178
      %p180 = scmp.ne.s32.totalorder %s168, %s169
      %p181 = scmp.eq.s32.totalorder %s31, 3
      %p182 = por %p180, %p181
      %p184 = scmp.ne.s32.totalorder %s169, %s183
      %p185 = scmp.eq.s32.totalorder %s31, 0
      %p186 = por %p184, %p185
      %s188 = sadd.s32 %s187, 1
      %p191 = scmp.eq.s32.totalorder %s25, 3
      %p192 = scmp.ne.s32.totalorder %s187, %s189
      %p193 = scmp.eq.s32.totalorder %s25, 0
      %p194 = por %p192, %p193
      %p195 = scmp.ne.s32.totalorder %s187, %s189
      %p196 = scmp.eq.s32.totalorder %s30, 3
      %p197 = por %p195, %p196
      %p198 = scmp.ne.s32.totalorder %s189, %s190
      %p199 = scmp.eq.s32.totalorder %s30, 0
      %p200 = por %p198, %p199
      %p201 = scmp.ne.s32.totalorder %s189, %s190
      %p202 = scmp.eq.s32.totalorder %s31, 3
      %p203 = por %p201, %p202
      %p205 = scmp.ne.s32.totalorder %s190, %s204
      %p206 = scmp.eq.s32.totalorder %s31, 0
      %p207 = por %p205, %p206
      %s209 = sadd.s32 %s208, 1
      %p212 = scmp.eq.s32.totalorder %s25, 3
      %p213 = scmp.ne.s32.totalorder %s208, %s210
      %p214 = scmp.eq.s32.totalorder %s25, 0
      %p215 = por %p213, %p214
      %p216 = scmp.ne.s32.totalorder %s208, %s210
      %p217 = scmp.eq.s32.totalorder %s30, 3
      %p218 = por %p216, %p217
      %p219 = scmp.ne.s32.totalorder %s210, %s211
      %p220 = scmp.eq.s32.totalorder %s30, 0
      %p221 = por %p219, %p220
      %p222 = scmp.ne.s32.totalorder %s210, %s211
      %p223 = scmp.eq.s32.totalorder %s31, 3
      %p224 = por %p222, %p223
      %p226 = scmp.ne.s32.totalorder %s211, %s225
      %p227 = scmp.eq.s32.totalorder %s31, 0
      %p228 = por %p226, %p227
      %s230 = sadd.s32 %s229, 1
      %p233 = scmp.eq.s32.totalorder %s25, 3
      %p234 = scmp.ne.s32.totalorder %s229, %s231
      %p235 = scmp.eq.s32.totalorder %s25, 0
      %p236 = por %p234, %p235
      %p237 = scmp.ne.s32.totalorder %s229, %s231
      %p238 = scmp.eq.s32.totalorder %s30, 3
      %p239 = por %p237, %p238
      %p240 = scmp.ne.s32.totalorder %s231, %s232
      %p241 = scmp.eq.s32.totalorder %s30, 0
      %p242 = por %p240, %p241
      %p243 = scmp.ne.s32.totalorder %s231, %s232
      %p244 = scmp.eq.s32.totalorder %s31, 3
      %p245 = por %p243, %p244
      %p247 = scmp.ne.s32.totalorder %s232, %s246
      %p248 = scmp.eq.s32.totalorder %s31, 0
      %p249 = por %p247, %p248
      %s251 = sadd.s32 %s250, 1
      %p254 = scmp.eq.s32.totalorder %s25, 3
      %p255 = scmp.ne.s32.totalorder %s250, %s252
      %p256 = scmp.eq.s32.totalorder %s25, 0
      %p257 = por %p255, %p256
      %p258 = scmp.ne.s32.totalorder %s250, %s252
      %p259 = scmp.eq.s32.totalorder %s30, 3
      %p260 = por %p258, %p259
      %p261 = scmp.ne.s32.totalorder %s252, %s253
      %p262 = scmp.eq.s32.totalorder %s30, 0
      %p263 = por %p261, %p262
      %p264 = scmp.ne.s32.totalorder %s252, %s253
      %p265 = scmp.eq.s32.totalorder %s31, 3
      %p266 = por %p264, %p265
      %p268 = scmp.ne.s32.totalorder %s253, %s267
      %p269 = scmp.eq.s32.totalorder %s31, 0
      %p270 = por %p268, %p269
      %s271 = ssub.s32 %s32, %s44
      %s272 = ssub.s32 %s33, %s40
      %s273 = sor.u32 %s271, %s272
      %p274 = scmp.eq.s32.totalorder %s273, 0
      %s276 = sadd.s32 %s275, 1
      %s277 = scalar_select %p274, %s275, %s276
      %p280 = pneg %p274
      %p281 = scmp.eq.s32.totalorder %s25, 3
      %p282 = por %p280, %p281
      %p283 = scmp.ne.s32.totalorder %s275, %s278
      %p284 = scmp.eq.s32.totalorder %s25, 0
      %p285 = por %p283, %p284
      %p286 = scmp.ne.s32.totalorder %s275, %s278
      %p287 = scmp.eq.s32.totalorder %s30, 3
      %p288 = por %p286, %p287
      %p289 = scmp.ne.s32.totalorder %s278, %s279
      %p290 = scmp.eq.s32.totalorder %s30, 0
      %p291 = por %p289, %p290
      %p292 = scmp.ne.s32.totalorder %s278, %s279
      %p293 = scmp.eq.s32.totalorder %s31, 3
      %p294 = por %p292, %p293
      %p296 = scmp.ne.s32.totalorder %s279, %s295
      %p297 = scmp.eq.s32.totalorder %s31, 0
      %p298 = por %p296, %p297
      %p299 = scmp.le.s32.totalorder 1, %s25
      %p300 = scmp.lt.s32.totalorder %s25, 5
      %p301 = pnand %p299, %p300
      %p302 = pneg %p301
      // Predicated region
      $region9: #{tpu_custom_call.1} parent=5 // pred_check
        _
      $region10: #{tpu_custom_call.1} parent=5 // pred_check_branch
        %304 = sbr.rel (%p301) target = $region12
      $region11: #{tpu_custom_call.1} parent=5 // pred_region
        %s305 = ssub.s32 %s25, 1
        // Predicated region
        $region13: #{tpu_custom_call.1} parent=11 // pred_check
          %p306 = pneg %p158
        $region14: #{tpu_custom_call.1} parent=11 // pred_check_branch
          %308 = sbr.rel (%p306) target = $region16
        $region15: #{tpu_custom_call.1} parent=11 // pred_region
          %s310 = ssub.s32 1024, 1024
          %311 = vsyncadd [#allocation10], %s310
          %s312 = sshll.u32 [#allocation9], 4
          %s313 = int_to_ptr.vmem [resolvable:$true] %s312
          %318 = dma.hbm_to_vmem [thread:$0]  %s3, 1024, %s313, [#allocation10], 64, 64, 4
        $region16: #{tpu_custom_call.1} parent=11 // pred_fallthru
          _
        // Predicated region
        $region17: #{tpu_custom_call.1} parent=11 // pred_check
          %p319 = pneg %p179
        $region18: #{tpu_custom_call.1} parent=11 // pred_check_branch
          %321 = sbr.rel (%p319) target = $region20
        $region19: #{tpu_custom_call.1} parent=11 // pred_region
          _
        $region20: #{tpu_custom_call.1} parent=11 // pred_fallthru
          _
        // Predicated region
        $region21: #{tpu_custom_call.1} parent=11 // pred_check
          %p322 = pneg %p200
        $region22: #{tpu_custom_call.1} parent=11 // pred_check_branch
          %324 = sbr.rel (%p322) target = $region24
        $region23: #{tpu_custom_call.1} parent=11 // pred_region
          _
        $region24: #{tpu_custom_call.1} parent=11 // pred_fallthru
          _
        // Predicated region
        $region25: #{tpu_custom_call.1} parent=11 // pred_check
          %p325 = pneg %p221
        $region26: #{tpu_custom_call.1} parent=11 // pred_check_branch
          %327 = sbr.rel (%p325) target = $region28
        $region27: #{tpu_custom_call.1} parent=11 // pred_region
          %s329 = ssub.s32 9216, 9216
          %330 = vsyncadd [#allocation10], %s329
          %s331 = sshll.u32 [#allocation11], 4
          %s332 = int_to_ptr.vmem [resolvable:$true] %s331
          %337 = dma.hbm_to_vmem [thread:$0]  %s6, 9216, %s332, [#allocation10], 192, 192, 12
        $region28: #{tpu_custom_call.1} parent=11 // pred_fallthru
          _
        // Predicated region
        $region29: #{tpu_custom_call.1} parent=11 // pred_check
          %p338 = pneg %p242
        $region30: #{tpu_custom_call.1} parent=11 // pred_check_branch
          %340 = sbr.rel (%p338) target = $region32
        $region31: #{tpu_custom_call.1} parent=11 // pred_region
          _
        $region32: #{tpu_custom_call.1} parent=11 // pred_fallthru
          _
        // Predicated region
        $region33: #{tpu_custom_call.1} parent=11 // pred_check
          %p341 = pneg %p263
        $region34: #{tpu_custom_call.1} parent=11 // pred_check_branch
          %343 = sbr.rel (%p341) target = $region36
        $region35: #{tpu_custom_call.1} parent=11 // pred_region
          _
        $region36: #{tpu_custom_call.1} parent=11 // pred_fallthru
          _
      $region12: #{tpu_custom_call.1} parent=5 // pred_fallthru
        _
      %p344 = scmp.lt.s32.totalorder %s25, 4
      // Predicated region
      $region37: #{tpu_custom_call.1} parent=5 // pred_check
        %p345 = pneg %p344
      $region38: #{tpu_custom_call.1} parent=5 // pred_check_branch
        %347 = sbr.rel (%p345) target = $region40
      $region39: #{tpu_custom_call.1} parent=5 // pred_region
        // Predicated region
        $region41: #{tpu_custom_call.1} parent=39 // pred_check
          %p348 = pneg %p59
        $region42: #{tpu_custom_call.1} parent=39 // pred_check_branch
          %350 = sbr.rel (%p348) target = $region44
        $region43: #{tpu_custom_call.1} parent=39 // pred_region
          %s351 = sand.u32 %s49, 1
          %s352 = scalar_lea.sflag [#allocation4], %s351
          %s353 = sand.u32 %s49, 1
          %s354 = smul.addr %s353, 64
          %s355 = scalar_lea.vmem [#allocation3], %s354
          %s356 = smul.u32 8, %s33
          %s358 = ssub.s32 1024, 1024
          %359 = vsyncadd %s352, %s358
          %s360 = smul.addr %s356, 2
          %s361 = smul.addr %s32, 32
          %s362 = sadd.s32 %s360, %s361
          %s363 = smul.addr %s362, 64
          %s364 = scalar_lea.hbm %s0, %s363
          %s365 = sshll.u32 %s355, 4
          %s366 = int_to_ptr.vmem [resolvable:$true] %s365
          %371 = dma.hbm_to_vmem [thread:$0]  %s364, 1024, %s366, %s352, 64, 64, 4
        $region44: #{tpu_custom_call.1} parent=39 // pred_fallthru
          _
        // Predicated region
        $region45: #{tpu_custom_call.1} parent=39 // pred_check
          %p372 = pneg %p95
        $region46: #{tpu_custom_call.1} parent=39 // pred_check_branch
          %374 = sbr.rel (%p372) target = $region48
        $region47: #{tpu_custom_call.1} parent=39 // pred_region
          %s375 = sand.u32 %s25, 1
          %s376 = scalar_lea.sflag [#allocation7], %s375
          %s377 = sand.u32 %s85, 1
          %s378 = smul.addr %s377, 8
          %s379 = scalar_lea.vmem [#allocation6], %s378
          %s380 = smul.u32 %s33, 8
          %s381 = ssub.s32 %s380, 1
          %p382 = scmp.gt.s32.totalorder %s381, 0
          %s383 = scalar_select %p382, %s381, 0
          %s385 = ssub.s32 128, 128
          %386 = vsyncadd %s376, %s385
          %s387 = smul.addr %s383, 2
          %s388 = smul.addr %s32, 32
          %s389 = sadd.s32 %s387, %s388
          %s390 = smul.addr %s389, 64
          %s391 = scalar_lea.hbm %s1, %s390
          %s392 = sshll.u32 %s379, 4
          %s393 = int_to_ptr.vmem [resolvable:$true] %s392
          %398 = dma.hbm_to_vmem [thread:$0]  %s391, 128, %s393, %s376, 64, 64, 4
        $region48: #{tpu_custom_call.1} parent=39 // pred_fallthru
          _
        // Predicated region
        $region49: #{tpu_custom_call.1} parent=39 // pred_check
          %p399 = pneg %p131
        $region50: #{tpu_custom_call.1} parent=39 // pred_check_branch
          %401 = sbr.rel (%p399) target = $region52
        $region51: #{tpu_custom_call.1} parent=39 // pred_region
          %s402 = sand.u32 %s25, 1
          %s403 = scalar_lea.sflag [#allocation7], %s402
          %s404 = sand.u32 %s121, 1
          %s405 = smul.addr %s404, 8
          %s406 = scalar_lea.vmem [#allocation8], %s405
          %s407 = smul.u32 %s33, 8
          %s408 = sadd.s32 %s407, 8
          %p409 = scmp.lt.s32.totalorder %s408, 15
          %s410 = scalar_select %p409, %s408, 15
          %s412 = ssub.s32 128, 128
          %413 = vsyncadd %s403, %s412
          %s414 = smul.addr %s410, 2
          %s415 = smul.addr %s32, 32
          %s416 = sadd.s32 %s414, %s415
          %s417 = smul.addr %s416, 64
          %s418 = scalar_lea.hbm %s2, %s417
          %s419 = sshll.u32 %s406, 4
          %s420 = int_to_ptr.vmem [resolvable:$true] %s419
          %425 = dma.hbm_to_vmem [thread:$0]  %s418, 128, %s420, %s403, 64, 64, 4
        $region52: #{tpu_custom_call.1} parent=39 // pred_fallthru
          _
      $region40: #{tpu_custom_call.1} parent=5 // pred_fallthru
        _
      %p426 = scmp.le.s32.totalorder 1, %s25
      %p427 = scmp.lt.s32.totalorder %s25, 5
      %p428 = pnand %p426, %p427
      %p429 = pneg %p428
      // Predicated region
      $region53: #{tpu_custom_call.1} parent=5 // pred_check
        _
      $region54: #{tpu_custom_call.1} parent=5 // pred_check_branch
        %431 = sbr.rel (%p428) target = $region56
      $region55: #{tpu_custom_call.1} parent=5 // pred_region
        %s432 = ssub.s32 %s25, 1
        %s433 = sand.u32 %s52, 1
        %s434 = scalar_lea.sflag [#allocation4], %s433
        %s435 = sand.u32 %s52, 1
        %s436 = smul.addr %s435, 64
        %s437 = scalar_lea.vmem [#allocation3], %s436
        // Predicated region
        $region57: #{tpu_custom_call.1} parent=55 // pred_check
          %p438 = pneg %p65
        $region58: #{tpu_custom_call.1} parent=55 // pred_check_branch
          %440 = sbr.rel (%p438) target = $region60
        $region59: #{tpu_custom_call.1} parent=55 // pred_region
          %441 = dma.done %s434, 1024
        $region60: #{tpu_custom_call.1} parent=55 // pred_fallthru
          _
        %s442 = sand.u32 %s30, 1
        %s443 = scalar_lea.sflag [#allocation7], %s442
        %s444 = sand.u32 %s88, 1
        %s445 = smul.addr %s444, 8
        %s446 = scalar_lea.vmem [#allocation6], %s445
        // Predicated region
        $region61: #{tpu_custom_call.1} parent=55 // pred_check
          %p447 = pneg %p101
        $region62: #{tpu_custom_call.1} parent=55 // pred_check_branch
          %449 = sbr.rel (%p447) target = $region64
        $region63: #{tpu_custom_call.1} parent=55 // pred_region
          %450 = dma.done %s443, 128
        $region64: #{tpu_custom_call.1} parent=55 // pred_fallthru
          _
        %s451 = sand.u32 %s30, 1
        %s452 = scalar_lea.sflag [#allocation7], %s451
        %s453 = sand.u32 %s124, 1
        %s454 = smul.addr %s453, 8
        %s455 = scalar_lea.vmem [#allocation8], %s454
        // Predicated region
        $region65: #{tpu_custom_call.1} parent=55 // pred_check
          %p456 = pneg %p137
        $region66: #{tpu_custom_call.1} parent=55 // pred_check_branch
          %458 = sbr.rel (%p456) target = $region68
        $region67: #{tpu_custom_call.1} parent=55 // pred_region
          %459 = dma.done %s452, 128
        $region68: #{tpu_custom_call.1} parent=55 // pred_fallthru
          _
        // Predicated region
        $region69: #{tpu_custom_call.1} parent=55 // pred_check
          %p460 = pneg %p158
        $region70: #{tpu_custom_call.1} parent=55 // pred_check_branch
          %462 = sbr.rel (%p460) target = $region72
        $region71: #{tpu_custom_call.1} parent=55 // pred_region
          %463 = dma.done [#allocation10], 1024
        $region72: #{tpu_custom_call.1} parent=55 // pred_fallthru
          _
        // Predicated region
        $region73: #{tpu_custom_call.1} parent=55 // pred_check
          %p464 = pneg %p221
        $region74: #{tpu_custom_call.1} parent=55 // pred_check_branch
          %466 = sbr.rel (%p464) target = $region76
        $region75: #{tpu_custom_call.1} parent=55 // pred_region
          %467 = dma.done [#allocation10], 9216
        $region76: #{tpu_custom_call.1} parent=55 // pred_fallthru
          _
        %s468 = sand.u32 %s52, 1
        %s469 = scalar_lea.sflag [#allocation4], %s468
        %s470 = sand.u32 %s52, 1
        %s471 = smul.addr %s470, 64
        %s472 = scalar_lea.vmem [#allocation3], %s471
        %p473 = pneg %p65
        %p474 = pneg %p62
        %s475 = sand.u32 %s30, 1
        %s476 = scalar_lea.sflag [#allocation7], %s475
        %s477 = sand.u32 %s88, 1
        %s478 = smul.addr %s477, 8
        %s479 = scalar_lea.vmem [#allocation6], %s478
        %p480 = pneg %p101
        %p481 = pneg %p98
        %s482 = sand.u32 %s30, 1
        %s483 = scalar_lea.sflag [#allocation7], %s482
        %s484 = sand.u32 %s124, 1
        %s485 = smul.addr %s484, 8
        %s486 = scalar_lea.vmem [#allocation8], %s485
        %p487 = pneg %p137
        %p488 = pneg %p134
        %p489 = pneg %p158
        %p490 = pneg %p155
        %p491 = pneg %p179
        %p492 = pneg %p176
        %p493 = pneg %p200
        %p494 = pneg %p197
        %p495 = pneg %p221
        %p496 = pneg %p218
        %p497 = pneg %p242
        %p498 = pneg %p239
        %p499 = pneg %p263
        %p500 = pneg %p260
        %p501 = pneg %p291
        %p502 = pneg %p288
        %s503 = sand.u32 %s278, 1
        %s504 = scalar_lea.sflag [#allocation5], %s503
        %s505 = sand.u32 %s278, 1
        %s506 = smul.addr %s505, 128
        %s507 = scalar_lea.vmem [#allocation12], %s506
        %s508 = smul.u32 8, %s35
        %s509 = smul.u32 %s35, 8
        %s510 = ssub.s32 %s509, 1
        %p511 = scmp.gt.s32.totalorder %s510, 0
        %s512 = scalar_select %p511, %s510, 0
        %s513 = smul.u32 %s35, 8
        %s514 = sadd.s32 %s513, 8
        %p515 = scmp.lt.s32.totalorder %s514, 15
        %s516 = scalar_select %p515, %s514, 15
        %s517 = smul.u32 8, %s35
        %v519 = vld [vmem:[%s4] sm:$0x1]
        %v520 = vld [vmem:[%s5] sm:$0x1]
        %v521 = vld [vmem:[%s7] sm:$0x1]
        %v522 = vld [vmem:[%s8] sm:$0x1]
        %v523 = vld [vmem:[%s437] sm:$0xf]
        %v524 = vld [vmem:[%s437 + $0x4] sm:$0xf]
        %v525 = vld [vmem:[%s437 + $0x8] sm:$0xf]
        %v526 = vld [vmem:[%s437 + $0xc] sm:$0xf]
        %v527 = vld [vmem:[%s437 + $0x10] sm:$0xf]
        %v528 = vld [vmem:[%s437 + $0x14] sm:$0xf]
        %v529 = vld [vmem:[%s437 + $0x18] sm:$0xf]
        %v530 = vld [vmem:[%s437 + $0x1c] sm:$0xf]
        %v531 = vld [vmem:[%s437 + $0x20] sm:$0xf]
        %v532 = vld [vmem:[%s437 + $0x24] sm:$0xf]
        %v533 = vld [vmem:[%s437 + $0x28] sm:$0xf]
        %v534 = vld [vmem:[%s437 + $0x2c] sm:$0xf]
        %v535 = vld [vmem:[%s437 + $0x30] sm:$0xf]
        %v536 = vld [vmem:[%s437 + $0x34] sm:$0xf]
        %v537 = vld [vmem:[%s437 + $0x38] sm:$0xf]
        %v538 = vld [vmem:[%s437 + $0x3c] sm:$0xf]
        %v539 = vld [vmem:[#allocation9] sm:$0xf]
        %v540 = vld [vmem:[#allocation9 + $0x4] sm:$0xf]
        %v541 = vld [vmem:[#allocation9 + $0x8] sm:$0xf]
        %v542 = vld [vmem:[#allocation9 + $0xc] sm:$0xf]
        %v543 = vld [vmem:[#allocation9 + $0x10] sm:$0xf]
        %v544 = vld [vmem:[#allocation9 + $0x14] sm:$0xf]
        %v545 = vld [vmem:[#allocation9 + $0x18] sm:$0xf]
        %v546 = vld [vmem:[#allocation9 + $0x1c] sm:$0xf]
        %v547 = vld [vmem:[#allocation9 + $0x20] sm:$0xf]
        %v548 = vld [vmem:[#allocation9 + $0x24] sm:$0xf]
        %v549 = vld [vmem:[#allocation9 + $0x28] sm:$0xf]
        %v550 = vld [vmem:[#allocation9 + $0x2c] sm:$0xf]
        %v551 = vld [vmem:[#allocation9 + $0x30] sm:$0xf]
        %v552 = vld [vmem:[#allocation9 + $0x34] sm:$0xf]
        %v553 = vld [vmem:[#allocation9 + $0x38] sm:$0xf]
        %v554 = vld [vmem:[#allocation9 + $0x3c] sm:$0xf]
        %v571 = vunpack.c.l.b16 %v523
        %v572 = vunpack.c.l.b16 %v524
        %v573 = vunpack.c.l.b16 %v525
        %v574 = vunpack.c.l.b16 %v526
        %v575 = vunpack.c.l.b16 %v527
        %v576 = vunpack.c.l.b16 %v528
        %v577 = vunpack.c.l.b16 %v529
        %v578 = vunpack.c.l.b16 %v530
        %v579 = vunpack.c.l.b16 %v531
        %v580 = vunpack.c.l.b16 %v532
        %v581 = vunpack.c.l.b16 %v533
        %v582 = vunpack.c.l.b16 %v534
        %v583 = vunpack.c.l.b16 %v535
        %v584 = vunpack.c.l.b16 %v536
        %v585 = vunpack.c.l.b16 %v537
        %v586 = vunpack.c.l.b16 %v538
        %v587 = vpack.c.b16 %v572, %v571
        %v588 = vpack.c.b16 %v574, %v573
        %v589 = vpack.c.b16 %v576, %v575
        %v590 = vpack.c.b16 %v578, %v577
        %v591 = vpack.c.b16 %v580, %v579
        %v592 = vpack.c.b16 %v582, %v581
        %v593 = vpack.c.b16 %v584, %v583
        %v594 = vpack.c.b16 %v586, %v585
        %v619 = vunpack.c.l.b16 %v539
        %v620 = vunpack.c.l.b16 %v540
        %v621 = vunpack.c.l.b16 %v541
        %v622 = vunpack.c.l.b16 %v542
        %v623 = vunpack.c.l.b16 %v543
        %v624 = vunpack.c.l.b16 %v544
        %v625 = vunpack.c.l.b16 %v545
        %v626 = vunpack.c.l.b16 %v546
        %v627 = vunpack.c.l.b16 %v547
        %v628 = vunpack.c.l.b16 %v548
        %v629 = vunpack.c.l.b16 %v549
        %v630 = vunpack.c.l.b16 %v550
        %v631 = vunpack.c.l.b16 %v551
        %v632 = vunpack.c.l.b16 %v552
        %v633 = vunpack.c.l.b16 %v553
        %v634 = vunpack.c.l.b16 %v554
        %v635 = vpack.c.b16 %v620, %v619
        %v636 = vpack.c.b16 %v622, %v621
        %v637 = vpack.c.b16 %v624, %v623
        %v638 = vpack.c.b16 %v626, %v625
        %v639 = vpack.c.b16 %v628, %v627
        %v640 = vpack.c.b16 %v630, %v629
        %v641 = vpack.c.b16 %v632, %v631
        %v642 = vpack.c.b16 %v634, %v633
        %651 = vmatprep.subr.bf16.mxu0 0
        %652 = vmatpush1.bf16.msra.mxu0 %v642
        %653 = vmatprep.subr.bf16.mxu0 0
        %654 = vmatpush1.bf16.msra.mxu0 %v641
        %655 = vmatprep.subr.bf16.mxu0 0
        %656 = vmatpush1.bf16.msra.mxu0 %v640
        %657 = vmatprep.subr.bf16.mxu0 0
        %658 = vmatpush1.bf16.msra.mxu0 %v639
        %659 = vmatprep.subr.bf16.mxu0 0
        %660 = vmatpush1.bf16.msra.mxu0 %v638
        %661 = vmatprep.subr.bf16.mxu0 0
        %662 = vmatpush1.bf16.msra.mxu0 %v637
        %663 = vmatprep.subr.bf16.mxu0 0
        %664 = vmatpush1.bf16.msra.mxu0 %v636
        %665 = vmatprep.subr.bf16.mxu0 0
        %666 = vmatpush1.bf16.msra.mxu0 %v635
        %667 = vmatprep.subr.bf16.mxu0 0
        %668 = vmatpush2.bf16.msra.mxu0 0
        %669 = vmatprep.subr.bf16.mxu0 0
        %670 = vmatpush2.bf16.msra.mxu0 0
        %671 = vmatprep.subr.bf16.mxu0 0
        %672 = vmatpush2.bf16.msra.mxu0 0
        %673 = vmatprep.subr.bf16.mxu0 0
        %674 = vmatpush2.bf16.msra.mxu0 0
        %675 = vmatprep.subr.bf16.mxu0 0
        %676 = vmatpush2.bf16.msra.mxu0 0
        %677 = vmatprep.subr.bf16.mxu0 0
        %678 = vmatpush2.bf16.msra.mxu0 0
        %679 = vmatprep.subr.bf16.mxu0 0
        %680 = vmatpush2.bf16.msra.mxu0 0
        %681 = vmatprep.subr.bf16.mxu0 0
        %682 = vmatpush2.bf16.msra.mxu0 0
        %683 = vmatprep.mubr.bf16.mxu0 0
        %684 = vmatmul.mubr.bf16.gmra.mxu0 %v587
        %v685 = vpop.f32.mrf.mxu0
        %v686 = vadd.f32 0.0, %v685
        %v687 = vpop.f32.mrf.mxu0
        %v688 = vpop.f32.mrf.mxu0
        %v689 = vadd.f32 0.0, %v688
        %v690 = vpop.f32.mrf.mxu0
        %691 = vmatprep.mubr.bf16.mxu0 0
        %692 = vmatmul.mubr.bf16.gmra.mxu0 %v588
        %v693 = vpop.f32.mrf.mxu0
        %v694 = vadd.f32 0.0, %v693
        %v695 = vpop.f32.mrf.mxu0
        %v696 = vpop.f32.mrf.mxu0
        %v697 = vadd.f32 0.0, %v696
        %v698 = vpop.f32.mrf.mxu0
        %699 = vmatprep.mubr.bf16.mxu0 0
        %700 = vmatmul.mubr.bf16.gmra.mxu0 %v589
        %v701 = vpop.f32.mrf.mxu0
        %v702 = vadd.f32 0.0, %v701
        %v703 = vpop.f32.mrf.mxu0
        %v704 = vpop.f32.mrf.mxu0
        %v705 = vadd.f32 0.0, %v704
        %v706 = vpop.f32.mrf.mxu0
        %707 = vmatprep.mubr.bf16.mxu0 0
        %708 = vmatmul.mubr.bf16.gmra.mxu0 %v590
        %v709 = vpop.f32.mrf.mxu0
        %v710 = vadd.f32 0.0, %v709
        %v711 = vpop.f32.mrf.mxu0
        %v712 = vpop.f32.mrf.mxu0
        %v713 = vadd.f32 0.0, %v712
        %v714 = vpop.f32.mrf.mxu0
        %715 = vmatprep.mubr.bf16.mxu0 0
        %716 = vmatmul.mubr.bf16.gmra.mxu0 %v591
        %v717 = vpop.f32.mrf.mxu0
        %v718 = vadd.f32 0.0, %v717
        %v719 = vpop.f32.mrf.mxu0
        %v720 = vpop.f32.mrf.mxu0
        %v721 = vadd.f32 0.0, %v720
        %v722 = vpop.f32.mrf.mxu0
        %723 = vmatprep.mubr.bf16.mxu0 0
        %724 = vmatmul.mubr.bf16.gmra.mxu0 %v592
        %v725 = vpop.f32.mrf.mxu0
        %v726 = vadd.f32 0.0, %v725
        %v727 = vpop.f32.mrf.mxu0
        %v728 = vpop.f32.mrf.mxu0
        %v729 = vadd.f32 0.0, %v728
        %v730 = vpop.f32.mrf.mxu0
        %731 = vmatprep.mubr.bf16.mxu0 0
        %732 = vmatmul.mubr.bf16.gmra.mxu0 %v593
        %v733 = vpop.f32.mrf.mxu0
        %v734 = vadd.f32 0.0, %v733
        %v735 = vpop.f32.mrf.mxu0
        %v736 = vpop.f32.mrf.mxu0
        %v737 = vadd.f32 0.0, %v736
        %v738 = vpop.f32.mrf.mxu0
        %739 = vmatprep.mubr.bf16.mxu0 0
        %740 = vmatmul.mubr.bf16.gmra.mxu0 %v594
        %v741 = vpop.f32.mrf.mxu0
        %v742 = vadd.f32 0.0, %v741
        %v743 = vpop.f32.mrf.mxu0
        %v744 = vpop.f32.mrf.mxu0
        %v745 = vadd.f32 0.0, %v744
        %v746 = vpop.f32.mrf.mxu0
        %747 = vdwg.mxu0
        %v749 = vlaneseq
        %v750 = vshrl.u32 %v749, 7
        %v751 = vsub.s32 0, %v750
        %v752 = vrot.slane %v519, %v751
        %v754 = vmul.f32 %v686, %v752
        %v755 = vmul.f32 %v689, %v752
        %v756 = vmul.f32 %v694, %v752
        %v757 = vmul.f32 %v697, %v752
        %v758 = vmul.f32 %v702, %v752
        %v759 = vmul.f32 %v705, %v752
        %v760 = vmul.f32 %v710, %v752
        %v761 = vmul.f32 %v713, %v752
        %v762 = vmul.f32 %v718, %v752
        %v763 = vmul.f32 %v721, %v752
        %v764 = vmul.f32 %v726, %v752
        %v765 = vmul.f32 %v729, %v752
        %v766 = vmul.f32 %v734, %v752
        %v767 = vmul.f32 %v737, %v752
        %v768 = vmul.f32 %v742, %v752
        %v769 = vmul.f32 %v745, %v752
        %v771 = vlaneseq
        %v772 = vshrl.u32 %v771, 7
        %v773 = vsub.s32 0, %v772
        %v774 = vrot.slane %v520, %v773
        %v776 = vadd.f32 %v754, %v774
        %v777 = vadd.f32 %v755, %v774
        %v778 = vadd.f32 %v756, %v774
        %v779 = vadd.f32 %v757, %v774
        %v780 = vadd.f32 %v758, %v774
        %v781 = vadd.f32 %v759, %v774
        %v782 = vadd.f32 %v760, %v774
        %v783 = vadd.f32 %v761, %v774
        %v784 = vadd.f32 %v762, %v774
        %v785 = vadd.f32 %v763, %v774
        %v786 = vadd.f32 %v764, %v774
        %v787 = vadd.f32 %v765, %v774
        %v788 = vadd.f32 %v766, %v774
        %v789 = vadd.f32 %v767, %v774
        %v790 = vadd.f32 %v768, %v774
        %v791 = vadd.f32 %v769, %v774
        %v792 = vmax.f32 %v776, 0.0
        %v793 = vmax.f32 %v777, 0.0
        %v794 = vmax.f32 %v778, 0.0
        %v795 = vmax.f32 %v779, 0.0
        %v796 = vmax.f32 %v780, 0.0
        %v797 = vmax.f32 %v781, 0.0
        %v798 = vmax.f32 %v782, 0.0
        %v799 = vmax.f32 %v783, 0.0
        %v800 = vmax.f32 %v784, 0.0
        %v801 = vmax.f32 %v785, 0.0
        %v802 = vmax.f32 %v786, 0.0
        %v803 = vmax.f32 %v787, 0.0
        %v804 = vmax.f32 %v788, 0.0
        %v805 = vmax.f32 %v789, 0.0
        %v806 = vmax.f32 %v790, 0.0
        %v807 = vmax.f32 %v791, 0.0
        %v808 = vpack.c.bf16 %v793, %v792
        %v809 = vpack.c.bf16 %v795, %v794
        %v810 = vpack.c.bf16 %v797, %v796
        %v811 = vpack.c.bf16 %v799, %v798
        %v812 = vpack.c.bf16 %v801, %v800
        %v813 = vpack.c.bf16 %v803, %v802
        %v814 = vpack.c.bf16 %v805, %v804
        %v815 = vpack.c.bf16 %v807, %v806
        %v824 = vunpack.c.l.b16 %v808
        %v825 = vunpack.c.h.b16 %v808
        %v826 = vunpack.c.l.b16 %v809
        %v827 = vunpack.c.h.b16 %v809
        %v828 = vunpack.c.l.b16 %v810
        %v829 = vunpack.c.h.b16 %v810
        %v830 = vunpack.c.l.b16 %v811
        %v831 = vunpack.c.h.b16 %v811
        %v832 = vunpack.c.l.b16 %v812
        %v833 = vunpack.c.h.b16 %v812
        %v834 = vunpack.c.l.b16 %v813
        %v835 = vunpack.c.h.b16 %v813
        %v836 = vunpack.c.l.b16 %v814
        %v837 = vunpack.c.h.b16 %v814
        %v838 = vunpack.c.l.b16 %v815
        %v839 = vunpack.c.h.b16 %v815
        %v840 = vpack.c.b16 %v824, %v824
        %v841 = vpack.c.b16 %v825, %v825
        %v842 = vpack.c.b16 %v826, %v826
        %v843 = vpack.c.b16 %v827, %v827
        %v844 = vpack.c.b16 %v828, %v828
        %v845 = vpack.c.b16 %v829, %v829
        %v846 = vpack.c.b16 %v830, %v830
        %v847 = vpack.c.b16 %v831, %v831
        %v848 = vpack.c.b16 %v832, %v832
        %v849 = vpack.c.b16 %v833, %v833
        %v850 = vpack.c.b16 %v834, %v834
        %v851 = vpack.c.b16 %v835, %v835
        %v852 = vpack.c.b16 %v836, %v836
        %v853 = vpack.c.b16 %v837, %v837
        %v854 = vpack.c.b16 %v838, %v838
        %v855 = vpack.c.b16 %v839, %v839
        %s872 = scalar_lea.vmem [#allocation2], 8
        %873 = vst [vmem:[%s872] sm:$0xf] %v840
        %874 = vst [vmem:[%s872 + $0x4] sm:$0xf] %v841
        %875 = vst [vmem:[%s872 + $0x8] sm:$0xf] %v842
        %876 = vst [vmem:[%s872 + $0xc] sm:$0xf] %v843
        %877 = vst [vmem:[%s872 + $0x10] sm:$0xf] %v844
        %878 = vst [vmem:[%s872 + $0x14] sm:$0xf] %v845
        %879 = vst [vmem:[%s872 + $0x18] sm:$0xf] %v846
        %880 = vst [vmem:[%s872 + $0x1c] sm:$0xf] %v847
        %881 = vst [vmem:[%s872 + $0x20] sm:$0xf] %v848
        %882 = vst [vmem:[%s872 + $0x24] sm:$0xf] %v849
        %883 = vst [vmem:[%s872 + $0x28] sm:$0xf] %v850
        %884 = vst [vmem:[%s872 + $0x2c] sm:$0xf] %v851
        %885 = vst [vmem:[%s872 + $0x30] sm:$0xf] %v852
        %886 = vst [vmem:[%s872 + $0x34] sm:$0xf] %v853
        %887 = vst [vmem:[%s872 + $0x38] sm:$0xf] %v854
        %888 = vst [vmem:[%s872 + $0x3c] sm:$0xf] %v855
        %v889 = vld [vmem:[%s446] sm:$0xf]
        %v890 = vld [vmem:[%s446 + $0x4] sm:$0xf]
        %p891 = scmp.gt.s32.totalorder %s35, 0
        %v892 = vld [vmem:[#allocation9] sm:$0xf]
        %v893 = vld [vmem:[#allocation9 + $0x4] sm:$0xf]
        %v894 = vld [vmem:[#allocation9 + $0x8] sm:$0xf]
        %v895 = vld [vmem:[#allocation9 + $0xc] sm:$0xf]
        %v896 = vld [vmem:[#allocation9 + $0x10] sm:$0xf]
        %v897 = vld [vmem:[#allocation9 + $0x14] sm:$0xf]
        %v898 = vld [vmem:[#allocation9 + $0x18] sm:$0xf]
        %v899 = vld [vmem:[#allocation9 + $0x1c] sm:$0xf]
        %v900 = vld [vmem:[#allocation9 + $0x20] sm:$0xf]
        %v901 = vld [vmem:[#allocation9 + $0x24] sm:$0xf]
        %v902 = vld [vmem:[#allocation9 + $0x28] sm:$0xf]
        %v903 = vld [vmem:[#allocation9 + $0x2c] sm:$0xf]
        %v904 = vld [vmem:[#allocation9 + $0x30] sm:$0xf]
        %v905 = vld [vmem:[#allocation9 + $0x34] sm:$0xf]
        %v906 = vld [vmem:[#allocation9 + $0x38] sm:$0xf]
        %v907 = vld [vmem:[#allocation9 + $0x3c] sm:$0xf]
        %v910 = vunpack.c.l.b16 %v889
        %v911 = vunpack.c.l.b16 %v890
        %v912 = vpack.c.b16 %v911, %v910
        %v930 = vunpack.c.l.b16 %v892
        %v931 = vunpack.c.l.b16 %v893
        %v932 = vunpack.c.l.b16 %v894
        %v933 = vunpack.c.l.b16 %v895
        %v934 = vunpack.c.l.b16 %v896
        %v935 = vunpack.c.l.b16 %v897
        %v936 = vunpack.c.l.b16 %v898
        %v937 = vunpack.c.l.b16 %v899
        %v938 = vunpack.c.l.b16 %v900
        %v939 = vunpack.c.l.b16 %v901
        %v940 = vunpack.c.l.b16 %v902
        %v941 = vunpack.c.l.b16 %v903
        %v942 = vunpack.c.l.b16 %v904
        %v943 = vunpack.c.l.b16 %v905
        %v944 = vunpack.c.l.b16 %v906
        %v945 = vunpack.c.l.b16 %v907
        %v946 = vpack.c.b16 %v931, %v930
        %v947 = vpack.c.b16 %v933, %v932
        %v948 = vpack.c.b16 %v935, %v934
        %v949 = vpack.c.b16 %v937, %v936
        %v950 = vpack.c.b16 %v939, %v938
        %v951 = vpack.c.b16 %v941, %v940
        %v952 = vpack.c.b16 %v943, %v942
        %v953 = vpack.c.b16 %v945, %v944
        %962 = vmatprep.subr.bf16.mxu0 0
        %963 = vmatpush1.bf16.msra.mxu0 %v953
        %964 = vmatprep.subr.bf16.mxu0 0
        %965 = vmatpush1.bf16.msra.mxu0 %v952
        %966 = vmatprep.subr.bf16.mxu0 0
        %967 = vmatpush1.bf16.msra.mxu0 %v951
        %968 = vmatprep.subr.bf16.mxu0 0
        %969 = vmatpush1.bf16.msra.mxu0 %v950
        %970 = vmatprep.subr.bf16.mxu0 0
        %971 = vmatpush1.bf16.msra.mxu0 %v949
        %972 = vmatprep.subr.bf16.mxu0 0
        %973 = vmatpush1.bf16.msra.mxu0 %v948
        %974 = vmatprep.subr.bf16.mxu0 0
        %975 = vmatpush1.bf16.msra.mxu0 %v947
        %976 = vmatprep.subr.bf16.mxu0 0
        %977 = vmatpush1.bf16.msra.mxu0 %v946
        %978 = vmatprep.subr.bf16.mxu0 0
        %979 = vmatpush2.bf16.msra.mxu0 0
        %980 = vmatprep.subr.bf16.mxu0 0
        %981 = vmatpush2.bf16.msra.mxu0 0
        %982 = vmatprep.subr.bf16.mxu0 0
        %983 = vmatpush2.bf16.msra.mxu0 0
        %984 = vmatprep.subr.bf16.mxu0 0
        %985 = vmatpush2.bf16.msra.mxu0 0
        %986 = vmatprep.subr.bf16.mxu0 0
        %987 = vmatpush2.bf16.msra.mxu0 0
        %988 = vmatprep.subr.bf16.mxu0 0
        %989 = vmatpush2.bf16.msra.mxu0 0
        %990 = vmatprep.subr.bf16.mxu0 0
        %991 = vmatpush2.bf16.msra.mxu0 0
        %992 = vmatprep.subr.bf16.mxu0 0
        %993 = vmatpush2.bf16.msra.mxu0 0
        %994 = vmatprep.mubr.bf16.mxu0 0
        %995 = vmatmul.mubr.bf16.gmra.mxu0 %v912
        %v996 = vpop.f32.mrf.mxu0
        %v997 = vadd.f32 0.0, %v996
        %v998 = vpop.f32.mrf.mxu0
        %v999 = vpop.f32.mrf.mxu0
        %v1000 = vadd.f32 0.0, %v999
        %v1001 = vpop.f32.mrf.mxu0
        %1002 = vdwg.mxu0
        %v1003 = vmul.f32 %v997, %v752
        %v1004 = vmul.f32 %v1000, %v752
        %v1005 = vadd.f32 %v1003, %v774
        %v1006 = vadd.f32 %v1004, %v774
        %v1007 = vmax.f32 %v1005, 0.0
        %v1008 = vmax.f32 %v1006, 0.0
        %s1009 = scalar_select %p891, 1, 0
        %s1010 = scvt.s32.f32 %s1009
        %v1011 = vstv %s1010
        %v1012 = vmul.f32 %v1007, %v1011
        %v1013 = vmul.f32 %v1008, %v1011
        %v1014 = vpack.c.bf16 %v1013, %v1012
        %v1016 = vunpack.c.l.b16 %v1014
        %v1017 = vunpack.c.h.b16 %v1014
        %v1018 = vpack.c.b16 %v1016, %v1016
        %v1019 = vpack.c.b16 %v1017, %v1017
        %1022 = vst [vmem:[#allocation2] sm:$0xf] %v1018
        %1023 = vst [vmem:[#allocation2 + $0x4] sm:$0xf] %v1019
        %v1024 = vld [vmem:[%s455] sm:$0xf]
        %v1025 = vld [vmem:[%s455 + $0x4] sm:$0xf]
        %p1026 = scmp.lt.s32.totalorder %s35, 1
        %v1027 = vld [vmem:[#allocation9] sm:$0xf]
        %v1028 = vld [vmem:[#allocation9 + $0x4] sm:$0xf]
        %v1029 = vld [vmem:[#allocation9 + $0x8] sm:$0xf]
        %v1030 = vld [vmem:[#allocation9 + $0xc] sm:$0xf]
        %v1031 = vld [vmem:[#allocation9 + $0x10] sm:$0xf]
        %v1032 = vld [vmem:[#allocation9 + $0x14] sm:$0xf]
        %v1033 = vld [vmem:[#allocation9 + $0x18] sm:$0xf]
        %v1034 = vld [vmem:[#allocation9 + $0x1c] sm:$0xf]
        %v1035 = vld [vmem:[#allocation9 + $0x20] sm:$0xf]
        %v1036 = vld [vmem:[#allocation9 + $0x24] sm:$0xf]
        %v1037 = vld [vmem:[#allocation9 + $0x28] sm:$0xf]
        %v1038 = vld [vmem:[#allocation9 + $0x2c] sm:$0xf]
        %v1039 = vld [vmem:[#allocation9 + $0x30] sm:$0xf]
        %v1040 = vld [vmem:[#allocation9 + $0x34] sm:$0xf]
        %v1041 = vld [vmem:[#allocation9 + $0x38] sm:$0xf]
        %v1042 = vld [vmem:[#allocation9 + $0x3c] sm:$0xf]
        %v1045 = vunpack.c.l.b16 %v1024
        %v1046 = vunpack.c.l.b16 %v1025
        %v1047 = vpack.c.b16 %v1046, %v1045
        %v1065 = vunpack.c.l.b16 %v1027
        %v1066 = vunpack.c.l.b16 %v1028
        %v1067 = vunpack.c.l.b16 %v1029
        %v1068 = vunpack.c.l.b16 %v1030
        %v1069 = vunpack.c.l.b16 %v1031
        %v1070 = vunpack.c.l.b16 %v1032
        %v1071 = vunpack.c.l.b16 %v1033
        %v1072 = vunpack.c.l.b16 %v1034
        %v1073 = vunpack.c.l.b16 %v1035
        %v1074 = vunpack.c.l.b16 %v1036
        %v1075 = vunpack.c.l.b16 %v1037
        %v1076 = vunpack.c.l.b16 %v1038
        %v1077 = vunpack.c.l.b16 %v1039
        %v1078 = vunpack.c.l.b16 %v1040
        %v1079 = vunpack.c.l.b16 %v1041
        %v1080 = vunpack.c.l.b16 %v1042
        %v1081 = vpack.c.b16 %v1066, %v1065
        %v1082 = vpack.c.b16 %v1068, %v1067
        %v1083 = vpack.c.b16 %v1070, %v1069
        %v1084 = vpack.c.b16 %v1072, %v1071
        %v1085 = vpack.c.b16 %v1074, %v1073
        %v1086 = vpack.c.b16 %v1076, %v1075
        %v1087 = vpack.c.b16 %v1078, %v1077
        %v1088 = vpack.c.b16 %v1080, %v1079
        %1097 = vmatprep.subr.bf16.mxu0 0
        %1098 = vmatpush1.bf16.msra.mxu0 %v1088
        %1099 = vmatprep.subr.bf16.mxu0 0
        %1100 = vmatpush1.bf16.msra.mxu0 %v1087
        %1101 = vmatprep.subr.bf16.mxu0 0
        %1102 = vmatpush1.bf16.msra.mxu0 %v1086
        %1103 = vmatprep.subr.bf16.mxu0 0
        %1104 = vmatpush1.bf16.msra.mxu0 %v1085
        %1105 = vmatprep.subr.bf16.mxu0 0
        %1106 = vmatpush1.bf16.msra.mxu0 %v1084
        %1107 = vmatprep.subr.bf16.mxu0 0
        %1108 = vmatpush1.bf16.msra.mxu0 %v1083
        %1109 = vmatprep.subr.bf16.mxu0 0
        %1110 = vmatpush1.bf16.msra.mxu0 %v1082
        %1111 = vmatprep.subr.bf16.mxu0 0
        %1112 = vmatpush1.bf16.msra.mxu0 %v1081
        %1113 = vmatprep.subr.bf16.mxu0 0
        %1114 = vmatpush2.bf16.msra.mxu0 0
        %1115 = vmatprep.subr.bf16.mxu0 0
        %1116 = vmatpush2.bf16.msra.mxu0 0
        %1117 = vmatprep.subr.bf16.mxu0 0
        %1118 = vmatpush2.bf16.msra.mxu0 0
        %1119 = vmatprep.subr.bf16.mxu0 0
        %1120 = vmatpush2.bf16.msra.mxu0 0
        %1121 = vmatprep.subr.bf16.mxu0 0
        %1122 = vmatpush2.bf16.msra.mxu0 0
        %1123 = vmatprep.subr.bf16.mxu0 0
        %1124 = vmatpush2.bf16.msra.mxu0 0
        %1125 = vmatprep.subr.bf16.mxu0 0
        %1126 = vmatpush2.bf16.msra.mxu0 0
        %1127 = vmatprep.subr.bf16.mxu0 0
        %1128 = vmatpush2.bf16.msra.mxu0 0
        %1129 = vmatprep.mubr.bf16.mxu0 0
        %1130 = vmatmul.mubr.bf16.gmra.mxu0 %v1047
        %v1131 = vpop.f32.mrf.mxu0
        %v1132 = vadd.f32 0.0, %v1131
        %v1133 = vpop.f32.mrf.mxu0
        %v1134 = vpop.f32.mrf.mxu0
        %v1135 = vadd.f32 0.0, %v1134
        %v1136 = vpop.f32.mrf.mxu0
        %1137 = vdwg.mxu0
        %v1138 = vmul.f32 %v1132, %v752
        %v1139 = vmul.f32 %v1135, %v752
        %v1140 = vadd.f32 %v1138, %v774
        %v1141 = vadd.f32 %v1139, %v774
        %v1142 = vmax.f32 %v1140, 0.0
        %v1143 = vmax.f32 %v1141, 0.0
        %s1144 = scalar_select %p1026, 1, 0
        %s1145 = scvt.s32.f32 %s1144
        %v1146 = vstv %s1145
        %v1147 = vmul.f32 %v1142, %v1146
        %v1148 = vmul.f32 %v1143, %v1146
        %v1149 = vpack.c.bf16 %v1148, %v1147
        %v1151 = vunpack.c.l.b16 %v1149
        %v1152 = vunpack.c.h.b16 %v1149
        %v1153 = vpack.c.b16 %v1151, %v1151
        %v1154 = vpack.c.b16 %v1152, %v1152
        %1157 = vst [vmem:[#allocation2 + $0x48] sm:$0xf] %v1153
        %1158 = vst [vmem:[#allocation2 + $0x4c] sm:$0xf] %v1154
        %v1159 = vlaneseq
        %v1160 = vshrl.u32 %v1159, 7
        %v1161 = vadd.s32 %v1160, 8
        %v1162 = vadd.s32 %v1160, 16
        %v1163 = vadd.s32 %v1160, 24
        %v1164 = vadd.s32 %v1160, 32
        %v1165 = vadd.s32 %v1160, 40
        %v1166 = vadd.s32 %v1160, 48
        %v1167 = vadd.s32 %v1160, 56
        %v1168 = vadd.s32 %v1160, 64
        %v1169 = vadd.s32 %v1160, 72
        %v1170 = vadd.s32 %v1160, 80
        %v1171 = vadd.s32 %v1160, 88
        %v1172 = vadd.s32 %v1160, 96
        %v1173 = vadd.s32 %v1160, 104
        %v1174 = vadd.s32 %v1160, 112
        %v1175 = vadd.s32 %v1160, 120
        %v1176 = vand.u32 %v1160, 15
        %v1177 = vand.u32 %v1161, 15
        %v1178 = vand.u32 %v1162, 15
        %v1179 = vand.u32 %v1163, 15
        %v1180 = vand.u32 %v1164, 15
        %v1181 = vand.u32 %v1165, 15
        %v1182 = vand.u32 %v1166, 15
        %v1183 = vand.u32 %v1167, 15
        %v1184 = vand.u32 %v1168, 15
        %v1185 = vand.u32 %v1169, 15
        %v1186 = vand.u32 %v1170, 15
        %v1187 = vand.u32 %v1171, 15
        %v1188 = vand.u32 %v1172, 15
        %v1189 = vand.u32 %v1173, 15
        %v1190 = vand.u32 %v1174, 15
        %v1191 = vand.u32 %v1175, 15
        %vm1192 = vcmp.gt.s32.totalorder %v1176, 0
        %vm1193 = vcmp.gt.s32.totalorder %v1177, 0
        %vm1194 = vcmp.gt.s32.totalorder %v1178, 0
        %vm1195 = vcmp.gt.s32.totalorder %v1179, 0
        %vm1196 = vcmp.gt.s32.totalorder %v1180, 0
        %vm1197 = vcmp.gt.s32.totalorder %v1181, 0
        %vm1198 = vcmp.gt.s32.totalorder %v1182, 0
        %vm1199 = vcmp.gt.s32.totalorder %v1183, 0
        %vm1200 = vcmp.gt.s32.totalorder %v1184, 0
        %vm1201 = vcmp.gt.s32.totalorder %v1185, 0
        %vm1202 = vcmp.gt.s32.totalorder %v1186, 0
        %vm1203 = vcmp.gt.s32.totalorder %v1187, 0
        %vm1204 = vcmp.gt.s32.totalorder %v1188, 0
        %vm1205 = vcmp.gt.s32.totalorder %v1189, 0
        %vm1206 = vcmp.gt.s32.totalorder %v1190, 0
        %vm1207 = vcmp.gt.s32.totalorder %v1191, 0
        %vm1208 = vcmp.lt.s32.totalorder %v1176, 15
        %vm1209 = vcmp.lt.s32.totalorder %v1177, 15
        %vm1210 = vcmp.lt.s32.totalorder %v1178, 15
        %vm1211 = vcmp.lt.s32.totalorder %v1179, 15
        %vm1212 = vcmp.lt.s32.totalorder %v1180, 15
        %vm1213 = vcmp.lt.s32.totalorder %v1181, 15
        %vm1214 = vcmp.lt.s32.totalorder %v1182, 15
        %vm1215 = vcmp.lt.s32.totalorder %v1183, 15
        %vm1216 = vcmp.lt.s32.totalorder %v1184, 15
        %vm1217 = vcmp.lt.s32.totalorder %v1185, 15
        %vm1218 = vcmp.lt.s32.totalorder %v1186, 15
        %vm1219 = vcmp.lt.s32.totalorder %v1187, 15
        %vm1220 = vcmp.lt.s32.totalorder %v1188, 15
        %vm1221 = vcmp.lt.s32.totalorder %v1189, 15
        %vm1222 = vcmp.lt.s32.totalorder %v1190, 15
        %vm1223 = vcmp.lt.s32.totalorder %v1191, 15
        %v1224 = vld [vmem:[#allocation2] sm:$0xf]
        %v1225 = vld [vmem:[#allocation2 + $0x4] sm:$0xf]
        %v1226 = vld [vmem:[#allocation2 + $0x8] sm:$0xf]
        %v1227 = vld [vmem:[#allocation2 + $0xc] sm:$0xf]
        %v1228 = vld [vmem:[#allocation2 + $0x10] sm:$0xf]
        %v1229 = vld [vmem:[#allocation2 + $0x14] sm:$0xf]
        %v1230 = vld [vmem:[#allocation2 + $0x18] sm:$0xf]
        %v1231 = vld [vmem:[#allocation2 + $0x1c] sm:$0xf]
        %v1232 = vld [vmem:[#allocation2 + $0x20] sm:$0xf]
        %v1233 = vld [vmem:[#allocation2 + $0x24] sm:$0xf]
        %v1234 = vld [vmem:[#allocation2 + $0x28] sm:$0xf]
        %v1235 = vld [vmem:[#allocation2 + $0x2c] sm:$0xf]
        %v1236 = vld [vmem:[#allocation2 + $0x30] sm:$0xf]
        %v1237 = vld [vmem:[#allocation2 + $0x34] sm:$0xf]
        %v1238 = vld [vmem:[#allocation2 + $0x38] sm:$0xf]
        %v1239 = vld [vmem:[#allocation2 + $0x3c] sm:$0xf]
        %v1240 = vld [vmem:[#allocation11] sm:$0xff]
        %v1241 = vld [vmem:[#allocation11 + $0x8] sm:$0xf]
        %v1242 = vld [vmem:[#allocation11 + $0xc] sm:$0xff]
        %v1243 = vld [vmem:[#allocation11 + $0x14] sm:$0xf]
        %v1244 = vld [vmem:[#allocation11 + $0x18] sm:$0xff]
        %v1245 = vld [vmem:[#allocation11 + $0x20] sm:$0xf]
        %v1246 = vld [vmem:[#allocation11 + $0x24] sm:$0xff]
        %v1247 = vld [vmem:[#allocation11 + $0x2c] sm:$0xf]
        %v1248 = vld [vmem:[#allocation11 + $0x30] sm:$0xff]
        %v1249 = vld [vmem:[#allocation11 + $0x38] sm:$0xf]
        %v1250 = vld [vmem:[#allocation11 + $0x3c] sm:$0xff]
        %v1251 = vld [vmem:[#allocation11 + $0x44] sm:$0xf]
        %v1252 = vld [vmem:[#allocation11 + $0x48] sm:$0xff]
        %v1253 = vld [vmem:[#allocation11 + $0x50] sm:$0xf]
        %v1254 = vld [vmem:[#allocation11 + $0x54] sm:$0xff]
        %v1255 = vld [vmem:[#allocation11 + $0x5c] sm:$0xf]
        %v1256 = vld [vmem:[#allocation11 + $0x60] sm:$0xff]
        %v1257 = vld [vmem:[#allocation11 + $0x68] sm:$0xf]
        %v1258 = vld [vmem:[#allocation11 + $0x6c] sm:$0xff]
        %v1259 = vld [vmem:[#allocation11 + $0x74] sm:$0xf]
        %v1260 = vld [vmem:[#allocation11 + $0x78] sm:$0xff]
        %v1261 = vld [vmem:[#allocation11 + $0x80] sm:$0xf]
        %v1262 = vld [vmem:[#allocation11 + $0x84] sm:$0xff]
        %v1263 = vld [vmem:[#allocation11 + $0x8c] sm:$0xf]
        %v1264 = vld [vmem:[#allocation11 + $0x90] sm:$0xff]
        %v1265 = vld [vmem:[#allocation11 + $0x98] sm:$0xf]
        %v1266 = vld [vmem:[#allocation11 + $0x9c] sm:$0xff]
        %v1267 = vld [vmem:[#allocation11 + $0xa4] sm:$0xf]
        %v1268 = vld [vmem:[#allocation11 + $0xa8] sm:$0xff]
        %v1269 = vld [vmem:[#allocation11 + $0xb0] sm:$0xf]
        %v1270 = vld [vmem:[#allocation11 + $0xb4] sm:$0xff]
        %v1271 = vld [vmem:[#allocation11 + $0xbc] sm:$0xf]
        %v1272 = vld [vmem:[%s872] sm:$0xf]
        %v1273 = vld [vmem:[%s872 + $0x4] sm:$0xf]
        %v1274 = vld [vmem:[%s872 + $0x8] sm:$0xf]
        %v1275 = vld [vmem:[%s872 + $0xc] sm:$0xf]
        %v1276 = vld [vmem:[%s872 + $0x10] sm:$0xf]
        %v1277 = vld [vmem:[%s872 + $0x14] sm:$0xf]
        %v1278 = vld [vmem:[%s872 + $0x18] sm:$0xf]
        %v1279 = vld [vmem:[%s872 + $0x1c] sm:$0xf]
        %v1280 = vld [vmem:[%s872 + $0x20] sm:$0xf]
        %v1281 = vld [vmem:[%s872 + $0x24] sm:$0xf]
        %v1282 = vld [vmem:[%s872 + $0x28] sm:$0xf]
        %v1283 = vld [vmem:[%s872 + $0x2c] sm:$0xf]
        %v1284 = vld [vmem:[%s872 + $0x30] sm:$0xf]
        %v1285 = vld [vmem:[%s872 + $0x34] sm:$0xf]
        %v1286 = vld [vmem:[%s872 + $0x38] sm:$0xf]
        %v1287 = vld [vmem:[%s872 + $0x3c] sm:$0xf]
        %s1288 = scalar_lea.vmem [#allocation11], 192
        %v1289 = vld [vmem:[%s1288] sm:$0xff]
        %v1290 = vld [vmem:[%s1288 + $0x8] sm:$0xf]
        %v1291 = vld [vmem:[%s1288 + $0xc] sm:$0xff]
        %v1292 = vld [vmem:[%s1288 + $0x14] sm:$0xf]
        %v1293 = vld [vmem:[%s1288 + $0x18] sm:$0xff]
        %v1294 = vld [vmem:[%s1288 + $0x20] sm:$0xf]
        %v1295 = vld [vmem:[%s1288 + $0x24] sm:$0xff]
        %v1296 = vld [vmem:[%s1288 + $0x2c] sm:$0xf]
        %v1297 = vld [vmem:[%s1288 + $0x30] sm:$0xff]
        %v1298 = vld [vmem:[%s1288 + $0x38] sm:$0xf]
        %v1299 = vld [vmem:[%s1288 + $0x3c] sm:$0xff]
        %v1300 = vld [vmem:[%s1288 + $0x44] sm:$0xf]
        %v1301 = vld [vmem:[%s1288 + $0x48] sm:$0xff]
        %v1302 = vld [vmem:[%s1288 + $0x50] sm:$0xf]
        %v1303 = vld [vmem:[%s1288 + $0x54] sm:$0xff]
        %v1304 = vld [vmem:[%s1288 + $0x5c] sm:$0xf]
        %v1305 = vld [vmem:[%s1288 + $0x60] sm:$0xff]
        %v1306 = vld [vmem:[%s1288 + $0x68] sm:$0xf]
        %v1307 = vld [vmem:[%s1288 + $0x6c] sm:$0xff]
        %v1308 = vld [vmem:[%s1288 + $0x74] sm:$0xf]
        %v1309 = vld [vmem:[%s1288 + $0x78] sm:$0xff]
        %v1310 = vld [vmem:[%s1288 + $0x80] sm:$0xf]
        %v1311 = vld [vmem:[%s1288 + $0x84] sm:$0xff]
        %v1312 = vld [vmem:[%s1288 + $0x8c] sm:$0xf]
        %v1313 = vld [vmem:[%s1288 + $0x90] sm:$0xff]
        %v1314 = vld [vmem:[%s1288 + $0x98] sm:$0xf]
        %v1315 = vld [vmem:[%s1288 + $0x9c] sm:$0xff]
        %v1316 = vld [vmem:[%s1288 + $0xa4] sm:$0xf]
        %v1317 = vld [vmem:[%s1288 + $0xa8] sm:$0xff]
        %v1318 = vld [vmem:[%s1288 + $0xb0] sm:$0xf]
        %v1319 = vld [vmem:[%s1288 + $0xb4] sm:$0xff]
        %v1320 = vld [vmem:[%s1288 + $0xbc] sm:$0xf]
        %v1337 = vunpack.c.l.b16 %v1272
        %v1338 = vunpack.c.l.b16 %v1273
        %v1339 = vunpack.c.l.b16 %v1274
        %v1340 = vunpack.c.l.b16 %v1275
        %v1341 = vunpack.c.l.b16 %v1276
        %v1342 = vunpack.c.l.b16 %v1277
        %v1343 = vunpack.c.l.b16 %v1278
        %v1344 = vunpack.c.l.b16 %v1279
        %v1345 = vunpack.c.l.b16 %v1280
        %v1346 = vunpack.c.l.b16 %v1281
        %v1347 = vunpack.c.l.b16 %v1282
        %v1348 = vunpack.c.l.b16 %v1283
        %v1349 = vunpack.c.l.b16 %v1284
        %v1350 = vunpack.c.l.b16 %v1285
        %v1351 = vunpack.c.l.b16 %v1286
        %v1352 = vunpack.c.l.b16 %v1287
        %v1353 = vpack.c.b16 %v1338, %v1337
        %v1354 = vpack.c.b16 %v1340, %v1339
        %v1355 = vpack.c.b16 %v1342, %v1341
        %v1356 = vpack.c.b16 %v1344, %v1343
        %v1357 = vpack.c.b16 %v1346, %v1345
        %v1358 = vpack.c.b16 %v1348, %v1347
        %v1359 = vpack.c.b16 %v1350, %v1349
        %v1360 = vpack.c.b16 %v1352, %v1351
        %v1401 = vunpack.c.l.b16 %v1289
        %v1402 = vunpack.c.h.b16 %v1289
        %v1403 = vunpack.c.l.b16 %v1290
        %v1404 = vunpack.c.l.b16 %v1291
        %v1405 = vunpack.c.h.b16 %v1291
        %v1406 = vunpack.c.l.b16 %v1292
        %v1407 = vunpack.c.l.b16 %v1293
        %v1408 = vunpack.c.h.b16 %v1293
        %v1409 = vunpack.c.l.b16 %v1294
        %v1410 = vunpack.c.l.b16 %v1295
        %v1411 = vunpack.c.h.b16 %v1295
        %v1412 = vunpack.c.l.b16 %v1296
        %v1413 = vunpack.c.l.b16 %v1297
        %v1414 = vunpack.c.h.b16 %v1297
        %v1415 = vunpack.c.l.b16 %v1298
        %v1416 = vunpack.c.l.b16 %v1299
        %v1417 = vunpack.c.h.b16 %v1299
        %v1418 = vunpack.c.l.b16 %v1300
        %v1419 = vunpack.c.l.b16 %v1301
        %v1420 = vunpack.c.h.b16 %v1301
        %v1421 = vunpack.c.l.b16 %v1302
        %v1422 = vunpack.c.l.b16 %v1303
        %v1423 = vunpack.c.h.b16 %v1303
        %v1424 = vunpack.c.l.b16 %v1304
        %v1425 = vunpack.c.l.b16 %v1305
        %v1426 = vunpack.c.h.b16 %v1305
        %v1427 = vunpack.c.l.b16 %v1306
        %v1428 = vunpack.c.l.b16 %v1307
        %v1429 = vunpack.c.h.b16 %v1307
        %v1430 = vunpack.c.l.b16 %v1308
        %v1431 = vunpack.c.l.b16 %v1309
        %v1432 = vunpack.c.h.b16 %v1309
        %v1433 = vunpack.c.l.b16 %v1310
        %v1434 = vunpack.c.l.b16 %v1311
        %v1435 = vunpack.c.h.b16 %v1311
        %v1436 = vunpack.c.l.b16 %v1312
        %v1437 = vunpack.c.l.b16 %v1313
        %v1438 = vunpack.c.h.b16 %v1313
        %v1439 = vunpack.c.l.b16 %v1314
        %v1440 = vunpack.c.l.b16 %v1315
        %v1441 = vunpack.c.h.b16 %v1315
        %v1442 = vunpack.c.l.b16 %v1316
        %v1443 = vunpack.c.l.b16 %v1317
        %v1444 = vunpack.c.h.b16 %v1317
        %v1445 = vunpack.c.l.b16 %v1318
        %v1446 = vunpack.c.l.b16 %v1319
        %v1447 = vunpack.c.h.b16 %v1319
        %v1448 = vunpack.c.l.b16 %v1320
        %v1449 = vpack.c.b16 %v1404, %v1401
        %v1450 = vpack.c.b16 %v1405, %v1402
        %v1451 = vpack.c.b16 %v1406, %v1403
        %v1452 = vpack.c.b16 %v1410, %v1407
        %v1453 = vpack.c.b16 %v1411, %v1408
        %v1454 = vpack.c.b16 %v1412, %v1409
        %v1455 = vpack.c.b16 %v1416, %v1413
        %v1456 = vpack.c.b16 %v1417, %v1414
        %v1457 = vpack.c.b16 %v1418, %v1415
        %v1458 = vpack.c.b16 %v1422, %v1419
        %v1459 = vpack.c.b16 %v1423, %v1420
        %v1460 = vpack.c.b16 %v1424, %v1421
        %v1461 = vpack.c.b16 %v1428, %v1425
        %v1462 = vpack.c.b16 %v1429, %v1426
        %v1463 = vpack.c.b16 %v1430, %v1427
        %v1464 = vpack.c.b16 %v1434, %v1431
        %v1465 = vpack.c.b16 %v1435, %v1432
        %v1466 = vpack.c.b16 %v1436, %v1433
        %v1467 = vpack.c.b16 %v1440, %v1437
        %v1468 = vpack.c.b16 %v1441, %v1438
        %v1469 = vpack.c.b16 %v1442, %v1439
        %v1470 = vpack.c.b16 %v1446, %v1443
        %v1471 = vpack.c.b16 %v1447, %v1444
        %v1472 = vpack.c.b16 %v1448, %v1445
        %1497 = vmatprep.subr.bf16.mxu0 %v1471
        %1498 = vmatpush1.bf16.msra.mxu0 %v1470
        %1499 = vmatprep.subr.bf16.mxu0 %v1468
        %1500 = vmatpush1.bf16.msra.mxu0 %v1467
        %1501 = vmatprep.subr.bf16.mxu0 %v1465
        %1502 = vmatpush1.bf16.msra.mxu0 %v1464
        %1503 = vmatprep.subr.bf16.mxu0 %v1462
        %1504 = vmatpush1.bf16.msra.mxu0 %v1461
        %1505 = vmatprep.subr.bf16.mxu0 %v1459
        %1506 = vmatpush1.bf16.msra.mxu0 %v1458
        %1507 = vmatprep.subr.bf16.mxu0 %v1456
        %1508 = vmatpush1.bf16.msra.mxu0 %v1455
        %1509 = vmatprep.subr.bf16.mxu0 %v1453
        %1510 = vmatpush1.bf16.msra.mxu0 %v1452
        %1511 = vmatprep.subr.bf16.mxu0 %v1450
        %1512 = vmatpush1.bf16.msra.mxu0 %v1449
        %1513 = vmatprep.subr.bf16.mxu0 0
        %1514 = vmatpush2.bf16.msra.mxu0 0
        %1515 = vmatprep.subr.bf16.mxu0 0
        %1516 = vmatpush2.bf16.msra.mxu0 0
        %1517 = vmatprep.subr.bf16.mxu0 0
        %1518 = vmatpush2.bf16.msra.mxu0 0
        %1519 = vmatprep.subr.bf16.mxu0 0
        %1520 = vmatpush2.bf16.msra.mxu0 0
        %1521 = vmatprep.subr.bf16.mxu0 0
        %1522 = vmatpush2.bf16.msra.mxu0 0
        %1523 = vmatprep.subr.bf16.mxu0 0
        %1524 = vmatpush2.bf16.msra.mxu0 0
        %1525 = vmatprep.subr.bf16.mxu0 0
        %1526 = vmatpush2.bf16.msra.mxu0 0
        %1527 = vmatprep.subr.bf16.mxu0 0
        %1528 = vmatpush2.bf16.msra.mxu0 0
        %1529 = vmatprep.mubr.bf16.mxu0 0
        %1530 = vmatmul.mubr.bf16.gmra.mxu0 %v1353
        %v1531 = vpop.f32.mrf.mxu0
        %v1532 = vadd.f32 0.0, %v1531
        %v1533 = vpop.f32.mrf.mxu0
        %v1534 = vadd.f32 0.0, %v1533
        %v1535 = vpop.f32.mrf.mxu0
        %v1536 = vadd.f32 0.0, %v1535
        %v1537 = vpop.f32.mrf.mxu0
        %v1538 = vadd.f32 0.0, %v1537
        %1539 = vmatprep.mubr.bf16.mxu0 0
        %1540 = vmatmul.mubr.bf16.gmra.mxu0 %v1354
        %v1541 = vpop.f32.mrf.mxu0
        %v1542 = vadd.f32 0.0, %v1541
        %v1543 = vpop.f32.mrf.mxu0
        %v1544 = vadd.f32 0.0, %v1543
        %v1545 = vpop.f32.mrf.mxu0
        %v1546 = vadd.f32 0.0, %v1545
        %v1547 = vpop.f32.mrf.mxu0
        %v1548 = vadd.f32 0.0, %v1547
        %1549 = vmatprep.mubr.bf16.mxu0 0
        %1550 = vmatmul.mubr.bf16.gmra.mxu0 %v1355
        %v1551 = vpop.f32.mrf.mxu0
        %v1552 = vadd.f32 0.0, %v1551
        %v1553 = vpop.f32.mrf.mxu0
        %v1554 = vadd.f32 0.0, %v1553
        %v1555 = vpop.f32.mrf.mxu0
        %v1556 = vadd.f32 0.0, %v1555
        %v1557 = vpop.f32.mrf.mxu0
        %v1558 = vadd.f32 0.0, %v1557
        %1559 = vmatprep.mubr.bf16.mxu0 0
        %1560 = vmatmul.mubr.bf16.gmra.mxu0 %v1356
        %v1561 = vpop.f32.mrf.mxu0
        %v1562 = vadd.f32 0.0, %v1561
        %v1563 = vpop.f32.mrf.mxu0
        %v1564 = vadd.f32 0.0, %v1563
        %v1565 = vpop.f32.mrf.mxu0
        %v1566 = vadd.f32 0.0, %v1565
        %v1567 = vpop.f32.mrf.mxu0
        %v1568 = vadd.f32 0.0, %v1567
        %1569 = vmatprep.mubr.bf16.mxu0 0
        %1570 = vmatmul.mubr.bf16.gmra.mxu0 %v1357
        %v1571 = vpop.f32.mrf.mxu0
        %v1572 = vadd.f32 0.0, %v1571
        %v1573 = vpop.f32.mrf.mxu0
        %v1574 = vadd.f32 0.0, %v1573
        %v1575 = vpop.f32.mrf.mxu0
        %v1576 = vadd.f32 0.0, %v1575
        %v1577 = vpop.f32.mrf.mxu0
        %v1578 = vadd.f32 0.0, %v1577
        %1579 = vmatprep.mubr.bf16.mxu0 0
        %1580 = vmatmul.mubr.bf16.gmra.mxu0 %v1358
        %v1581 = vpop.f32.mrf.mxu0
        %v1582 = vadd.f32 0.0, %v1581
        %v1583 = vpop.f32.mrf.mxu0
        %v1584 = vadd.f32 0.0, %v1583
        %v1585 = vpop.f32.mrf.mxu0
        %v1586 = vadd.f32 0.0, %v1585
        %v1587 = vpop.f32.mrf.mxu0
        %v1588 = vadd.f32 0.0, %v1587
        %1589 = vmatprep.mubr.bf16.mxu0 0
        %1590 = vmatmul.mubr.bf16.gmra.mxu0 %v1359
        %v1591 = vpop.f32.mrf.mxu0
        %v1592 = vadd.f32 0.0, %v1591
        %v1593 = vpop.f32.mrf.mxu0
        %v1594 = vadd.f32 0.0, %v1593
        %v1595 = vpop.f32.mrf.mxu0
        %v1596 = vadd.f32 0.0, %v1595
        %v1597 = vpop.f32.mrf.mxu0
        %v1598 = vadd.f32 0.0, %v1597
        %1599 = vmatprep.mubr.bf16.mxu0 0
        %1600 = vmatmul.mubr.bf16.gmra.mxu0 %v1360
        %v1601 = vpop.f32.mrf.mxu0
        %v1602 = vadd.f32 0.0, %v1601
        %v1603 = vpop.f32.mrf.mxu0
        %v1604 = vadd.f32 0.0, %v1603
        %v1605 = vpop.f32.mrf.mxu0
        %v1606 = vadd.f32 0.0, %v1605
        %v1607 = vpop.f32.mrf.mxu0
        %v1608 = vadd.f32 0.0, %v1607
        %1609 = vdwg.mxu0
        %1610 = vmatprep.subr.bf16.mxu0 0
        %1611 = vmatpush1.bf16.msra.mxu0 %v1472
        %1612 = vmatprep.subr.bf16.mxu0 0
        %1613 = vmatpush1.bf16.msra.mxu0 %v1469
        %1614 = vmatprep.subr.bf16.mxu0 0
        %1615 = vmatpush1.bf16.msra.mxu0 %v1466
        %1616 = vmatprep.subr.bf16.mxu0 0
        %1617 = vmatpush1.bf16.msra.mxu0 %v1463
        %1618 = vmatprep.subr.bf16.mxu0 0
        %1619 = vmatpush1.bf16.msra.mxu0 %v1460
        %1620 = vmatprep.subr.bf16.mxu0 0
        %1621 = vmatpush1.bf16.msra.mxu0 %v1457
        %1622 = vmatprep.subr.bf16.mxu0 0
        %1623 = vmatpush1.bf16.msra.mxu0 %v1454
        %1624 = vmatprep.subr.bf16.mxu0 0
        %1625 = vmatpush1.bf16.msra.mxu0 %v1451
        %1626 = vmatprep.subr.bf16.mxu0 0
        %1627 = vmatpush2.bf16.msra.mxu0 0
        %1628 = vmatprep.subr.bf16.mxu0 0
        %1629 = vmatpush2.bf16.msra.mxu0 0
        %1630 = vmatprep.subr.bf16.mxu0 0
        %1631 = vmatpush2.bf16.msra.mxu0 0
        %1632 = vmatprep.subr.bf16.mxu0 0
        %1633 = vmatpush2.bf16.msra.mxu0 0
        %1634 = vmatprep.subr.bf16.mxu0 0
        %1635 = vmatpush2.bf16.msra.mxu0 0
        %1636 = vmatprep.subr.bf16.mxu0 0
        %1637 = vmatpush2.bf16.msra.mxu0 0
        %1638 = vmatprep.subr.bf16.mxu0 0
        %1639 = vmatpush2.bf16.msra.mxu0 0
        %1640 = vmatprep.subr.bf16.mxu0 0
        %1641 = vmatpush2.bf16.msra.mxu0 0
        %1642 = vmatprep.mubr.bf16.mxu0 0
        %1643 = vmatmul.mubr.bf16.gmra.mxu0 %v1353
        %v1644 = vpop.f32.mrf.mxu0
        %v1645 = vadd.f32 0.0, %v1644
        %v1646 = vpop.f32.mrf.mxu0
        %v1647 = vpop.f32.mrf.mxu0
        %v1648 = vadd.f32 0.0, %v1647
        %v1649 = vpop.f32.mrf.mxu0
        %1650 = vmatprep.mubr.bf16.mxu0 0
        %1651 = vmatmul.mubr.bf16.gmra.mxu0 %v1354
        %v1652 = vpop.f32.mrf.mxu0
        %v1653 = vadd.f32 0.0, %v1652
        %v1654 = vpop.f32.mrf.mxu0
        %v1655 = vpop.f32.mrf.mxu0
        %v1656 = vadd.f32 0.0, %v1655
        %v1657 = vpop.f32.mrf.mxu0
        %1658 = vmatprep.mubr.bf16.mxu0 0
        %1659 = vmatmul.mubr.bf16.gmra.mxu0 %v1355
        %v1660 = vpop.f32.mrf.mxu0
        %v1661 = vadd.f32 0.0, %v1660
        %v1662 = vpop.f32.mrf.mxu0
        %v1663 = vpop.f32.mrf.mxu0
        %v1664 = vadd.f32 0.0, %v1663
        %v1665 = vpop.f32.mrf.mxu0
        %1666 = vmatprep.mubr.bf16.mxu0 0
        %1667 = vmatmul.mubr.bf16.gmra.mxu0 %v1356
        %v1668 = vpop.f32.mrf.mxu0
        %v1669 = vadd.f32 0.0, %v1668
        %v1670 = vpop.f32.mrf.mxu0
        %v1671 = vpop.f32.mrf.mxu0
        %v1672 = vadd.f32 0.0, %v1671
        %v1673 = vpop.f32.mrf.mxu0
        %1674 = vmatprep.mubr.bf16.mxu0 0
        %1675 = vmatmul.mubr.bf16.gmra.mxu0 %v1357
        %v1676 = vpop.f32.mrf.mxu0
        %v1677 = vadd.f32 0.0, %v1676
        %v1678 = vpop.f32.mrf.mxu0
        %v1679 = vpop.f32.mrf.mxu0
        %v1680 = vadd.f32 0.0, %v1679
        %v1681 = vpop.f32.mrf.mxu0
        %1682 = vmatprep.mubr.bf16.mxu0 0
        %1683 = vmatmul.mubr.bf16.gmra.mxu0 %v1358
        %v1684 = vpop.f32.mrf.mxu0
        %v1685 = vadd.f32 0.0, %v1684
        %v1686 = vpop.f32.mrf.mxu0
        %v1687 = vpop.f32.mrf.mxu0
        %v1688 = vadd.f32 0.0, %v1687
        %v1689 = vpop.f32.mrf.mxu0
        %1690 = vmatprep.mubr.bf16.mxu0 0
        %1691 = vmatmul.mubr.bf16.gmra.mxu0 %v1359
        %v1692 = vpop.f32.mrf.mxu0
        %v1693 = vadd.f32 0.0, %v1692
        %v1694 = vpop.f32.mrf.mxu0
        %v1695 = vpop.f32.mrf.mxu0
        %v1696 = vadd.f32 0.0, %v1695
        %v1697 = vpop.f32.mrf.mxu0
        %1698 = vmatprep.mubr.bf16.mxu0 0
        %1699 = vmatmul.mubr.bf16.gmra.mxu0 %v1360
        %v1700 = vpop.f32.mrf.mxu0
        %v1701 = vadd.f32 0.0, %v1700
        %v1702 = vpop.f32.mrf.mxu0
        %v1703 = vpop.f32.mrf.mxu0
        %v1704 = vadd.f32 0.0, %v1703
        %v1705 = vpop.f32.mrf.mxu0
        %1706 = vdwg.mxu0
        %v1723 = vunpack.c.l.b16 %v1224
        %v1724 = vunpack.c.l.b16 %v1225
        %v1725 = vunpack.c.l.b16 %v1226
        %v1726 = vunpack.c.l.b16 %v1227
        %v1727 = vunpack.c.l.b16 %v1228
        %v1728 = vunpack.c.l.b16 %v1229
        %v1729 = vunpack.c.l.b16 %v1230
        %v1730 = vunpack.c.l.b16 %v1231
        %v1731 = vunpack.c.l.b16 %v1232
        %v1732 = vunpack.c.l.b16 %v1233
        %v1733 = vunpack.c.l.b16 %v1234
        %v1734 = vunpack.c.l.b16 %v1235
        %v1735 = vunpack.c.l.b16 %v1236
        %v1736 = vunpack.c.l.b16 %v1237
        %v1737 = vunpack.c.l.b16 %v1238
        %v1738 = vunpack.c.l.b16 %v1239
        %v1739 = vpack.c.b16 %v1724, %v1723
        %v1740 = vpack.c.b16 %v1726, %v1725
        %v1741 = vpack.c.b16 %v1728, %v1727
        %v1742 = vpack.c.b16 %v1730, %v1729
        %v1743 = vpack.c.b16 %v1732, %v1731
        %v1744 = vpack.c.b16 %v1734, %v1733
        %v1745 = vpack.c.b16 %v1736, %v1735
        %v1746 = vpack.c.b16 %v1738, %v1737
        %v1787 = vunpack.c.l.b16 %v1240
        %v1788 = vunpack.c.h.b16 %v1240
        %v1789 = vunpack.c.l.b16 %v1241
        %v1790 = vunpack.c.l.b16 %v1242
        %v1791 = vunpack.c.h.b16 %v1242
        %v1792 = vunpack.c.l.b16 %v1243
        %v1793 = vunpack.c.l.b16 %v1244
        %v1794 = vunpack.c.h.b16 %v1244
        %v1795 = vunpack.c.l.b16 %v1245
        %v1796 = vunpack.c.l.b16 %v1246
        %v1797 = vunpack.c.h.b16 %v1246
        %v1798 = vunpack.c.l.b16 %v1247
        %v1799 = vunpack.c.l.b16 %v1248
        %v1800 = vunpack.c.h.b16 %v1248
        %v1801 = vunpack.c.l.b16 %v1249
        %v1802 = vunpack.c.l.b16 %v1250
        %v1803 = vunpack.c.h.b16 %v1250
        %v1804 = vunpack.c.l.b16 %v1251
        %v1805 = vunpack.c.l.b16 %v1252
        %v1806 = vunpack.c.h.b16 %v1252
        %v1807 = vunpack.c.l.b16 %v1253
        %v1808 = vunpack.c.l.b16 %v1254
        %v1809 = vunpack.c.h.b16 %v1254
        %v1810 = vunpack.c.l.b16 %v1255
        %v1811 = vunpack.c.l.b16 %v1256
        %v1812 = vunpack.c.h.b16 %v1256
        %v1813 = vunpack.c.l.b16 %v1257
        %v1814 = vunpack.c.l.b16 %v1258
        %v1815 = vunpack.c.h.b16 %v1258
        %v1816 = vunpack.c.l.b16 %v1259
        %v1817 = vunpack.c.l.b16 %v1260
        %v1818 = vunpack.c.h.b16 %v1260
        %v1819 = vunpack.c.l.b16 %v1261
        %v1820 = vunpack.c.l.b16 %v1262
        %v1821 = vunpack.c.h.b16 %v1262
        %v1822 = vunpack.c.l.b16 %v1263
        %v1823 = vunpack.c.l.b16 %v1264
        %v1824 = vunpack.c.h.b16 %v1264
        %v1825 = vunpack.c.l.b16 %v1265
        %v1826 = vunpack.c.l.b16 %v1266
        %v1827 = vunpack.c.h.b16 %v1266
        %v1828 = vunpack.c.l.b16 %v1267
        %v1829 = vunpack.c.l.b16 %v1268
        %v1830 = vunpack.c.h.b16 %v1268
        %v1831 = vunpack.c.l.b16 %v1269
        %v1832 = vunpack.c.l.b16 %v1270
        %v1833 = vunpack.c.h.b16 %v1270
        %v1834 = vunpack.c.l.b16 %v1271
        %v1835 = vpack.c.b16 %v1790, %v1787
        %v1836 = vpack.c.b16 %v1791, %v1788
        %v1837 = vpack.c.b16 %v1792, %v1789
        %v1838 = vpack.c.b16 %v1796, %v1793
        %v1839 = vpack.c.b16 %v1797, %v1794
        %v1840 = vpack.c.b16 %v1798, %v1795
        %v1841 = vpack.c.b16 %v1802, %v1799
        %v1842 = vpack.c.b16 %v1803, %v1800
        %v1843 = vpack.c.b16 %v1804, %v1801
        %v1844 = vpack.c.b16 %v1808, %v1805
        %v1845 = vpack.c.b16 %v1809, %v1806
        %v1846 = vpack.c.b16 %v1810, %v1807
        %v1847 = vpack.c.b16 %v1814, %v1811
        %v1848 = vpack.c.b16 %v1815, %v1812
        %v1849 = vpack.c.b16 %v1816, %v1813
        %v1850 = vpack.c.b16 %v1820, %v1817
        %v1851 = vpack.c.b16 %v1821, %v1818
        %v1852 = vpack.c.b16 %v1822, %v1819
        %v1853 = vpack.c.b16 %v1826, %v1823
        %v1854 = vpack.c.b16 %v1827, %v1824
        %v1855 = vpack.c.b16 %v1828, %v1825
        %v1856 = vpack.c.b16 %v1832, %v1829
        %v1857 = vpack.c.b16 %v1833, %v1830
        %v1858 = vpack.c.b16 %v1834, %v1831
        %1883 = vmatprep.subr.bf16.mxu0 %v1857
        %1884 = vmatpush1.bf16.msra.mxu0 %v1856
        %1885 = vmatprep.subr.bf16.mxu0 %v1854
        %1886 = vmatpush1.bf16.msra.mxu0 %v1853
        %1887 = vmatprep.subr.bf16.mxu0 %v1851
        %1888 = vmatpush1.bf16.msra.mxu0 %v1850
        %1889 = vmatprep.subr.bf16.mxu0 %v1848
        %1890 = vmatpush1.bf16.msra.mxu0 %v1847
        %1891 = vmatprep.subr.bf16.mxu0 %v1845
        %1892 = vmatpush1.bf16.msra.mxu0 %v1844
        %1893 = vmatprep.subr.bf16.mxu0 %v1842
        %1894 = vmatpush1.bf16.msra.mxu0 %v1841
        %1895 = vmatprep.subr.bf16.mxu0 %v1839
        %1896 = vmatpush1.bf16.msra.mxu0 %v1838
        %1897 = vmatprep.subr.bf16.mxu0 %v1836
        %1898 = vmatpush1.bf16.msra.mxu0 %v1835
        %1899 = vmatprep.subr.bf16.mxu0 0
        %1900 = vmatpush2.bf16.msra.mxu0 0
        %1901 = vmatprep.subr.bf16.mxu0 0
        %1902 = vmatpush2.bf16.msra.mxu0 0
        %1903 = vmatprep.subr.bf16.mxu0 0
        %1904 = vmatpush2.bf16.msra.mxu0 0
        %1905 = vmatprep.subr.bf16.mxu0 0
        %1906 = vmatpush2.bf16.msra.mxu0 0
        %1907 = vmatprep.subr.bf16.mxu0 0
        %1908 = vmatpush2.bf16.msra.mxu0 0
        %1909 = vmatprep.subr.bf16.mxu0 0
        %1910 = vmatpush2.bf16.msra.mxu0 0
        %1911 = vmatprep.subr.bf16.mxu0 0
        %1912 = vmatpush2.bf16.msra.mxu0 0
        %1913 = vmatprep.subr.bf16.mxu0 0
        %1914 = vmatpush2.bf16.msra.mxu0 0
        %1915 = vmatprep.mubr.bf16.mxu0 0
        %1916 = vmatmul.mubr.bf16.gmra.mxu0 %v1739
        %v1917 = vpop.f32.mrf.mxu0
        %v1918 = vadd.f32 %v1532, %v1917
        %v1919 = vpop.f32.mrf.mxu0
        %v1920 = vadd.f32 %v1534, %v1919
        %v1921 = vpop.f32.mrf.mxu0
        %v1922 = vadd.f32 %v1536, %v1921
        %v1923 = vpop.f32.mrf.mxu0
        %v1924 = vadd.f32 %v1538, %v1923
        %1925 = vmatprep.mubr.bf16.mxu0 0
        %1926 = vmatmul.mubr.bf16.gmra.mxu0 %v1740
        %v1927 = vpop.f32.mrf.mxu0
        %v1928 = vadd.f32 %v1542, %v1927
        %v1929 = vpop.f32.mrf.mxu0
        %v1930 = vadd.f32 %v1544, %v1929
        %v1931 = vpop.f32.mrf.mxu0
        %v1932 = vadd.f32 %v1546, %v1931
        %v1933 = vpop.f32.mrf.mxu0
        %v1934 = vadd.f32 %v1548, %v1933
        %1935 = vmatprep.mubr.bf16.mxu0 0
        %1936 = vmatmul.mubr.bf16.gmra.mxu0 %v1741
        %v1937 = vpop.f32.mrf.mxu0
        %v1938 = vadd.f32 %v1552, %v1937
        %v1939 = vpop.f32.mrf.mxu0
        %v1940 = vadd.f32 %v1554, %v1939
        %v1941 = vpop.f32.mrf.mxu0
        %v1942 = vadd.f32 %v1556, %v1941
        %v1943 = vpop.f32.mrf.mxu0
        %v1944 = vadd.f32 %v1558, %v1943
        %1945 = vmatprep.mubr.bf16.mxu0 0
        %1946 = vmatmul.mubr.bf16.gmra.mxu0 %v1742
        %v1947 = vpop.f32.mrf.mxu0
        %v1948 = vadd.f32 %v1562, %v1947
        %v1949 = vpop.f32.mrf.mxu0
        %v1950 = vadd.f32 %v1564, %v1949
        %v1951 = vpop.f32.mrf.mxu0
        %v1952 = vadd.f32 %v1566, %v1951
        %v1953 = vpop.f32.mrf.mxu0
        %v1954 = vadd.f32 %v1568, %v1953
        %1955 = vmatprep.mubr.bf16.mxu0 0
        %1956 = vmatmul.mubr.bf16.gmra.mxu0 %v1743
        %v1957 = vpop.f32.mrf.mxu0
        %v1958 = vadd.f32 %v1572, %v1957
        %v1959 = vpop.f32.mrf.mxu0
        %v1960 = vadd.f32 %v1574, %v1959
        %v1961 = vpop.f32.mrf.mxu0
        %v1962 = vadd.f32 %v1576, %v1961
        %v1963 = vpop.f32.mrf.mxu0
        %v1964 = vadd.f32 %v1578, %v1963
        %1965 = vmatprep.mubr.bf16.mxu0 0
        %1966 = vmatmul.mubr.bf16.gmra.mxu0 %v1744
        %v1967 = vpop.f32.mrf.mxu0
        %v1968 = vadd.f32 %v1582, %v1967
        %v1969 = vpop.f32.mrf.mxu0
        %v1970 = vadd.f32 %v1584, %v1969
        %v1971 = vpop.f32.mrf.mxu0
        %v1972 = vadd.f32 %v1586, %v1971
        %v1973 = vpop.f32.mrf.mxu0
        %v1974 = vadd.f32 %v1588, %v1973
        %1975 = vmatprep.mubr.bf16.mxu0 0
        %1976 = vmatmul.mubr.bf16.gmra.mxu0 %v1745
        %v1977 = vpop.f32.mrf.mxu0
        %v1978 = vadd.f32 %v1592, %v1977
        %v1979 = vpop.f32.mrf.mxu0
        %v1980 = vadd.f32 %v1594, %v1979
        %v1981 = vpop.f32.mrf.mxu0
        %v1982 = vadd.f32 %v1596, %v1981
        %v1983 = vpop.f32.mrf.mxu0
        %v1984 = vadd.f32 %v1598, %v1983
        %1985 = vmatprep.mubr.bf16.mxu0 0
        %1986 = vmatmul.mubr.bf16.gmra.mxu0 %v1746
        %v1987 = vpop.f32.mrf.mxu0
        %v1988 = vadd.f32 %v1602, %v1987
        %v1989 = vpop.f32.mrf.mxu0
        %v1990 = vadd.f32 %v1604, %v1989
        %v1991 = vpop.f32.mrf.mxu0
        %v1992 = vadd.f32 %v1606, %v1991
        %v1993 = vpop.f32.mrf.mxu0
        %v1994 = vadd.f32 %v1608, %v1993
        %1995 = vdwg.mxu0
        %1996 = vmatprep.subr.bf16.mxu0 0
        %1997 = vmatpush1.bf16.msra.mxu0 %v1858
        %1998 = vmatprep.subr.bf16.mxu0 0
        %1999 = vmatpush1.bf16.msra.mxu0 %v1855
        %2000 = vmatprep.subr.bf16.mxu0 0
        %2001 = vmatpush1.bf16.msra.mxu0 %v1852
        %2002 = vmatprep.subr.bf16.mxu0 0
        %2003 = vmatpush1.bf16.msra.mxu0 %v1849
        %2004 = vmatprep.subr.bf16.mxu0 0
        %2005 = vmatpush1.bf16.msra.mxu0 %v1846
        %2006 = vmatprep.subr.bf16.mxu0 0
        %2007 = vmatpush1.bf16.msra.mxu0 %v1843
        %2008 = vmatprep.subr.bf16.mxu0 0
        %2009 = vmatpush1.bf16.msra.mxu0 %v1840
        %2010 = vmatprep.subr.bf16.mxu0 0
        %2011 = vmatpush1.bf16.msra.mxu0 %v1837
        %2012 = vmatprep.subr.bf16.mxu0 0
        %2013 = vmatpush2.bf16.msra.mxu0 0
        %2014 = vmatprep.subr.bf16.mxu0 0
        %2015 = vmatpush2.bf16.msra.mxu0 0
        %2016 = vmatprep.subr.bf16.mxu0 0
        %2017 = vmatpush2.bf16.msra.mxu0 0
        %2018 = vmatprep.subr.bf16.mxu0 0
        %2019 = vmatpush2.bf16.msra.mxu0 0
        %2020 = vmatprep.subr.bf16.mxu0 0
        %2021 = vmatpush2.bf16.msra.mxu0 0
        %2022 = vmatprep.subr.bf16.mxu0 0
        %2023 = vmatpush2.bf16.msra.mxu0 0
        %2024 = vmatprep.subr.bf16.mxu0 0
        %2025 = vmatpush2.bf16.msra.mxu0 0
        %2026 = vmatprep.subr.bf16.mxu0 0
        %2027 = vmatpush2.bf16.msra.mxu0 0
        %2028 = vmatprep.mubr.bf16.mxu0 0
        %2029 = vmatmul.mubr.bf16.gmra.mxu0 %v1739
        %v2030 = vpop.f32.mrf.mxu0
        %v2031 = vadd.f32 %v1645, %v2030
        %v2032 = vpop.f32.mrf.mxu0
        %v2033 = vpop.f32.mrf.mxu0
        %v2034 = vadd.f32 %v1648, %v2033
        %v2035 = vpop.f32.mrf.mxu0
        %2036 = vmatprep.mubr.bf16.mxu0 0
        %2037 = vmatmul.mubr.bf16.gmra.mxu0 %v1740
        %v2038 = vpop.f32.mrf.mxu0
        %v2039 = vadd.f32 %v1653, %v2038
        %v2040 = vpop.f32.mrf.mxu0
        %v2041 = vpop.f32.mrf.mxu0
        %v2042 = vadd.f32 %v1656, %v2041
        %v2043 = vpop.f32.mrf.mxu0
        %2044 = vmatprep.mubr.bf16.mxu0 0
        %2045 = vmatmul.mubr.bf16.gmra.mxu0 %v1741
        %v2046 = vpop.f32.mrf.mxu0
        %v2047 = vadd.f32 %v1661, %v2046
        %v2048 = vpop.f32.mrf.mxu0
        %v2049 = vpop.f32.mrf.mxu0
        %v2050 = vadd.f32 %v1664, %v2049
        %v2051 = vpop.f32.mrf.mxu0
        %2052 = vmatprep.mubr.bf16.mxu0 0
        %2053 = vmatmul.mubr.bf16.gmra.mxu0 %v1742
        %v2054 = vpop.f32.mrf.mxu0
        %v2055 = vadd.f32 %v1669, %v2054
        %v2056 = vpop.f32.mrf.mxu0
        %v2057 = vpop.f32.mrf.mxu0
        %v2058 = vadd.f32 %v1672, %v2057
        %v2059 = vpop.f32.mrf.mxu0
        %2060 = vmatprep.mubr.bf16.mxu0 0
        %2061 = vmatmul.mubr.bf16.gmra.mxu0 %v1743
        %v2062 = vpop.f32.mrf.mxu0
        %v2063 = vadd.f32 %v1677, %v2062
        %v2064 = vpop.f32.mrf.mxu0
        %v2065 = vpop.f32.mrf.mxu0
        %v2066 = vadd.f32 %v1680, %v2065
        %v2067 = vpop.f32.mrf.mxu0
        %2068 = vmatprep.mubr.bf16.mxu0 0
        %2069 = vmatmul.mubr.bf16.gmra.mxu0 %v1744
        %v2070 = vpop.f32.mrf.mxu0
        %v2071 = vadd.f32 %v1685, %v2070
        %v2072 = vpop.f32.mrf.mxu0
        %v2073 = vpop.f32.mrf.mxu0
        %v2074 = vadd.f32 %v1688, %v2073
        %v2075 = vpop.f32.mrf.mxu0
        %2076 = vmatprep.mubr.bf16.mxu0 0
        %2077 = vmatmul.mubr.bf16.gmra.mxu0 %v1745
        %v2078 = vpop.f32.mrf.mxu0
        %v2079 = vadd.f32 %v1693, %v2078
        %v2080 = vpop.f32.mrf.mxu0
        %v2081 = vpop.f32.mrf.mxu0
        %v2082 = vadd.f32 %v1696, %v2081
        %v2083 = vpop.f32.mrf.mxu0
        %2084 = vmatprep.mubr.bf16.mxu0 0
        %2085 = vmatmul.mubr.bf16.gmra.mxu0 %v1746
        %v2086 = vpop.f32.mrf.mxu0
        %v2087 = vadd.f32 %v1701, %v2086
        %v2088 = vpop.f32.mrf.mxu0
        %v2089 = vpop.f32.mrf.mxu0
        %v2090 = vadd.f32 %v1704, %v2089
        %v2091 = vpop.f32.mrf.mxu0
        %2092 = vdwg.mxu0
        %s2093 = scalar_lea.vmem [#allocation2], 16
        %v2094 = vld [vmem:[%s2093] sm:$0xf]
        %v2095 = vld [vmem:[%s2093 + $0x4] sm:$0xf]
        %v2096 = vld [vmem:[%s2093 + $0x8] sm:$0xf]
        %v2097 = vld [vmem:[%s2093 + $0xc] sm:$0xf]
        %v2098 = vld [vmem:[%s2093 + $0x10] sm:$0xf]
        %v2099 = vld [vmem:[%s2093 + $0x14] sm:$0xf]
        %v2100 = vld [vmem:[%s2093 + $0x18] sm:$0xf]
        %v2101 = vld [vmem:[%s2093 + $0x1c] sm:$0xf]
        %v2102 = vld [vmem:[%s2093 + $0x20] sm:$0xf]
        %v2103 = vld [vmem:[%s2093 + $0x24] sm:$0xf]
        %v2104 = vld [vmem:[%s2093 + $0x28] sm:$0xf]
        %v2105 = vld [vmem:[%s2093 + $0x2c] sm:$0xf]
        %v2106 = vld [vmem:[%s2093 + $0x30] sm:$0xf]
        %v2107 = vld [vmem:[%s2093 + $0x34] sm:$0xf]
        %v2108 = vld [vmem:[%s2093 + $0x38] sm:$0xf]
        %v2109 = vld [vmem:[%s2093 + $0x3c] sm:$0xf]
        %s2110 = scalar_lea.vmem [#allocation11], 384
        %v2111 = vld [vmem:[%s2110] sm:$0xff]
        %v2112 = vld [vmem:[%s2110 + $0x8] sm:$0xf]
        %v2113 = vld [vmem:[%s2110 + $0xc] sm:$0xff]
        %v2114 = vld [vmem:[%s2110 + $0x14] sm:$0xf]
        %v2115 = vld [vmem:[%s2110 + $0x18] sm:$0xff]
        %v2116 = vld [vmem:[%s2110 + $0x20] sm:$0xf]
        %v2117 = vld [vmem:[%s2110 + $0x24] sm:$0xff]
        %v2118 = vld [vmem:[%s2110 + $0x2c] sm:$0xf]
        %v2119 = vld [vmem:[%s2110 + $0x30] sm:$0xff]
        %v2120 = vld [vmem:[%s2110 + $0x38] sm:$0xf]
        %v2121 = vld [vmem:[%s2110 + $0x3c] sm:$0xff]
        %v2122 = vld [vmem:[%s2110 + $0x44] sm:$0xf]
        %v2123 = vld [vmem:[%s2110 + $0x48] sm:$0xff]
        %v2124 = vld [vmem:[%s2110 + $0x50] sm:$0xf]
        %v2125 = vld [vmem:[%s2110 + $0x54] sm:$0xff]
        %v2126 = vld [vmem:[%s2110 + $0x5c] sm:$0xf]
        %v2127 = vld [vmem:[%s2110 + $0x60] sm:$0xff]
        %v2128 = vld [vmem:[%s2110 + $0x68] sm:$0xf]
        %v2129 = vld [vmem:[%s2110 + $0x6c] sm:$0xff]
        %v2130 = vld [vmem:[%s2110 + $0x74] sm:$0xf]
        %v2131 = vld [vmem:[%s2110 + $0x78] sm:$0xff]
        %v2132 = vld [vmem:[%s2110 + $0x80] sm:$0xf]
        %v2133 = vld [vmem:[%s2110 + $0x84] sm:$0xff]
        %v2134 = vld [vmem:[%s2110 + $0x8c] sm:$0xf]
        %v2135 = vld [vmem:[%s2110 + $0x90] sm:$0xff]
        %v2136 = vld [vmem:[%s2110 + $0x98] sm:$0xf]
        %v2137 = vld [vmem:[%s2110 + $0x9c] sm:$0xff]
        %v2138 = vld [vmem:[%s2110 + $0xa4] sm:$0xf]
        %v2139 = vld [vmem:[%s2110 + $0xa8] sm:$0xff]
        %v2140 = vld [vmem:[%s2110 + $0xb0] sm:$0xf]
        %v2141 = vld [vmem:[%s2110 + $0xb4] sm:$0xff]
        %v2142 = vld [vmem:[%s2110 + $0xbc] sm:$0xf]
        %v2159 = vunpack.c.l.b16 %v2094
        %v2160 = vunpack.c.l.b16 %v2095
        %v2161 = vunpack.c.l.b16 %v2096
        %v2162 = vunpack.c.l.b16 %v2097
        %v2163 = vunpack.c.l.b16 %v2098
        %v2164 = vunpack.c.l.b16 %v2099
        %v2165 = vunpack.c.l.b16 %v2100
        %v2166 = vunpack.c.l.b16 %v2101
        %v2167 = vunpack.c.l.b16 %v2102
        %v2168 = vunpack.c.l.b16 %v2103
        %v2169 = vunpack.c.l.b16 %v2104
        %v2170 = vunpack.c.l.b16 %v2105
        %v2171 = vunpack.c.l.b16 %v2106
        %v2172 = vunpack.c.l.b16 %v2107
        %v2173 = vunpack.c.l.b16 %v2108
        %v2174 = vunpack.c.l.b16 %v2109
        %v2175 = vpack.c.b16 %v2160, %v2159
        %v2176 = vpack.c.b16 %v2162, %v2161
        %v2177 = vpack.c.b16 %v2164, %v2163
        %v2178 = vpack.c.b16 %v2166, %v2165
        %v2179 = vpack.c.b16 %v2168, %v2167
        %v2180 = vpack.c.b16 %v2170, %v2169
        %v2181 = vpack.c.b16 %v2172, %v2171
        %v2182 = vpack.c.b16 %v2174, %v2173
        %v2223 = vunpack.c.l.b16 %v2111
        %v2224 = vunpack.c.h.b16 %v2111
        %v2225 = vunpack.c.l.b16 %v2112
        %v2226 = vunpack.c.l.b16 %v2113
        %v2227 = vunpack.c.h.b16 %v2113
        %v2228 = vunpack.c.l.b16 %v2114
        %v2229 = vunpack.c.l.b16 %v2115
        %v2230 = vunpack.c.h.b16 %v2115
        %v2231 = vunpack.c.l.b16 %v2116
        %v2232 = vunpack.c.l.b16 %v2117
        %v2233 = vunpack.c.h.b16 %v2117
        %v2234 = vunpack.c.l.b16 %v2118
        %v2235 = vunpack.c.l.b16 %v2119
        %v2236 = vunpack.c.h.b16 %v2119
        %v2237 = vunpack.c.l.b16 %v2120
        %v2238 = vunpack.c.l.b16 %v2121
        %v2239 = vunpack.c.h.b16 %v2121
        %v2240 = vunpack.c.l.b16 %v2122
        %v2241 = vunpack.c.l.b16 %v2123
        %v2242 = vunpack.c.h.b16 %v2123
        %v2243 = vunpack.c.l.b16 %v2124
        %v2244 = vunpack.c.l.b16 %v2125
        %v2245 = vunpack.c.h.b16 %v2125
        %v2246 = vunpack.c.l.b16 %v2126
        %v2247 = vunpack.c.l.b16 %v2127
        %v2248 = vunpack.c.h.b16 %v2127
        %v2249 = vunpack.c.l.b16 %v2128
        %v2250 = vunpack.c.l.b16 %v2129
        %v2251 = vunpack.c.h.b16 %v2129
        %v2252 = vunpack.c.l.b16 %v2130
        %v2253 = vunpack.c.l.b16 %v2131
        %v2254 = vunpack.c.h.b16 %v2131
        %v2255 = vunpack.c.l.b16 %v2132
        %v2256 = vunpack.c.l.b16 %v2133
        %v2257 = vunpack.c.h.b16 %v2133
        %v2258 = vunpack.c.l.b16 %v2134
        %v2259 = vunpack.c.l.b16 %v2135
        %v2260 = vunpack.c.h.b16 %v2135
        %v2261 = vunpack.c.l.b16 %v2136
        %v2262 = vunpack.c.l.b16 %v2137
        %v2263 = vunpack.c.h.b16 %v2137
        %v2264 = vunpack.c.l.b16 %v2138
        %v2265 = vunpack.c.l.b16 %v2139
        %v2266 = vunpack.c.h.b16 %v2139
        %v2267 = vunpack.c.l.b16 %v2140
        %v2268 = vunpack.c.l.b16 %v2141
        %v2269 = vunpack.c.h.b16 %v2141
        %v2270 = vunpack.c.l.b16 %v2142
        %v2271 = vpack.c.b16 %v2226, %v2223
        %v2272 = vpack.c.b16 %v2227, %v2224
        %v2273 = vpack.c.b16 %v2228, %v2225
        %v2274 = vpack.c.b16 %v2232, %v2229
        %v2275 = vpack.c.b16 %v2233, %v2230
        %v2276 = vpack.c.b16 %v2234, %v2231
        %v2277 = vpack.c.b16 %v2238, %v2235
        %v2278 = vpack.c.b16 %v2239, %v2236
        %v2279 = vpack.c.b16 %v2240, %v2237
        %v2280 = vpack.c.b16 %v2244, %v2241
        %v2281 = vpack.c.b16 %v2245, %v2242
        %v2282 = vpack.c.b16 %v2246, %v2243
        %v2283 = vpack.c.b16 %v2250, %v2247
        %v2284 = vpack.c.b16 %v2251, %v2248
        %v2285 = vpack.c.b16 %v2252, %v2249
        %v2286 = vpack.c.b16 %v2256, %v2253
        %v2287 = vpack.c.b16 %v2257, %v2254
        %v2288 = vpack.c.b16 %v2258, %v2255
        %v2289 = vpack.c.b16 %v2262, %v2259
        %v2290 = vpack.c.b16 %v2263, %v2260
        %v2291 = vpack.c.b16 %v2264, %v2261
        %v2292 = vpack.c.b16 %v2268, %v2265
        %v2293 = vpack.c.b16 %v2269, %v2266
        %v2294 = vpack.c.b16 %v2270, %v2267
        %2319 = vmatprep.subr.bf16.mxu0 %v2293
        %2320 = vmatpush1.bf16.msra.mxu0 %v2292
        %2321 = vmatprep.subr.bf16.mxu0 %v2290
        %2322 = vmatpush1.bf16.msra.mxu0 %v2289
        %2323 = vmatprep.subr.bf16.mxu0 %v2287
        %2324 = vmatpush1.bf16.msra.mxu0 %v2286
        %2325 = vmatprep.subr.bf16.mxu0 %v2284
        %2326 = vmatpush1.bf16.msra.mxu0 %v2283
        %2327 = vmatprep.subr.bf16.mxu0 %v2281
        %2328 = vmatpush1.bf16.msra.mxu0 %v2280
        %2329 = vmatprep.subr.bf16.mxu0 %v2278
        %2330 = vmatpush1.bf16.msra.mxu0 %v2277
        %2331 = vmatprep.subr.bf16.mxu0 %v2275
        %2332 = vmatpush1.bf16.msra.mxu0 %v2274
        %2333 = vmatprep.subr.bf16.mxu0 %v2272
        %2334 = vmatpush1.bf16.msra.mxu0 %v2271
        %2335 = vmatprep.subr.bf16.mxu0 0
        %2336 = vmatpush2.bf16.msra.mxu0 0
        %2337 = vmatprep.subr.bf16.mxu0 0
        %2338 = vmatpush2.bf16.msra.mxu0 0
        %2339 = vmatprep.subr.bf16.mxu0 0
        %2340 = vmatpush2.bf16.msra.mxu0 0
        %2341 = vmatprep.subr.bf16.mxu0 0
        %2342 = vmatpush2.bf16.msra.mxu0 0
        %2343 = vmatprep.subr.bf16.mxu0 0
        %2344 = vmatpush2.bf16.msra.mxu0 0
        %2345 = vmatprep.subr.bf16.mxu0 0
        %2346 = vmatpush2.bf16.msra.mxu0 0
        %2347 = vmatprep.subr.bf16.mxu0 0
        %2348 = vmatpush2.bf16.msra.mxu0 0
        %2349 = vmatprep.subr.bf16.mxu0 0
        %2350 = vmatpush2.bf16.msra.mxu0 0
        %2351 = vmatprep.mubr.bf16.mxu0 0
        %2352 = vmatmul.mubr.bf16.gmra.mxu0 %v2175
        %v2353 = vpop.f32.mrf.mxu0
        %v2354 = vadd.f32 0.0, %v2353
        %v2355 = vpop.f32.mrf.mxu0
        %v2356 = vadd.f32 0.0, %v2355
        %v2357 = vpop.f32.mrf.mxu0
        %v2358 = vadd.f32 0.0, %v2357
        %v2359 = vpop.f32.mrf.mxu0
        %v2360 = vadd.f32 0.0, %v2359
        %2361 = vmatprep.mubr.bf16.mxu0 0
        %2362 = vmatmul.mubr.bf16.gmra.mxu0 %v2176
        %v2363 = vpop.f32.mrf.mxu0
        %v2364 = vadd.f32 0.0, %v2363
        %v2365 = vpop.f32.mrf.mxu0
        %v2366 = vadd.f32 0.0, %v2365
        %v2367 = vpop.f32.mrf.mxu0
        %v2368 = vadd.f32 0.0, %v2367
        %v2369 = vpop.f32.mrf.mxu0
        %v2370 = vadd.f32 0.0, %v2369
        %2371 = vmatprep.mubr.bf16.mxu0 0
        %2372 = vmatmul.mubr.bf16.gmra.mxu0 %v2177
        %v2373 = vpop.f32.mrf.mxu0
        %v2374 = vadd.f32 0.0, %v2373
        %v2375 = vpop.f32.mrf.mxu0
        %v2376 = vadd.f32 0.0, %v2375
        %v2377 = vpop.f32.mrf.mxu0
        %v2378 = vadd.f32 0.0, %v2377
        %v2379 = vpop.f32.mrf.mxu0
        %v2380 = vadd.f32 0.0, %v2379
        %2381 = vmatprep.mubr.bf16.mxu0 0
        %2382 = vmatmul.mubr.bf16.gmra.mxu0 %v2178
        %v2383 = vpop.f32.mrf.mxu0
        %v2384 = vadd.f32 0.0, %v2383
        %v2385 = vpop.f32.mrf.mxu0
        %v2386 = vadd.f32 0.0, %v2385
        %v2387 = vpop.f32.mrf.mxu0
        %v2388 = vadd.f32 0.0, %v2387
        %v2389 = vpop.f32.mrf.mxu0
        %v2390 = vadd.f32 0.0, %v2389
        %2391 = vmatprep.mubr.bf16.mxu0 0
        %2392 = vmatmul.mubr.bf16.gmra.mxu0 %v2179
        %v2393 = vpop.f32.mrf.mxu0
        %v2394 = vadd.f32 0.0, %v2393
        %v2395 = vpop.f32.mrf.mxu0
        %v2396 = vadd.f32 0.0, %v2395
        %v2397 = vpop.f32.mrf.mxu0
        %v2398 = vadd.f32 0.0, %v2397
        %v2399 = vpop.f32.mrf.mxu0
        %v2400 = vadd.f32 0.0, %v2399
        %2401 = vmatprep.mubr.bf16.mxu0 0
        %2402 = vmatmul.mubr.bf16.gmra.mxu0 %v2180
        %v2403 = vpop.f32.mrf.mxu0
        %v2404 = vadd.f32 0.0, %v2403
        %v2405 = vpop.f32.mrf.mxu0
        %v2406 = vadd.f32 0.0, %v2405
        %v2407 = vpop.f32.mrf.mxu0
        %v2408 = vadd.f32 0.0, %v2407
        %v2409 = vpop.f32.mrf.mxu0
        %v2410 = vadd.f32 0.0, %v2409
        %2411 = vmatprep.mubr.bf16.mxu0 0
        %2412 = vmatmul.mubr.bf16.gmra.mxu0 %v2181
        %v2413 = vpop.f32.mrf.mxu0
        %v2414 = vadd.f32 0.0, %v2413
        %v2415 = vpop.f32.mrf.mxu0
        %v2416 = vadd.f32 0.0, %v2415
        %v2417 = vpop.f32.mrf.mxu0
        %v2418 = vadd.f32 0.0, %v2417
        %v2419 = vpop.f32.mrf.mxu0
        %v2420 = vadd.f32 0.0, %v2419
        %2421 = vmatprep.mubr.bf16.mxu0 0
        %2422 = vmatmul.mubr.bf16.gmra.mxu0 %v2182
        %v2423 = vpop.f32.mrf.mxu0
        %v2424 = vadd.f32 0.0, %v2423
        %v2425 = vpop.f32.mrf.mxu0
        %v2426 = vadd.f32 0.0, %v2425
        %v2427 = vpop.f32.mrf.mxu0
        %v2428 = vadd.f32 0.0, %v2427
        %v2429 = vpop.f32.mrf.mxu0
        %v2430 = vadd.f32 0.0, %v2429
        %2431 = vdwg.mxu0
        %2432 = vmatprep.subr.bf16.mxu0 0
        %2433 = vmatpush1.bf16.msra.mxu0 %v2294
        %2434 = vmatprep.subr.bf16.mxu0 0
        %2435 = vmatpush1.bf16.msra.mxu0 %v2291
        %2436 = vmatprep.subr.bf16.mxu0 0
        %2437 = vmatpush1.bf16.msra.mxu0 %v2288
        %2438 = vmatprep.subr.bf16.mxu0 0
        %2439 = vmatpush1.bf16.msra.mxu0 %v2285
        %2440 = vmatprep.subr.bf16.mxu0 0
        %2441 = vmatpush1.bf16.msra.mxu0 %v2282
        %2442 = vmatprep.subr.bf16.mxu0 0
        %2443 = vmatpush1.bf16.msra.mxu0 %v2279
        %2444 = vmatprep.subr.bf16.mxu0 0
        %2445 = vmatpush1.bf16.msra.mxu0 %v2276
        %2446 = vmatprep.subr.bf16.mxu0 0
        %2447 = vmatpush1.bf16.msra.mxu0 %v2273
        %2448 = vmatprep.subr.bf16.mxu0 0
        %2449 = vmatpush2.bf16.msra.mxu0 0
        %2450 = vmatprep.subr.bf16.mxu0 0
        %2451 = vmatpush2.bf16.msra.mxu0 0
        %2452 = vmatprep.subr.bf16.mxu0 0
        %2453 = vmatpush2.bf16.msra.mxu0 0
        %2454 = vmatprep.subr.bf16.mxu0 0
        %2455 = vmatpush2.bf16.msra.mxu0 0
        %2456 = vmatprep.subr.bf16.mxu0 0
        %2457 = vmatpush2.bf16.msra.mxu0 0
        %2458 = vmatprep.subr.bf16.mxu0 0
        %2459 = vmatpush2.bf16.msra.mxu0 0
        %2460 = vmatprep.subr.bf16.mxu0 0
        %2461 = vmatpush2.bf16.msra.mxu0 0
        %2462 = vmatprep.subr.bf16.mxu0 0
        %2463 = vmatpush2.bf16.msra.mxu0 0
        %2464 = vmatprep.mubr.bf16.mxu0 0
        %2465 = vmatmul.mubr.bf16.gmra.mxu0 %v2175
        %v2466 = vpop.f32.mrf.mxu0
        %v2467 = vadd.f32 0.0, %v2466
        %v2468 = vpop.f32.mrf.mxu0
        %v2469 = vpop.f32.mrf.mxu0
        %v2470 = vadd.f32 0.0, %v2469
        %v2471 = vpop.f32.mrf.mxu0
        %2472 = vmatprep.mubr.bf16.mxu0 0
        %2473 = vmatmul.mubr.bf16.gmra.mxu0 %v2176
        %v2474 = vpop.f32.mrf.mxu0
        %v2475 = vadd.f32 0.0, %v2474
        %v2476 = vpop.f32.mrf.mxu0
        %v2477 = vpop.f32.mrf.mxu0
        %v2478 = vadd.f32 0.0, %v2477
        %v2479 = vpop.f32.mrf.mxu0
        %2480 = vmatprep.mubr.bf16.mxu0 0
        %2481 = vmatmul.mubr.bf16.gmra.mxu0 %v2177
        %v2482 = vpop.f32.mrf.mxu0
        %v2483 = vadd.f32 0.0, %v2482
        %v2484 = vpop.f32.mrf.mxu0
        %v2485 = vpop.f32.mrf.mxu0
        %v2486 = vadd.f32 0.0, %v2485
        %v2487 = vpop.f32.mrf.mxu0
        %2488 = vmatprep.mubr.bf16.mxu0 0
        %2489 = vmatmul.mubr.bf16.gmra.mxu0 %v2178
        %v2490 = vpop.f32.mrf.mxu0
        %v2491 = vadd.f32 0.0, %v2490
        %v2492 = vpop.f32.mrf.mxu0
        %v2493 = vpop.f32.mrf.mxu0
        %v2494 = vadd.f32 0.0, %v2493
        %v2495 = vpop.f32.mrf.mxu0
        %2496 = vmatprep.mubr.bf16.mxu0 0
        %2497 = vmatmul.mubr.bf16.gmra.mxu0 %v2179
        %v2498 = vpop.f32.mrf.mxu0
        %v2499 = vadd.f32 0.0, %v2498
        %v2500 = vpop.f32.mrf.mxu0
        %v2501 = vpop.f32.mrf.mxu0
        %v2502 = vadd.f32 0.0, %v2501
        %v2503 = vpop.f32.mrf.mxu0
        %2504 = vmatprep.mubr.bf16.mxu0 0
        %2505 = vmatmul.mubr.bf16.gmra.mxu0 %v2180
        %v2506 = vpop.f32.mrf.mxu0
        %v2507 = vadd.f32 0.0, %v2506
        %v2508 = vpop.f32.mrf.mxu0
        %v2509 = vpop.f32.mrf.mxu0
        %v2510 = vadd.f32 0.0, %v2509
        %v2511 = vpop.f32.mrf.mxu0
        %2512 = vmatprep.mubr.bf16.mxu0 0
        %2513 = vmatmul.mubr.bf16.gmra.mxu0 %v2181
        %v2514 = vpop.f32.mrf.mxu0
        %v2515 = vadd.f32 0.0, %v2514
        %v2516 = vpop.f32.mrf.mxu0
        %v2517 = vpop.f32.mrf.mxu0
        %v2518 = vadd.f32 0.0, %v2517
        %v2519 = vpop.f32.mrf.mxu0
        %2520 = vmatprep.mubr.bf16.mxu0 0
        %2521 = vmatmul.mubr.bf16.gmra.mxu0 %v2182
        %v2522 = vpop.f32.mrf.mxu0
        %v2523 = vadd.f32 0.0, %v2522
        %v2524 = vpop.f32.mrf.mxu0
        %v2525 = vpop.f32.mrf.mxu0
        %v2526 = vadd.f32 0.0, %v2525
        %v2527 = vpop.f32.mrf.mxu0
        %2528 = vdwg.mxu0
        %v2529 = vadd.f32 %v1918, %v2354
        %v2530 = vadd.f32 %v1920, %v2356
        %v2531 = vadd.f32 %v2031, %v2467
        %v2532 = vadd.f32 %v1922, %v2358
        %v2533 = vadd.f32 %v1924, %v2360
        %v2534 = vadd.f32 %v2034, %v2470
        %v2535 = vadd.f32 %v1928, %v2364
        %v2536 = vadd.f32 %v1930, %v2366
        %v2537 = vadd.f32 %v2039, %v2475
        %v2538 = vadd.f32 %v1932, %v2368
        %v2539 = vadd.f32 %v1934, %v2370
        %v2540 = vadd.f32 %v2042, %v2478
        %v2541 = vadd.f32 %v1938, %v2374
        %v2542 = vadd.f32 %v1940, %v2376
        %v2543 = vadd.f32 %v2047, %v2483
        %v2544 = vadd.f32 %v1942, %v2378
        %v2545 = vadd.f32 %v1944, %v2380
        %v2546 = vadd.f32 %v2050, %v2486
        %v2547 = vadd.f32 %v1948, %v2384
        %v2548 = vadd.f32 %v1950, %v2386
        %v2549 = vadd.f32 %v2055, %v2491
        %v2550 = vadd.f32 %v1952, %v2388
        %v2551 = vadd.f32 %v1954, %v2390
        %v2552 = vadd.f32 %v2058, %v2494
        %v2553 = vadd.f32 %v1958, %v2394
        %v2554 = vadd.f32 %v1960, %v2396
        %v2555 = vadd.f32 %v2063, %v2499
        %v2556 = vadd.f32 %v1962, %v2398
        %v2557 = vadd.f32 %v1964, %v2400
        %v2558 = vadd.f32 %v2066, %v2502
        %v2559 = vadd.f32 %v1968, %v2404
        %v2560 = vadd.f32 %v1970, %v2406
        %v2561 = vadd.f32 %v2071, %v2507
        %v2562 = vadd.f32 %v1972, %v2408
        %v2563 = vadd.f32 %v1974, %v2410
        %v2564 = vadd.f32 %v2074, %v2510
        %v2565 = vadd.f32 %v1978, %v2414
        %v2566 = vadd.f32 %v1980, %v2416
        %v2567 = vadd.f32 %v2079, %v2515
        %v2568 = vadd.f32 %v1982, %v2418
        %v2569 = vadd.f32 %v1984, %v2420
        %v2570 = vadd.f32 %v2082, %v2518
        %v2571 = vadd.f32 %v1988, %v2424
        %v2572 = vadd.f32 %v1990, %v2426
        %v2573 = vadd.f32 %v2087, %v2523
        %v2574 = vadd.f32 %v1992, %v2428
        %v2575 = vadd.f32 %v1994, %v2430
        %v2576 = vadd.f32 %v2090, %v2526
        %v2577 = vrot.slane %v2530, 7
        %v2578 = vrot.slane %v2533, 7
        %v2579 = vrot.slane %v2536, 7
        %v2580 = vrot.slane %v2539, 7
        %v2581 = vrot.slane %v2542, 7
        %v2582 = vrot.slane %v2545, 7
        %v2583 = vrot.slane %v2548, 7
        %v2584 = vrot.slane %v2551, 7
        %v2585 = vrot.slane %v2554, 7
        %v2586 = vrot.slane %v2557, 7
        %v2587 = vrot.slane %v2560, 7
        %v2588 = vrot.slane %v2563, 7
        %v2589 = vrot.slane %v2566, 7
        %v2590 = vrot.slane %v2569, 7
        %v2591 = vrot.slane %v2572, 7
        %v2592 = vrot.slane %v2575, 7
        %vm2593 = vcmp.lt.s32.totalorder %v1160, 1
        %v2594 = vsel %vm2593, %v2591, %v2592
        %v2595 = vsel %vm2593, %v2590, %v2591
        %v2596 = vsel %vm2593, %v2589, %v2590
        %v2597 = vsel %vm2593, %v2588, %v2589
        %v2598 = vsel %vm2593, %v2587, %v2588
        %v2599 = vsel %vm2593, %v2586, %v2587
        %v2600 = vsel %vm2593, %v2585, %v2586
        %v2601 = vsel %vm2593, %v2584, %v2585
        %v2602 = vsel %vm2593, %v2583, %v2584
        %v2603 = vsel %vm2593, %v2582, %v2583
        %v2604 = vsel %vm2593, %v2581, %v2582
        %v2605 = vsel %vm2593, %v2580, %v2581
        %v2606 = vsel %vm2593, %v2579, %v2580
        %v2607 = vsel %vm2593, %v2578, %v2579
        %v2608 = vsel %vm2593, %v2577, %v2578
        %v2609 = vsel %vm2593, %v2592, %v2577
        %v2610 = vsel %vm1192, 1, 0
        %v2611 = vsel %vm1193, 1, 0
        %v2612 = vsel %vm1194, 1, 0
        %v2613 = vsel %vm1195, 1, 0
        %v2614 = vsel %vm1196, 1, 0
        %v2615 = vsel %vm1197, 1, 0
        %v2616 = vsel %vm1198, 1, 0
        %v2617 = vsel %vm1199, 1, 0
        %v2618 = vsel %vm1200, 1, 0
        %v2619 = vsel %vm1201, 1, 0
        %v2620 = vsel %vm1202, 1, 0
        %v2621 = vsel %vm1203, 1, 0
        %v2622 = vsel %vm1204, 1, 0
        %v2623 = vsel %vm1205, 1, 0
        %v2624 = vsel %vm1206, 1, 0
        %v2625 = vsel %vm1207, 1, 0
        %vm2626 = vcmp.eq.s32.totalorder %v2610, 1
        %vm2627 = vcmp.eq.s32.totalorder %v2611, 1
        %vm2628 = vcmp.eq.s32.totalorder %v2612, 1
        %vm2629 = vcmp.eq.s32.totalorder %v2613, 1
        %vm2630 = vcmp.eq.s32.totalorder %v2614, 1
        %vm2631 = vcmp.eq.s32.totalorder %v2615, 1
        %vm2632 = vcmp.eq.s32.totalorder %v2616, 1
        %vm2633 = vcmp.eq.s32.totalorder %v2617, 1
        %vm2634 = vcmp.eq.s32.totalorder %v2618, 1
        %vm2635 = vcmp.eq.s32.totalorder %v2619, 1
        %vm2636 = vcmp.eq.s32.totalorder %v2620, 1
        %vm2637 = vcmp.eq.s32.totalorder %v2621, 1
        %vm2638 = vcmp.eq.s32.totalorder %v2622, 1
        %vm2639 = vcmp.eq.s32.totalorder %v2623, 1
        %vm2640 = vcmp.eq.s32.totalorder %v2624, 1
        %vm2641 = vcmp.eq.s32.totalorder %v2625, 1
        %v2642 = vsel %vm2626, %v2609, 0.0
        %v2643 = vsel %vm2627, %v2608, 0.0
        %v2644 = vsel %vm2628, %v2607, 0.0
        %v2645 = vsel %vm2629, %v2606, 0.0
        %v2646 = vsel %vm2630, %v2605, 0.0
        %v2647 = vsel %vm2631, %v2604, 0.0
        %v2648 = vsel %vm2632, %v2603, 0.0
        %v2649 = vsel %vm2633, %v2602, 0.0
        %v2650 = vsel %vm2634, %v2601, 0.0
        %v2651 = vsel %vm2635, %v2600, 0.0
        %v2652 = vsel %vm2636, %v2599, 0.0
        %v2653 = vsel %vm2637, %v2598, 0.0
        %v2654 = vsel %vm2638, %v2597, 0.0
        %v2655 = vsel %vm2639, %v2596, 0.0
        %v2656 = vsel %vm2640, %v2595, 0.0
        %v2657 = vsel %vm2641, %v2594, 0.0
        %v2658 = vadd.f32 %v2529, %v2642
        %v2659 = vadd.f32 %v2532, %v2643
        %v2660 = vadd.f32 %v2535, %v2644
        %v2661 = vadd.f32 %v2538, %v2645
        %v2662 = vadd.f32 %v2541, %v2646
        %v2663 = vadd.f32 %v2544, %v2647
        %v2664 = vadd.f32 %v2547, %v2648
        %v2665 = vadd.f32 %v2550, %v2649
        %v2666 = vadd.f32 %v2553, %v2650
        %v2667 = vadd.f32 %v2556, %v2651
        %v2668 = vadd.f32 %v2559, %v2652
        %v2669 = vadd.f32 %v2562, %v2653
        %v2670 = vadd.f32 %v2565, %v2654
        %v2671 = vadd.f32 %v2568, %v2655
        %v2672 = vadd.f32 %v2571, %v2656
        %v2673 = vadd.f32 %v2574, %v2657
        %v2674 = vrot.slane %v2531, 1
        %v2675 = vrot.slane %v2534, 1
        %v2676 = vrot.slane %v2537, 1
        %v2677 = vrot.slane %v2540, 1
        %v2678 = vrot.slane %v2543, 1
        %v2679 = vrot.slane %v2546, 1
        %v2680 = vrot.slane %v2549, 1
        %v2681 = vrot.slane %v2552, 1
        %v2682 = vrot.slane %v2555, 1
        %v2683 = vrot.slane %v2558, 1
        %v2684 = vrot.slane %v2561, 1
        %v2685 = vrot.slane %v2564, 1
        %v2686 = vrot.slane %v2567, 1
        %v2687 = vrot.slane %v2570, 1
        %v2688 = vrot.slane %v2573, 1
        %v2689 = vrot.slane %v2576, 1
        %vm2690 = vcmp.lt.s32.totalorder %v1160, 7
        %v2691 = vsel %vm2690, %v2688, %v2689
        %v2692 = vsel %vm2690, %v2687, %v2688
        %v2693 = vsel %vm2690, %v2686, %v2687
        %v2694 = vsel %vm2690, %v2685, %v2686
        %v2695 = vsel %vm2690, %v2684, %v2685
        %v2696 = vsel %vm2690, %v2683, %v2684
        %v2697 = vsel %vm2690, %v2682, %v2683
        %v2698 = vsel %vm2690, %v2681, %v2682
        %v2699 = vsel %vm2690, %v2680, %v2681
        %v2700 = vsel %vm2690, %v2679, %v2680
        %v2701 = vsel %vm2690, %v2678, %v2679
        %v2702 = vsel %vm2690, %v2677, %v2678
        %v2703 = vsel %vm2690, %v2676, %v2677
        %v2704 = vsel %vm2690, %v2675, %v2676
        %v2705 = vsel %vm2690, %v2674, %v2675
        %v2706 = vsel %vm2690, %v2689, %v2674
        %v2707 = vsel %vm1208, 1, 0
        %v2708 = vsel %vm1209, 1, 0
        %v2709 = vsel %vm1210, 1, 0
        %v2710 = vsel %vm1211, 1, 0
        %v2711 = vsel %vm1212, 1, 0
        %v2712 = vsel %vm1213, 1, 0
        %v2713 = vsel %vm1214, 1, 0
        %v2714 = vsel %vm1215, 1, 0
        %v2715 = vsel %vm1216, 1, 0
        %v2716 = vsel %vm1217, 1, 0
        %v2717 = vsel %vm1218, 1, 0
        %v2718 = vsel %vm1219, 1, 0
        %v2719 = vsel %vm1220, 1, 0
        %v2720 = vsel %vm1221, 1, 0
        %v2721 = vsel %vm1222, 1, 0
        %v2722 = vsel %vm1223, 1, 0
        %vm2723 = vcmp.eq.s32.totalorder %v2707, 1
        %vm2724 = vcmp.eq.s32.totalorder %v2708, 1
        %vm2725 = vcmp.eq.s32.totalorder %v2709, 1
        %vm2726 = vcmp.eq.s32.totalorder %v2710, 1
        %vm2727 = vcmp.eq.s32.totalorder %v2711, 1
        %vm2728 = vcmp.eq.s32.totalorder %v2712, 1
        %vm2729 = vcmp.eq.s32.totalorder %v2713, 1
        %vm2730 = vcmp.eq.s32.totalorder %v2714, 1
        %vm2731 = vcmp.eq.s32.totalorder %v2715, 1
        %vm2732 = vcmp.eq.s32.totalorder %v2716, 1
        %vm2733 = vcmp.eq.s32.totalorder %v2717, 1
        %vm2734 = vcmp.eq.s32.totalorder %v2718, 1
        %vm2735 = vcmp.eq.s32.totalorder %v2719, 1
        %vm2736 = vcmp.eq.s32.totalorder %v2720, 1
        %vm2737 = vcmp.eq.s32.totalorder %v2721, 1
        %vm2738 = vcmp.eq.s32.totalorder %v2722, 1
        %v2739 = vsel %vm2723, %v2705, 0.0
        %v2740 = vsel %vm2724, %v2704, 0.0
        %v2741 = vsel %vm2725, %v2703, 0.0
        %v2742 = vsel %vm2726, %v2702, 0.0
        %v2743 = vsel %vm2727, %v2701, 0.0
        %v2744 = vsel %vm2728, %v2700, 0.0
        %v2745 = vsel %vm2729, %v2699, 0.0
        %v2746 = vsel %vm2730, %v2698, 0.0
        %v2747 = vsel %vm2731, %v2697, 0.0
        %v2748 = vsel %vm2732, %v2696, 0.0
        %v2749 = vsel %vm2733, %v2695, 0.0
        %v2750 = vsel %vm2734, %v2694, 0.0
        %v2751 = vsel %vm2735, %v2693, 0.0
        %v2752 = vsel %vm2736, %v2692, 0.0
        %v2753 = vsel %vm2737, %v2691, 0.0
        %v2754 = vsel %vm2738, %v2706, 0.0
        %v2755 = vadd.f32 %v2658, %v2739
        %v2756 = vadd.f32 %v2659, %v2740
        %v2757 = vadd.f32 %v2660, %v2741
        %v2758 = vadd.f32 %v2661, %v2742
        %v2759 = vadd.f32 %v2662, %v2743
        %v2760 = vadd.f32 %v2663, %v2744
        %v2761 = vadd.f32 %v2664, %v2745
        %v2762 = vadd.f32 %v2665, %v2746
        %v2763 = vadd.f32 %v2666, %v2747
        %v2764 = vadd.f32 %v2667, %v2748
        %v2765 = vadd.f32 %v2668, %v2749
        %v2766 = vadd.f32 %v2669, %v2750
        %v2767 = vadd.f32 %v2670, %v2751
        %v2768 = vadd.f32 %v2671, %v2752
        %v2769 = vadd.f32 %v2672, %v2753
        %v2770 = vadd.f32 %v2673, %v2754
        %v2772 = vlaneseq
        %v2773 = vshrl.u32 %v2772, 7
        %v2774 = vsub.s32 0, %v2773
        %v2775 = vrot.slane %v521, %v2774
        %v2777 = vmul.f32 %v2755, %v2775
        %v2778 = vmul.f32 %v2756, %v2775
        %v2779 = vmul.f32 %v2757, %v2775
        %v2780 = vmul.f32 %v2758, %v2775
        %v2781 = vmul.f32 %v2759, %v2775
        %v2782 = vmul.f32 %v2760, %v2775
        %v2783 = vmul.f32 %v2761, %v2775
        %v2784 = vmul.f32 %v2762, %v2775
        %v2785 = vmul.f32 %v2763, %v2775
        %v2786 = vmul.f32 %v2764, %v2775
        %v2787 = vmul.f32 %v2765, %v2775
        %v2788 = vmul.f32 %v2766, %v2775
        %v2789 = vmul.f32 %v2767, %v2775
        %v2790 = vmul.f32 %v2768, %v2775
        %v2791 = vmul.f32 %v2769, %v2775
        %v2792 = vmul.f32 %v2770, %v2775
        %v2794 = vlaneseq
        %v2795 = vshrl.u32 %v2794, 7
        %v2796 = vsub.s32 0, %v2795
        %v2797 = vrot.slane %v522, %v2796
        %v2799 = vadd.f32 %v2777, %v2797
        %v2800 = vadd.f32 %v2778, %v2797
        %v2801 = vadd.f32 %v2779, %v2797
        %v2802 = vadd.f32 %v2780, %v2797
        %v2803 = vadd.f32 %v2781, %v2797
        %v2804 = vadd.f32 %v2782, %v2797
        %v2805 = vadd.f32 %v2783, %v2797
        %v2806 = vadd.f32 %v2784, %v2797
        %v2807 = vadd.f32 %v2785, %v2797
        %v2808 = vadd.f32 %v2786, %v2797
        %v2809 = vadd.f32 %v2787, %v2797
        %v2810 = vadd.f32 %v2788, %v2797
        %v2811 = vadd.f32 %v2789, %v2797
        %v2812 = vadd.f32 %v2790, %v2797
        %v2813 = vadd.f32 %v2791, %v2797
        %v2814 = vadd.f32 %v2792, %v2797
        %v2815 = vmax.f32 %v2799, 0.0
        %v2816 = vmax.f32 %v2800, 0.0
        %v2817 = vmax.f32 %v2801, 0.0
        %v2818 = vmax.f32 %v2802, 0.0
        %v2819 = vmax.f32 %v2803, 0.0
        %v2820 = vmax.f32 %v2804, 0.0
        %v2821 = vmax.f32 %v2805, 0.0
        %v2822 = vmax.f32 %v2806, 0.0
        %v2823 = vmax.f32 %v2807, 0.0
        %v2824 = vmax.f32 %v2808, 0.0
        %v2825 = vmax.f32 %v2809, 0.0
        %v2826 = vmax.f32 %v2810, 0.0
        %v2827 = vmax.f32 %v2811, 0.0
        %v2828 = vmax.f32 %v2812, 0.0
        %v2829 = vmax.f32 %v2813, 0.0
        %v2830 = vmax.f32 %v2814, 0.0
        %v2831 = vld [vmem:[%s437] sm:$0xf]
        %v2832 = vld [vmem:[%s437 + $0x4] sm:$0xf]
        %v2833 = vld [vmem:[%s437 + $0x8] sm:$0xf]
        %v2834 = vld [vmem:[%s437 + $0xc] sm:$0xf]
        %v2835 = vld [vmem:[%s437 + $0x10] sm:$0xf]
        %v2836 = vld [vmem:[%s437 + $0x14] sm:$0xf]
        %v2837 = vld [vmem:[%s437 + $0x18] sm:$0xf]
        %v2838 = vld [vmem:[%s437 + $0x1c] sm:$0xf]
        %v2839 = vld [vmem:[%s437 + $0x20] sm:$0xf]
        %v2840 = vld [vmem:[%s437 + $0x24] sm:$0xf]
        %v2841 = vld [vmem:[%s437 + $0x28] sm:$0xf]
        %v2842 = vld [vmem:[%s437 + $0x2c] sm:$0xf]
        %v2843 = vld [vmem:[%s437 + $0x30] sm:$0xf]
        %v2844 = vld [vmem:[%s437 + $0x34] sm:$0xf]
        %v2845 = vld [vmem:[%s437 + $0x38] sm:$0xf]
        %v2846 = vld [vmem:[%s437 + $0x3c] sm:$0xf]
        %v2847 = vunpack.c.l.bf16 %v2831
        %v2848 = vunpack.c.l.bf16 %v2832
        %v2849 = vunpack.c.l.bf16 %v2833
        %v2850 = vunpack.c.l.bf16 %v2834
        %v2851 = vunpack.c.l.bf16 %v2835
        %v2852 = vunpack.c.l.bf16 %v2836
        %v2853 = vunpack.c.l.bf16 %v2837
        %v2854 = vunpack.c.l.bf16 %v2838
        %v2855 = vunpack.c.l.bf16 %v2839
        %v2856 = vunpack.c.l.bf16 %v2840
        %v2857 = vunpack.c.l.bf16 %v2841
        %v2858 = vunpack.c.l.bf16 %v2842
        %v2859 = vunpack.c.l.bf16 %v2843
        %v2860 = vunpack.c.l.bf16 %v2844
        %v2861 = vunpack.c.l.bf16 %v2845
        %v2862 = vunpack.c.l.bf16 %v2846
        %v2863 = vadd.f32 %v2847, %v2815
        %v2864 = vadd.f32 %v2848, %v2816
        %v2865 = vadd.f32 %v2849, %v2817
        %v2866 = vadd.f32 %v2850, %v2818
        %v2867 = vadd.f32 %v2851, %v2819
        %v2868 = vadd.f32 %v2852, %v2820
        %v2869 = vadd.f32 %v2853, %v2821
        %v2870 = vadd.f32 %v2854, %v2822
        %v2871 = vadd.f32 %v2855, %v2823
        %v2872 = vadd.f32 %v2856, %v2824
        %v2873 = vadd.f32 %v2857, %v2825
        %v2874 = vadd.f32 %v2858, %v2826
        %v2875 = vadd.f32 %v2859, %v2827
        %v2876 = vadd.f32 %v2860, %v2828
        %v2877 = vadd.f32 %v2861, %v2829
        %v2878 = vadd.f32 %v2862, %v2830
        %2879 = vst [vmem:[%s507] sm:$0xff] %v2863
        %2880 = vst [vmem:[%s507 + $0x8] sm:$0xff] %v2864
        %2881 = vst [vmem:[%s507 + $0x10] sm:$0xff] %v2865
        %2882 = vst [vmem:[%s507 + $0x18] sm:$0xff] %v2866
        %2883 = vst [vmem:[%s507 + $0x20] sm:$0xff] %v2867
        %2884 = vst [vmem:[%s507 + $0x28] sm:$0xff] %v2868
        %2885 = vst [vmem:[%s507 + $0x30] sm:$0xff] %v2869
        %2886 = vst [vmem:[%s507 + $0x38] sm:$0xff] %v2870
        %2887 = vst [vmem:[%s507 + $0x40] sm:$0xff] %v2871
        %2888 = vst [vmem:[%s507 + $0x48] sm:$0xff] %v2872
        %2889 = vst [vmem:[%s507 + $0x50] sm:$0xff] %v2873
        %2890 = vst [vmem:[%s507 + $0x58] sm:$0xff] %v2874
        %2891 = vst [vmem:[%s507 + $0x60] sm:$0xff] %v2875
        %2892 = vst [vmem:[%s507 + $0x68] sm:$0xff] %v2876
        %2893 = vst [vmem:[%s507 + $0x70] sm:$0xff] %v2877
        %2894 = vst [vmem:[%s507 + $0x78] sm:$0xff] %v2878
        %s2895 = sand.u32 %s278, 1
        %s2896 = scalar_lea.sflag [#allocation5], %s2895
        %s2897 = sand.u32 %s278, 1
        %s2898 = smul.addr %s2897, 128
        %s2899 = scalar_lea.vmem [#allocation12], %s2898
        // Predicated region
        $region77: #{tpu_custom_call.1} parent=55 // pred_check
          %p2900 = pneg %p288
        $region78: #{tpu_custom_call.1} parent=55 // pred_check_branch
          %2902 = sbr.rel (%p2900) target = $region80
        $region79: #{tpu_custom_call.1} parent=55 // pred_region
          %s2903 = smul.u32 8, %s35
          %s2905 = ssub.s32 2048, 2048
          %2906 = vsyncadd %s2896, %s2905
          %s2907 = smul.addr %s2903, 2
          %s2908 = smul.addr %s34, 32
          %s2909 = sadd.s32 %s2907, %s2908
          %s2910 = smul.addr %s2909, 128
          %s2911 = scalar_lea.hbm %s9, %s2910
          %s2912 = sshll.u32 %s2899, 4
          %s2913 = int_to_ptr.vmem [resolvable:$true] %s2912
          %2918 = dma.vmem_to_hbm [thread:$0]  %s2913, 2048, %s2911, %s2896, 128, 128, 8
        $region80: #{tpu_custom_call.1} parent=55 // pred_fallthru
          _
      $region56: #{tpu_custom_call.1} parent=5 // pred_fallthru
        _
      %p2919 = scmp.le.s32.totalorder 2, %s25
      // Predicated region
      $region81: #{tpu_custom_call.1} parent=5 // pred_check
        %p2920 = pneg %p2919
      $region82: #{tpu_custom_call.1} parent=5 // pred_check_branch
        %2922 = sbr.rel (%p2920) target = $region84
      $region83: #{tpu_custom_call.1} parent=5 // pred_region
        %s2923 = ssub.s32 %s25, 2
        // Predicated region
        $region85: #{tpu_custom_call.1} parent=83 // pred_check
          %p2924 = pneg %p294
        $region86: #{tpu_custom_call.1} parent=83 // pred_check_branch
          %2926 = sbr.rel (%p2924) target = $region88
        $region87: #{tpu_custom_call.1} parent=83 // pred_region
          %s2927 = sand.u32 %s279, 1
          %s2928 = scalar_lea.sflag [#allocation5], %s2927
          %s2929 = sand.u32 %s279, 1
          %s2930 = smul.addr %s2929, 128
          %s2931 = scalar_lea.vmem [#allocation12], %s2930
          %2932 = dma.done %s2928, 2048
        $region88: #{tpu_custom_call.1} parent=83 // pred_fallthru
          _
      $region84: #{tpu_custom_call.1} parent=5 // pred_fallthru
        _
    $region6: #{tpu_custom_call.1} parent=1 // loop_footer
      %s29 = sadd.s32 1, %s25
    $region7: #{tpu_custom_call.1} parent=1 // loop_footer_branch
      %24 = sbr.rel target = $region3
    $region8: #{tpu_custom_call.1} parent=1 // loop_exit
      _
    %2933 = vsyncpa [#allocation4], 1
    %s2934 = scalar_lea.sflag [#allocation4], 1
    %2935 = vsyncpa %s2934, 1
    %2936 = vsyncpa [#allocation7], 1
    %s2937 = scalar_lea.sflag [#allocation7], 1
    %2938 = vsyncpa %s2937, 1
    %2939 = vsyncpa [#allocation10], 1
    %2940 = vsyncpa [#allocation5], 1
    %s2941 = scalar_lea.sflag [#allocation5], 1
    %2942 = vsyncpa %s2941, 1

// kernel: tpu_custom_call.1
$region0: #{tpu_custom_call.1}
  #allocation0 [shape = 'u32[]', space=smem, size = 0x4, offset = 0x4, fixed_abs, tag = 'smem constant byte address 0x4 - core index']
  #allocation1 [shape = 'u32[144,128]{1,0:T(1,128)}', space=vmem, size = 0x12000, scoped, tag = 'internal scratch']
  #allocation2 [shape = 'bf16[160,128]{1,0:T(8,128)(2,1)}', space=vmem, size = 0xa000, scoped, tag = 'scratch operand']
  %s0 = inlined_call_operand.hbm [shape: bf16[2,16,16,128], index: 0, kind: input, shape index: {}]
  %s1 = inlined_call_operand.hbm [shape: bf16[2,16,16,128], index: 1, kind: input, shape index: {}]
  %s2 = inlined_call_operand.hbm [shape: bf16[2,16,16,128], index: 2, kind: input, shape index: {}]
  %s3 = inlined_call_operand.hbm [shape: bf16[128,128], index: 3, kind: input, shape index: {}]
  %s4 = inlined_call_operand.vmem [shape: f32[1,128], index: 4, kind: input, shape index: {}]
  %s5 = inlined_call_operand.vmem [shape: f32[1,128], index: 5, kind: input, shape index: {}]
  %s6 = inlined_call_operand.hbm [shape: bf16[3,128,384], index: 6, kind: input, shape index: {}]
  %s7 = inlined_call_operand.vmem [shape: f32[1,128], index: 7, kind: input, shape index: {}]
  %s8 = inlined_call_operand.vmem [shape: f32[1,128], index: 8, kind: input, shape index: {}]
  %s9 = inlined_call_operand.hbm [shape: f32[2,16,16,128], index: 9, kind: output, shape index: {}]
  %s10 = sld [smem:[#allocation0]]
  $region89: #{tpu_custom_call.1} parent=0
    _
  %s12 = ssub.s32 1, %s10
  %s13 = scalar_select 0, %s12, %s10
  $region1: #{tpu_custom_call.1} parent=0
    #allocation3 [shape = 'u8[65536]{0}', space=vmem, size = 0x10000, scoped, tag = 'input window, operand 0']
    #allocation4 [shape = 's32[2]{0}', space=sflag, size = 0x8, scoped, tag = 'scoped memory for tpu_custom_call.1']
    #allocation5 [shape = 's32[2]{0}', space=sflag, size = 0x8, scoped, tag = 'scoped memory for tpu_custom_call.1']
    #allocation6 [shape = 'u8[8192]{0}', space=vmem, size = 0x2000, scoped, tag = 'input window, operand 1']
    #allocation7 [shape = 's32[2]{0}', space=sflag, size = 0x8, scoped, tag = 'scoped memory for tpu_custom_call.1']
    #allocation8 [shape = 'u8[8192]{0}', space=vmem, size = 0x2000, scoped, tag = 'input window, operand 2']
    #allocation9 [shape = 'u8[32768]{0}', space=vmem, size = 0x8000, scoped, tag = 'input window, operand 3, single buffered']
    #allocation10 [shape = 's32[1]{0}', space=sflag, size = 0x4, scoped, tag = 'scoped memory for tpu_custom_call.1']
    #allocation11 [shape = 'u8[294912]{0}', space=vmem, size = 0x48000, scoped, tag = 'input window, operand 6, single buffered']
    #allocation12 [shape = 'u8[131072]{0}', space=vmem, size = 0x20000, scoped, tag = 'output window, operand 0']
    %14 = vsyncpa [#allocation4], 0
    %s15 = scalar_lea.sflag [#allocation4], 1
    %16 = vsyncpa %s15, 0
    %17 = vsyncpa [#allocation7], 0
    %s18 = scalar_lea.sflag [#allocation7], 1
    %19 = vsyncpa %s18, 0
    %20 = vsyncpa [#allocation10], 0
    %21 = vsyncpa [#allocation5], 0
    %s22 = scalar_lea.sflag [#allocation5], 1
    %23 = vsyncpa %s22, 0
    loop: start=0, step=1, limit=6
    $region2: #{tpu_custom_call.1} parent=1 // loop_pre_header
      _
    $region3: #{tpu_custom_call.1} parent=1 // loop_header
      %s25 = sphi 0, %s29
      %p26 = scmp.ge.s32.totalorder %s25, 6
      %s32 = sphi 0, %s44
      %s33 = sphi 0, %s40
      %s34 = sphi 0, %s32
      %s35 = sphi 0, %s33
      %s36 = sphi 0, %s34
      %s37 = sphi 0, %s35
      %s49 = sphi 0, %s51
      %s52 = sphi 0, %s49
      %s53 = sphi 0, %s52
      %s69 = sphi 0, %s53
      %s85 = sphi 0, %s87
      %s88 = sphi 0, %s85
      %s89 = sphi 0, %s88
      %s105 = sphi 0, %s89
      %s121 = sphi 0, %s123
      %s124 = sphi 0, %s121
      %s125 = sphi 0, %s124
      %s141 = sphi 0, %s125
      %s145 = sphi 0, %s145
      %s147 = sphi 0, %s145
      %s148 = sphi 0, %s147
      %s162 = sphi 0, %s148
      %s166 = sphi 0, %s166
      %s168 = sphi 0, %s166
      %s169 = sphi 0, %s168
      %s183 = sphi 0, %s169
      %s187 = sphi 0, %s187
      %s189 = sphi 0, %s187
      %s190 = sphi 0, %s189
      %s204 = sphi 0, %s190
      %s208 = sphi 0, %s208
      %s210 = sphi 0, %s208
      %s211 = sphi 0, %s210
      %s225 = sphi 0, %s211
      %s229 = sphi 0, %s229
      %s231 = sphi 0, %s229
      %s232 = sphi 0, %s231
      %s246 = sphi 0, %s232
      %s250 = sphi 0, %s250
      %s252 = sphi 0, %s250
      %s253 = sphi 0, %s252
      %s267 = sphi 0, %s253
      %s275 = sphi 0, %s277
      %s278 = sphi 0, %s275
      %s279 = sphi 0, %s278
      %s295 = sphi 0, %s279
    $region4: #{tpu_custom_call.1} parent=1 // loop_header_branch
      %28 = sbr.rel (%p26) target = $region8
    $region5: #{tpu_custom_call.1} parent=1 // loop_body
      %s30 = ssub.s32 %s25, 1
      %s31 = ssub.s32 %s25, 2
      %s38 = sadd.s32 1, %s33
      %p39 = scmp.ge.s32.totalorder %s38, 2
      %s40 = scalar_select %p39, 0, %s38
      %s41 = sadd.s32 1, %s32
      %s42 = scalar_select %p39, %s41, %s32
      %p43 = scmp.ge.s32.totalorder %s42, 2
      %s44 = scalar_select %p43, 0, %s42
      %s45 = ssub.s32 %s32, %s44
      %s46 = ssub.s32 %s33, %s40
      %s47 = sor.u32 %s45, %s46
      %p48 = scmp.eq.s32.totalorder %s47, 0
      %s50 = sadd.s32 %s49, 1
      %s51 = scalar_select %p48, %s49, %s50
      %p54 = pneg %p48
      %p55 = scmp.eq.s32.totalorder %s25, 3
      %p56 = por %p54, %p55
      %p57 = scmp.ne.s32.totalorder %s49, %s52
      %p58 = scmp.eq.s32.totalorder %s25, 0
      %p59 = por %p57, %p58
      %p60 = scmp.ne.s32.totalorder %s49, %s52
      %p61 = scmp.eq.s32.totalorder %s30, 3
      %p62 = por %p60, %p61
      %p63 = scmp.ne.s32.totalorder %s52, %s53
      %p64 = scmp.eq.s32.totalorder %s30, 0
      %p65 = por %p63, %p64
      %p66 = scmp.ne.s32.totalorder %s52, %s53
      %p67 = scmp.eq.s32.totalorder %s31, 3
      %p68 = por %p66, %p67
      %p70 = scmp.ne.s32.totalorder %s53, %s69
      %p71 = scmp.eq.s32.totalorder %s31, 0
      %p72 = por %p70, %p71
      %s73 = smul.u32 %s33, 8
      %s74 = ssub.s32 %s73, 1
      %p75 = scmp.gt.s32.totalorder %s74, 0
      %s76 = scalar_select %p75, %s74, 0
      %s77 = smul.u32 %s40, 8
      %s78 = ssub.s32 %s77, 1
      %p79 = scmp.gt.s32.totalorder %s78, 0
      %s80 = scalar_select %p79, %s78, 0
      %s81 = ssub.s32 %s32, %s44
      %s82 = ssub.s32 %s76, %s80
      %s83 = sor.u32 %s81, %s82
      %p84 = scmp.eq.s32.totalorder %s83, 0
      %s86 = sadd.s32 %s85, 1
      %s87 = scalar_select %p84, %s85, %s86
      %p90 = pneg %p84
      %p91 = scmp.eq.s32.totalorder %s25, 3
      %p92 = por %p90, %p91
      %p93 = scmp.ne.s32.totalorder %s85, %s88
      %p94 = scmp.eq.s32.totalorder %s25, 0
      %p95 = por %p93, %p94
      %p96 = scmp.ne.s32.totalorder %s85, %s88
      %p97 = scmp.eq.s32.totalorder %s30, 3
      %p98 = por %p96, %p97
      %p99 = scmp.ne.s32.totalorder %s88, %s89
      %p100 = scmp.eq.s32.totalorder %s30, 0
      %p101 = por %p99, %p100
      %p102 = scmp.ne.s32.totalorder %s88, %s89
      %p103 = scmp.eq.s32.totalorder %s31, 3
      %p104 = por %p102, %p103
      %p106 = scmp.ne.s32.totalorder %s89, %s105
      %p107 = scmp.eq.s32.totalorder %s31, 0
      %p108 = por %p106, %p107
      %s109 = smul.u32 %s33, 8
      %s110 = sadd.s32 %s109, 8
      %p111 = scmp.lt.s32.totalorder %s110, 15
      %s112 = scalar_select %p111, %s110, 15
      %s113 = smul.u32 %s40, 8
      %s114 = sadd.s32 %s113, 8
      %p115 = scmp.lt.s32.totalorder %s114, 15
      %s116 = scalar_select %p115, %s114, 15
      %s117 = ssub.s32 %s32, %s44
      %s118 = ssub.s32 %s112, %s116
      %s119 = sor.u32 %s117, %s118
      %p120 = scmp.eq.s32.totalorder %s119, 0
      %s122 = sadd.s32 %s121, 1
      %s123 = scalar_select %p120, %s121, %s122
      %p126 = pneg %p120
      %p127 = scmp.eq.s32.totalorder %s25, 3
      %p128 = por %p126, %p127
      %p129 = scmp.ne.s32.totalorder %s121, %s124
      %p130 = scmp.eq.s32.totalorder %s25, 0
      %p131 = por %p129, %p130
      %p132 = scmp.ne.s32.totalorder %s121, %s124
      %p133 = scmp.eq.s32.totalorder %s30, 3
      %p134 = por %p132, %p133
      %p135 = scmp.ne.s32.totalorder %s124, %s125
      %p136 = scmp.eq.s32.totalorder %s30, 0
      %p137 = por %p135, %p136
      %p138 = scmp.ne.s32.totalorder %s124, %s125
      %p139 = scmp.eq.s32.totalorder %s31, 3
      %p140 = por %p138, %p139
      %p142 = scmp.ne.s32.totalorder %s125, %s141
      %p143 = scmp.eq.s32.totalorder %s31, 0
      %p144 = por %p142, %p143
      %s146 = sadd.s32 %s145, 1
      %p149 = scmp.eq.s32.totalorder %s25, 3
      %p150 = scmp.ne.s32.totalorder %s145, %s147
      %p151 = scmp.eq.s32.totalorder %s25, 0
      %p152 = por %p150, %p151
      %p153 = scmp.ne.s32.totalorder %s145, %s147
      %p154 = scmp.eq.s32.totalorder %s30, 3
      %p155 = por %p153, %p154
      %p156 = scmp.ne.s32.totalorder %s147, %s148
      %p157 = scmp.eq.s32.totalorder %s30, 0
      %p158 = por %p156, %p157
      %p159 = scmp.ne.s32.totalorder %s147, %s148
      %p160 = scmp.eq.s32.totalorder %s31, 3
      %p161 = por %p159, %p160
      %p163 = scmp.ne.s32.totalorder %s148, %s162
      %p164 = scmp.eq.s32.totalorder %s31, 0
      %p165 = por %p163, %p164
      %s167 = sadd.s32 %s166, 1
      %p170 = scmp.eq.s32.totalorder %s25, 3
      %p171 = scmp.ne.s32.totalorder %s166, %s168
      %p172 = scmp.eq.s32.totalorder %s25, 0
      %p173 = por %p171, %p172
      %p174 = scmp.ne.s32.totalorder %s166, %s168
      %p175 = scmp.eq.s32.totalorder %s30, 3
      %p176 = por %p174, %p175
      %p177 = scmp.ne.s32.totalorder %s168, %s169
      %p178 = scmp.eq.s32.totalorder %s30, 0
      %p179 = por %p177, %p178
      %p180 = scmp.ne.s32.totalorder %s168, %s169
      %p181 = scmp.eq.s32.totalorder %s31, 3
      %p182 = por %p180, %p181
      %p184 = scmp.ne.s32.totalorder %s169, %s183
      %p185 = scmp.eq.s32.totalorder %s31, 0
      %p186 = por %p184, %p185
      %s188 = sadd.s32 %s187, 1
      %p191 = scmp.eq.s32.totalorder %s25, 3
      %p192 = scmp.ne.s32.totalorder %s187, %s189
      %p193 = scmp.eq.s32.totalorder %s25, 0
      %p194 = por %p192, %p193
      %p195 = scmp.ne.s32.totalorder %s187, %s189
      %p196 = scmp.eq.s32.totalorder %s30, 3
      %p197 = por %p195, %p196
      %p198 = scmp.ne.s32.totalorder %s189, %s190
      %p199 = scmp.eq.s32.totalorder %s30, 0
      %p200 = por %p198, %p199
      %p201 = scmp.ne.s32.totalorder %s189, %s190
      %p202 = scmp.eq.s32.totalorder %s31, 3
      %p203 = por %p201, %p202
      %p205 = scmp.ne.s32.totalorder %s190, %s204
      %p206 = scmp.eq.s32.totalorder %s31, 0
      %p207 = por %p205, %p206
      %s209 = sadd.s32 %s208, 1
      %p212 = scmp.eq.s32.totalorder %s25, 3
      %p213 = scmp.ne.s32.totalorder %s208, %s210
      %p214 = scmp.eq.s32.totalorder %s25, 0
      %p215 = por %p213, %p214
      %p216 = scmp.ne.s32.totalorder %s208, %s210
      %p217 = scmp.eq.s32.totalorder %s30, 3
      %p218 = por %p216, %p217
      %p219 = scmp.ne.s32.totalorder %s210, %s211
      %p220 = scmp.eq.s32.totalorder %s30, 0
      %p221 = por %p219, %p220
      %p222 = scmp.ne.s32.totalorder %s210, %s211
      %p223 = scmp.eq.s32.totalorder %s31, 3
      %p224 = por %p222, %p223
      %p226 = scmp.ne.s32.totalorder %s211, %s225
      %p227 = scmp.eq.s32.totalorder %s31, 0
      %p228 = por %p226, %p227
      %s230 = sadd.s32 %s229, 1
      %p233 = scmp.eq.s32.totalorder %s25, 3
      %p234 = scmp.ne.s32.totalorder %s229, %s231
      %p235 = scmp.eq.s32.totalorder %s25, 0
      %p236 = por %p234, %p235
      %p237 = scmp.ne.s32.totalorder %s229, %s231
      %p238 = scmp.eq.s32.totalorder %s30, 3
      %p239 = por %p237, %p238
      %p240 = scmp.ne.s32.totalorder %s231, %s232
      %p241 = scmp.eq.s32.totalorder %s30, 0
      %p242 = por %p240, %p241
      %p243 = scmp.ne.s32.totalorder %s231, %s232
      %p244 = scmp.eq.s32.totalorder %s31, 3
      %p245 = por %p243, %p244
      %p247 = scmp.ne.s32.totalorder %s232, %s246
      %p248 = scmp.eq.s32.totalorder %s31, 0
      %p249 = por %p247, %p248
      %s251 = sadd.s32 %s250, 1
      %p254 = scmp.eq.s32.totalorder %s25, 3
      %p255 = scmp.ne.s32.totalorder %s250, %s252
      %p256 = scmp.eq.s32.totalorder %s25, 0
      %p257 = por %p255, %p256
      %p258 = scmp.ne.s32.totalorder %s250, %s252
      %p259 = scmp.eq.s32.totalorder %s30, 3
      %p260 = por %p258, %p259
      %p261 = scmp.ne.s32.totalorder %s252, %s253
      %p262 = scmp.eq.s32.totalorder %s30, 0
      %p263 = por %p261, %p262
      %p264 = scmp.ne.s32.totalorder %s252, %s253
      %p265 = scmp.eq.s32.totalorder %s31, 3
      %p266 = por %p264, %p265
      %p268 = scmp.ne.s32.totalorder %s253, %s267
      %p269 = scmp.eq.s32.totalorder %s31, 0
      %p270 = por %p268, %p269
      %s271 = ssub.s32 %s32, %s44
      %s272 = ssub.s32 %s33, %s40
      %s273 = sor.u32 %s271, %s272
      %p274 = scmp.eq.s32.totalorder %s273, 0
      %s276 = sadd.s32 %s275, 1
      %s277 = scalar_select %p274, %s275, %s276
      %p280 = pneg %p274
      %p281 = scmp.eq.s32.totalorder %s25, 3
      %p282 = por %p280, %p281
      %p283 = scmp.ne.s32.totalorder %s275, %s278
      %p284 = scmp.eq.s32.totalorder %s25, 0
      %p285 = por %p283, %p284
      %p286 = scmp.ne.s32.totalorder %s275, %s278
      %p287 = scmp.eq.s32.totalorder %s30, 3
      %p288 = por %p286, %p287
      %p289 = scmp.ne.s32.totalorder %s278, %s279
      %p290 = scmp.eq.s32.totalorder %s30, 0
      %p291 = por %p289, %p290
      %p292 = scmp.ne.s32.totalorder %s278, %s279
      %p293 = scmp.eq.s32.totalorder %s31, 3
      %p294 = por %p292, %p293
      %p296 = scmp.ne.s32.totalorder %s279, %s295
      %p297 = scmp.eq.s32.totalorder %s31, 0
      %p298 = por %p296, %p297
      %p299 = scmp.le.s32.totalorder 1, %s25
      %p300 = scmp.lt.s32.totalorder %s25, 5
      %p301 = pnand %p299, %p300
      %p302 = pneg %p301
      // Predicated region
      $region9: #{tpu_custom_call.1} parent=5 // pred_check
        _
      $region10: #{tpu_custom_call.1} parent=5 // pred_check_branch
        %304 = sbr.rel (%p301) target = $region12
      $region11: #{tpu_custom_call.1} parent=5 // pred_region
        %s305 = ssub.s32 %s25, 1
        // Predicated region
        $region13: #{tpu_custom_call.1} parent=11 // pred_check
          %p306 = pneg %p158
        $region14: #{tpu_custom_call.1} parent=11 // pred_check_branch
          %308 = sbr.rel (%p306) target = $region16
        $region15: #{tpu_custom_call.1} parent=11 // pred_region
          %s310 = ssub.s32 1024, 1024
          %311 = vsyncadd [#allocation10], %s310
          %s312 = sshll.u32 [#allocation9], 4
          %s313 = int_to_ptr.vmem [resolvable:$true] %s312
          %318 = dma.hbm_to_vmem [thread:$0]  %s3, 1024, %s313, [#allocation10], 64, 64, 4
        $region16: #{tpu_custom_call.1} parent=11 // pred_fallthru
          _
        // Predicated region
        $region17: #{tpu_custom_call.1} parent=11 // pred_check
          %p319 = pneg %p179
        $region18: #{tpu_custom_call.1} parent=11 // pred_check_branch
          %321 = sbr.rel (%p319) target = $region20
        $region19: #{tpu_custom_call.1} parent=11 // pred_region
          _
        $region20: #{tpu_custom_call.1} parent=11 // pred_fallthru
          _
        // Predicated region
        $region21: #{tpu_custom_call.1} parent=11 // pred_check
          %p322 = pneg %p200
        $region22: #{tpu_custom_call.1} parent=11 // pred_check_branch
          %324 = sbr.rel (%p322) target = $region24
        $region23: #{tpu_custom_call.1} parent=11 // pred_region
          _
        $region24: #{tpu_custom_call.1} parent=11 // pred_fallthru
          _
        // Predicated region
        $region25: #{tpu_custom_call.1} parent=11 // pred_check
          %p325 = pneg %p221
        $region26: #{tpu_custom_call.1} parent=11 // pred_check_branch
          %327 = sbr.rel (%p325) target = $region28
        $region27: #{tpu_custom_call.1} parent=11 // pred_region
          %s329 = ssub.s32 9216, 9216
          %330 = vsyncadd [#allocation10], %s329
          %s331 = sshll.u32 [#allocation11], 4
          %s332 = int_to_ptr.vmem [resolvable:$true] %s331
          %337 = dma.hbm_to_vmem [thread:$0]  %s6, 9216, %s332, [#allocation10], 192, 192, 12
        $region28: #{tpu_custom_call.1} parent=11 // pred_fallthru
          _
        // Predicated region
        $region29: #{tpu_custom_call.1} parent=11 // pred_check
          %p338 = pneg %p242
        $region30: #{tpu_custom_call.1} parent=11 // pred_check_branch
          %340 = sbr.rel (%p338) target = $region32
        $region31: #{tpu_custom_call.1} parent=11 // pred_region
          _
        $region32: #{tpu_custom_call.1} parent=11 // pred_fallthru
          _
        // Predicated region
        $region33: #{tpu_custom_call.1} parent=11 // pred_check
          %p341 = pneg %p263
        $region34: #{tpu_custom_call.1} parent=11 // pred_check_branch
          %343 = sbr.rel (%p341) target = $region36
        $region35: #{tpu_custom_call.1} parent=11 // pred_region
          _
        $region36: #{tpu_custom_call.1} parent=11 // pred_fallthru
          _
      $region12: #{tpu_custom_call.1} parent=5 // pred_fallthru
        _
      %p344 = scmp.lt.s32.totalorder %s25, 4
      // Predicated region
      $region37: #{tpu_custom_call.1} parent=5 // pred_check
        %p345 = pneg %p344
      $region38: #{tpu_custom_call.1} parent=5 // pred_check_branch
        %347 = sbr.rel (%p345) target = $region40
      $region39: #{tpu_custom_call.1} parent=5 // pred_region
        // Predicated region
        $region41: #{tpu_custom_call.1} parent=39 // pred_check
          %p348 = pneg %p59
        $region42: #{tpu_custom_call.1} parent=39 // pred_check_branch
          %350 = sbr.rel (%p348) target = $region44
        $region43: #{tpu_custom_call.1} parent=39 // pred_region
          %s351 = sand.u32 %s49, 1
          %s352 = scalar_lea.sflag [#allocation4], %s351
          %s353 = sand.u32 %s49, 1
          %s354 = smul.addr %s353, 64
          %s355 = scalar_lea.vmem [#allocation3], %s354
          %s356 = smul.u32 8, %s33
          %s358 = ssub.s32 1024, 1024
          %359 = vsyncadd %s352, %s358
          %s360 = smul.addr %s356, 2
          %s361 = smul.addr %s32, 32
          %s362 = sadd.s32 %s360, %s361
          %s363 = smul.addr %s362, 64
          %s364 = scalar_lea.hbm %s0, %s363
          %s365 = sshll.u32 %s355, 4
          %s366 = int_to_ptr.vmem [resolvable:$true] %s365
          %371 = dma.hbm_to_vmem [thread:$0]  %s364, 1024, %s366, %s352, 64, 64, 4
        $region44: #{tpu_custom_call.1} parent=39 // pred_fallthru
          _
        // Predicated region
        $region45: #{tpu_custom_call.1} parent=39 // pred_check
          %p372 = pneg %p95
        $region46: #{tpu_custom_call.1} parent=39 // pred_check_branch
          %374 = sbr.rel (%p372) target = $region48
        $region47: #{tpu_custom_call.1} parent=39 // pred_region
          %s375 = sand.u32 %s25, 1
          %s376 = scalar_lea.sflag [#allocation7], %s375
          %s377 = sand.u32 %s85, 1
          %s378 = smul.addr %s377, 8
          %s379 = scalar_lea.vmem [#allocation6], %s378
          %s380 = smul.u32 %s33, 8
          %s381 = ssub.s32 %s380, 1
          %p382 = scmp.gt.s32.totalorder %s381, 0
          %s383 = scalar_select %p382, %s381, 0
          %s385 = ssub.s32 128, 128
          %386 = vsyncadd %s376, %s385
          %s387 = smul.addr %s383, 2
          %s388 = smul.addr %s32, 32
          %s389 = sadd.s32 %s387, %s388
          %s390 = smul.addr %s389, 64
          %s391 = scalar_lea.hbm %s1, %s390
          %s392 = sshll.u32 %s379, 4
          %s393 = int_to_ptr.vmem [resolvable:$true] %s392
          %398 = dma.hbm_to_vmem [thread:$0]  %s391, 128, %s393, %s376, 64, 64, 4
        $region48: #{tpu_custom_call.1} parent=39 // pred_fallthru
          _
        // Predicated region
        $region49: #{tpu_custom_call.1} parent=39 // pred_check
          %p399 = pneg %p131
        $region50: #{tpu_custom_call.1} parent=39 // pred_check_branch
          %401 = sbr.rel (%p399) target = $region52
        $region51: #{tpu_custom_call.1} parent=39 // pred_region
          %s402 = sand.u32 %s25, 1
          %s403 = scalar_lea.sflag [#allocation7], %s402
          %s404 = sand.u32 %s121, 1
          %s405 = smul.addr %s404, 8
          %s406 = scalar_lea.vmem [#allocation8], %s405
          %s407 = smul.u32 %s33, 8
          %s408 = sadd.s32 %s407, 8
          %p409 = scmp.lt.s32.totalorder %s408, 15
          %s410 = scalar_select %p409, %s408, 15
          %s412 = ssub.s32 128, 128
          %413 = vsyncadd %s403, %s412
          %s414 = smul.addr %s410, 2
          %s415 = smul.addr %s32, 32
          %s416 = sadd.s32 %s414, %s415
          %s417 = smul.addr %s416, 64
          %s418 = scalar_lea.hbm %s2, %s417
          %s419 = sshll.u32 %s406, 4
          %s420 = int_to_ptr.vmem [resolvable:$true] %s419
          %425 = dma.hbm_to_vmem [thread:$0]  %s418, 128, %s420, %s403, 64, 64, 4
        $region52: #{tpu_custom_call.1} parent=39 // pred_fallthru
          _
      $region40: #{tpu_custom_call.1} parent=5 // pred_fallthru
        _
      %p426 = scmp.le.s32.totalorder 1, %s25
      %p427 = scmp.lt.s32.totalorder %s25, 5
      %p428 = pnand %p426, %p427
      %p429 = pneg %p428
      // Predicated region
      $region53: #{tpu_custom_call.1} parent=5 // pred_check
        _
      $region54: #{tpu_custom_call.1} parent=5 // pred_check_branch
        %431 = sbr.rel (%p428) target = $region56
      $region55: #{tpu_custom_call.1} parent=5 // pred_region
        %s432 = ssub.s32 %s25, 1
        %s433 = sand.u32 %s52, 1
        %s434 = scalar_lea.sflag [#allocation4], %s433
        %s435 = sand.u32 %s52, 1
        %s436 = smul.addr %s435, 64
        %s437 = scalar_lea.vmem [#allocation3], %s436
        // Predicated region
        $region57: #{tpu_custom_call.1} parent=55 // pred_check
          %p438 = pneg %p65
        $region58: #{tpu_custom_call.1} parent=55 // pred_check_branch
          %440 = sbr.rel (%p438) target = $region60
        $region59: #{tpu_custom_call.1} parent=55 // pred_region
          %441 = dma.done %s434, 1024
        $region60: #{tpu_custom_call.1} parent=55 // pred_fallthru
          _
        %s442 = sand.u32 %s30, 1
        %s443 = scalar_lea.sflag [#allocation7], %s442
        %s444 = sand.u32 %s88, 1
        %s445 = smul.addr %s444, 8
        %s446 = scalar_lea.vmem [#allocation6], %s445
        // Predicated region
        $region61: #{tpu_custom_call.1} parent=55 // pred_check
          %p447 = pneg %p101
        $region62: #{tpu_custom_call.1} parent=55 // pred_check_branch
          %449 = sbr.rel (%p447) target = $region64
        $region63: #{tpu_custom_call.1} parent=55 // pred_region
          %450 = dma.done %s443, 128
        $region64: #{tpu_custom_call.1} parent=55 // pred_fallthru
          _
        %s451 = sand.u32 %s30, 1
        %s452 = scalar_lea.sflag [#allocation7], %s451
        %s453 = sand.u32 %s124, 1
        %s454 = smul.addr %s453, 8
        %s455 = scalar_lea.vmem [#allocation8], %s454
        // Predicated region
        $region65: #{tpu_custom_call.1} parent=55 // pred_check
          %p456 = pneg %p137
        $region66: #{tpu_custom_call.1} parent=55 // pred_check_branch
          %458 = sbr.rel (%p456) target = $region68
        $region67: #{tpu_custom_call.1} parent=55 // pred_region
          %459 = dma.done %s452, 128
        $region68: #{tpu_custom_call.1} parent=55 // pred_fallthru
          _
        // Predicated region
        $region69: #{tpu_custom_call.1} parent=55 // pred_check
          %p460 = pneg %p158
        $region70: #{tpu_custom_call.1} parent=55 // pred_check_branch
          %462 = sbr.rel (%p460) target = $region72
        $region71: #{tpu_custom_call.1} parent=55 // pred_region
          %463 = dma.done [#allocation10], 1024
        $region72: #{tpu_custom_call.1} parent=55 // pred_fallthru
          _
        // Predicated region
        $region73: #{tpu_custom_call.1} parent=55 // pred_check
          %p464 = pneg %p221
        $region74: #{tpu_custom_call.1} parent=55 // pred_check_branch
          %466 = sbr.rel (%p464) target = $region76
        $region75: #{tpu_custom_call.1} parent=55 // pred_region
          %467 = dma.done [#allocation10], 9216
        $region76: #{tpu_custom_call.1} parent=55 // pred_fallthru
          _
        %s468 = sand.u32 %s52, 1
        %s469 = scalar_lea.sflag [#allocation4], %s468
        %s470 = sand.u32 %s52, 1
        %s471 = smul.addr %s470, 64
        %s472 = scalar_lea.vmem [#allocation3], %s471
        %p473 = pneg %p65
        %p474 = pneg %p62
        %s475 = sand.u32 %s30, 1
        %s476 = scalar_lea.sflag [#allocation7], %s475
        %s477 = sand.u32 %s88, 1
        %s478 = smul.addr %s477, 8
        %s479 = scalar_lea.vmem [#allocation6], %s478
        %p480 = pneg %p101
        %p481 = pneg %p98
        %s482 = sand.u32 %s30, 1
        %s483 = scalar_lea.sflag [#allocation7], %s482
        %s484 = sand.u32 %s124, 1
        %s485 = smul.addr %s484, 8
        %s486 = scalar_lea.vmem [#allocation8], %s485
        %p487 = pneg %p137
        %p488 = pneg %p134
        %p489 = pneg %p158
        %p490 = pneg %p155
        %p491 = pneg %p179
        %p492 = pneg %p176
        %p493 = pneg %p200
        %p494 = pneg %p197
        %p495 = pneg %p221
        %p496 = pneg %p218
        %p497 = pneg %p242
        %p498 = pneg %p239
        %p499 = pneg %p263
        %p500 = pneg %p260
        %p501 = pneg %p291
        %p502 = pneg %p288
        %s503 = sand.u32 %s278, 1
        %s504 = scalar_lea.sflag [#allocation5], %s503
        %s505 = sand.u32 %s278, 1
        %s506 = smul.addr %s505, 128
        %s507 = scalar_lea.vmem [#allocation12], %s506
        %s508 = smul.u32 8, %s35
        %s509 = smul.u32 %s35, 8
        %s510 = ssub.s32 %s509, 1
        %p511 = scmp.gt.s32.totalorder %s510, 0
        %s512 = scalar_select %p511, %s510, 0
        %s513 = smul.u32 %s35, 8
        %s514 = sadd.s32 %s513, 8
        %p515 = scmp.lt.s32.totalorder %s514, 15
        %s516 = scalar_select %p515, %s514, 15
        %s517 = smul.u32 8, %s35
        %v519 = vld [vmem:[%s4] sm:$0x1]
        %v520 = vld [vmem:[%s5] sm:$0x1]
        %v521 = vld [vmem:[%s7] sm:$0x1]
        %v522 = vld [vmem:[%s8] sm:$0x1]
        %v523 = vld [vmem:[%s437] sm:$0xf]
        %v524 = vld [vmem:[%s437 + $0x4] sm:$0xf]
        %v525 = vld [vmem:[%s437 + $0x8] sm:$0xf]
        %v526 = vld [vmem:[%s437 + $0xc] sm:$0xf]
        %v527 = vld [vmem:[%s437 + $0x10] sm:$0xf]
        %v528 = vld [vmem:[%s437 + $0x14] sm:$0xf]
        %v529 = vld [vmem:[%s437 + $0x18] sm:$0xf]
        %v530 = vld [vmem:[%s437 + $0x1c] sm:$0xf]
        %v531 = vld [vmem:[%s437 + $0x20] sm:$0xf]
        %v532 = vld [vmem:[%s437 + $0x24] sm:$0xf]
        %v533 = vld [vmem:[%s437 + $0x28] sm:$0xf]
        %v534 = vld [vmem:[%s437 + $0x2c] sm:$0xf]
        %v535 = vld [vmem:[%s437 + $0x30] sm:$0xf]
        %v536 = vld [vmem:[%s437 + $0x34] sm:$0xf]
        %v537 = vld [vmem:[%s437 + $0x38] sm:$0xf]
        %v538 = vld [vmem:[%s437 + $0x3c] sm:$0xf]
        %v539 = vld [vmem:[#allocation9] sm:$0xf]
        %v540 = vld [vmem:[#allocation9 + $0x4] sm:$0xf]
        %v541 = vld [vmem:[#allocation9 + $0x8] sm:$0xf]
        %v542 = vld [vmem:[#allocation9 + $0xc] sm:$0xf]
        %v543 = vld [vmem:[#allocation9 + $0x10] sm:$0xf]
        %v544 = vld [vmem:[#allocation9 + $0x14] sm:$0xf]
        %v545 = vld [vmem:[#allocation9 + $0x18] sm:$0xf]
        %v546 = vld [vmem:[#allocation9 + $0x1c] sm:$0xf]
        %v547 = vld [vmem:[#allocation9 + $0x20] sm:$0xf]
        %v548 = vld [vmem:[#allocation9 + $0x24] sm:$0xf]
        %v549 = vld [vmem:[#allocation9 + $0x28] sm:$0xf]
        %v550 = vld [vmem:[#allocation9 + $0x2c] sm:$0xf]
        %v551 = vld [vmem:[#allocation9 + $0x30] sm:$0xf]
        %v552 = vld [vmem:[#allocation9 + $0x34] sm:$0xf]
        %v553 = vld [vmem:[#allocation9 + $0x38] sm:$0xf]
        %v554 = vld [vmem:[#allocation9 + $0x3c] sm:$0xf]
        %v571 = vunpack.c.l.b16 %v523
        %v572 = vunpack.c.l.b16 %v524
        %v573 = vunpack.c.l.b16 %v525
        %v574 = vunpack.c.l.b16 %v526
        %v575 = vunpack.c.l.b16 %v527
        %v576 = vunpack.c.l.b16 %v528
        %v577 = vunpack.c.l.b16 %v529
        %v578 = vunpack.c.l.b16 %v530
        %v579 = vunpack.c.l.b16 %v531
        %v580 = vunpack.c.l.b16 %v532
        %v581 = vunpack.c.l.b16 %v533
        %v582 = vunpack.c.l.b16 %v534
        %v583 = vunpack.c.l.b16 %v535
        %v584 = vunpack.c.l.b16 %v536
        %v585 = vunpack.c.l.b16 %v537
        %v586 = vunpack.c.l.b16 %v538
        %v587 = vpack.c.b16 %v572, %v571
        %v588 = vpack.c.b16 %v574, %v573
        %v589 = vpack.c.b16 %v576, %v575
        %v590 = vpack.c.b16 %v578, %v577
        %v591 = vpack.c.b16 %v580, %v579
        %v592 = vpack.c.b16 %v582, %v581
        %v593 = vpack.c.b16 %v584, %v583
        %v594 = vpack.c.b16 %v586, %v585
        %v619 = vunpack.c.l.b16 %v539
        %v620 = vunpack.c.l.b16 %v540
        %v621 = vunpack.c.l.b16 %v541
        %v622 = vunpack.c.l.b16 %v542
        %v623 = vunpack.c.l.b16 %v543
        %v624 = vunpack.c.l.b16 %v544
        %v625 = vunpack.c.l.b16 %v545
        %v626 = vunpack.c.l.b16 %v546
        %v627 = vunpack.c.l.b16 %v547
        %v628 = vunpack.c.l.b16 %v548
        %v629 = vunpack.c.l.b16 %v549
        %v630 = vunpack.c.l.b16 %v550
        %v631 = vunpack.c.l.b16 %v551
        %v632 = vunpack.c.l.b16 %v552
        %v633 = vunpack.c.l.b16 %v553
        %v634 = vunpack.c.l.b16 %v554
        %v635 = vpack.c.b16 %v620, %v619
        %v636 = vpack.c.b16 %v622, %v621
        %v637 = vpack.c.b16 %v624, %v623
        %v638 = vpack.c.b16 %v626, %v625
        %v639 = vpack.c.b16 %v628, %v627
        %v640 = vpack.c.b16 %v630, %v629
        %v641 = vpack.c.b16 %v632, %v631
        %v642 = vpack.c.b16 %v634, %v633
        %651 = vmatprep.subr.bf16.mxu0 0
        %652 = vmatpush1.bf16.msra.mxu0 %v642
        %653 = vmatprep.subr.bf16.mxu0 0
        %654 = vmatpush1.bf16.msra.mxu0 %v641
        %655 = vmatprep.subr.bf16.mxu0 0
        %656 = vmatpush1.bf16.msra.mxu0 %v640
        %657 = vmatprep.subr.bf16.mxu0 0
        %658 = vmatpush1.bf16.msra.mxu0 %v639
        %659 = vmatprep.subr.bf16.mxu0 0
        %660 = vmatpush1.bf16.msra.mxu0 %v638
        %661 = vmatprep.subr.bf16.mxu0 0
        %662 = vmatpush1.bf16.msra.mxu0 %v637
        %663 = vmatprep.subr.bf16.mxu0 0
        %664 = vmatpush1.bf16.msra.mxu0 %v636
        %665 = vmatprep.subr.bf16.mxu0 0
        %666 = vmatpush1.bf16.msra.mxu0 %v635
        %667 = vmatprep.subr.bf16.mxu0 0
        %668 = vmatpush2.bf16.msra.mxu0 0
        %669 = vmatprep.subr.bf16.mxu0 0
        %670 = vmatpush2.bf16.msra.mxu0 0
        %671 = vmatprep.subr.bf16.mxu0 0
        %672 = vmatpush2.bf16.msra.mxu0 0
        %673 = vmatprep.subr.bf16.mxu0 0
        %674 = vmatpush2.bf16.msra.mxu0 0
        %675 = vmatprep.subr.bf16.mxu0 0
        %676 = vmatpush2.bf16.msra.mxu0 0
        %677 = vmatprep.subr.bf16.mxu0 0
        %678 = vmatpush2.bf16.msra.mxu0 0
        %679 = vmatprep.subr.bf16.mxu0 0
        %680 = vmatpush2.bf16.msra.mxu0 0
        %681 = vmatprep.subr.bf16.mxu0 0
        %682 = vmatpush2.bf16.msra.mxu0 0
        %683 = vmatprep.mubr.bf16.mxu0 0
        %684 = vmatmul.mubr.bf16.gmra.mxu0 %v587
        %v685 = vpop.f32.mrf.mxu0
        %v686 = vadd.f32 0.0, %v685
        %v687 = vpop.f32.mrf.mxu0
        %v688 = vpop.f32.mrf.mxu0
        %v689 = vadd.f32 0.0, %v688
        %v690 = vpop.f32.mrf.mxu0
        %691 = vmatprep.mubr.bf16.mxu0 0
        %692 = vmatmul.mubr.bf16.gmra.mxu0 %v588
        %v693 = vpop.f32.mrf.mxu0
        %v694 = vadd.f32 0.0, %v693
        %v695 = vpop.f32.mrf.mxu0
        %v696 = vpop.f32.mrf.mxu0
        %v697 = vadd.f32 0.0, %v696
        %v698 = vpop.f32.mrf.mxu0
        %699 = vmatprep.mubr.bf16.mxu0 0
        %700 = vmatmul.mubr.bf16.gmra.mxu0 %v589
        %v701 = vpop.f32.mrf.mxu0
        %v702 = vadd.f32 0.0, %v701
        %v703 = vpop.f32.mrf.mxu0
        %v704 = vpop.f32.mrf.mxu0
        %v705 = vadd.f32 0.0, %v704
        %v706 = vpop.f32.mrf.mxu0
        %707 = vmatprep.mubr.bf16.mxu0 0
        %708 = vmatmul.mubr.bf16.gmra.mxu0 %v590
        %v709 = vpop.f32.mrf.mxu0
        %v710 = vadd.f32 0.0, %v709
        %v711 = vpop.f32.mrf.mxu0
        %v712 = vpop.f32.mrf.mxu0
        %v713 = vadd.f32 0.0, %v712
        %v714 = vpop.f32.mrf.mxu0
        %715 = vmatprep.mubr.bf16.mxu0 0
        %716 = vmatmul.mubr.bf16.gmra.mxu0 %v591
        %v717 = vpop.f32.mrf.mxu0
        %v718 = vadd.f32 0.0, %v717
        %v719 = vpop.f32.mrf.mxu0
        %v720 = vpop.f32.mrf.mxu0
        %v721 = vadd.f32 0.0, %v720
        %v722 = vpop.f32.mrf.mxu0
        %723 = vmatprep.mubr.bf16.mxu0 0
        %724 = vmatmul.mubr.bf16.gmra.mxu0 %v592
        %v725 = vpop.f32.mrf.mxu0
        %v726 = vadd.f32 0.0, %v725
        %v727 = vpop.f32.mrf.mxu0
        %v728 = vpop.f32.mrf.mxu0
        %v729 = vadd.f32 0.0, %v728
        %v730 = vpop.f32.mrf.mxu0
        %731 = vmatprep.mubr.bf16.mxu0 0
        %732 = vmatmul.mubr.bf16.gmra.mxu0 %v593
        %v733 = vpop.f32.mrf.mxu0
        %v734 = vadd.f32 0.0, %v733
        %v735 = vpop.f32.mrf.mxu0
        %v736 = vpop.f32.mrf.mxu0
        %v737 = vadd.f32 0.0, %v736
        %v738 = vpop.f32.mrf.mxu0
        %739 = vmatprep.mubr.bf16.mxu0 0
        %740 = vmatmul.mubr.bf16.gmra.mxu0 %v594
        %v741 = vpop.f32.mrf.mxu0
        %v742 = vadd.f32 0.0, %v741
        %v743 = vpop.f32.mrf.mxu0
        %v744 = vpop.f32.mrf.mxu0
        %v745 = vadd.f32 0.0, %v744
        %v746 = vpop.f32.mrf.mxu0
        %747 = vdwg.mxu0
        %v749 = vlaneseq
        %v750 = vshrl.u32 %v749, 7
        %v751 = vsub.s32 0, %v750
        %v752 = vrot.slane %v519, %v751
        %v754 = vmul.f32 %v686, %v752
        %v755 = vmul.f32 %v689, %v752
        %v756 = vmul.f32 %v694, %v752
        %v757 = vmul.f32 %v697, %v752
        %v758 = vmul.f32 %v702, %v752
        %v759 = vmul.f32 %v705, %v752
        %v760 = vmul.f32 %v710, %v752
        %v761 = vmul.f32 %v713, %v752
        %v762 = vmul.f32 %v718, %v752
        %v763 = vmul.f32 %v721, %v752
        %v764 = vmul.f32 %v726, %v752
        %v765 = vmul.f32 %v729, %v752
        %v766 = vmul.f32 %v734, %v752
        %v767 = vmul.f32 %v737, %v752
        %v768 = vmul.f32 %v742, %v752
        %v769 = vmul.f32 %v745, %v752
        %v771 = vlaneseq
        %v772 = vshrl.u32 %v771, 7
        %v773 = vsub.s32 0, %v772
        %v774 = vrot.slane %v520, %v773
        %v776 = vadd.f32 %v754, %v774
        %v777 = vadd.f32 %v755, %v774
        %v778 = vadd.f32 %v756, %v774
        %v779 = vadd.f32 %v757, %v774
        %v780 = vadd.f32 %v758, %v774
        %v781 = vadd.f32 %v759, %v774
        %v782 = vadd.f32 %v760, %v774
        %v783 = vadd.f32 %v761, %v774
        %v784 = vadd.f32 %v762, %v774
        %v785 = vadd.f32 %v763, %v774
        %v786 = vadd.f32 %v764, %v774
        %v787 = vadd.f32 %v765, %v774
        %v788 = vadd.f32 %v766, %v774
        %v789 = vadd.f32 %v767, %v774
        %v790 = vadd.f32 %v768, %v774
        %v791 = vadd.f32 %v769, %v774
        %v792 = vmax.f32 %v776, 0.0
        %v793 = vmax.f32 %v777, 0.0
        %v794 = vmax.f32 %v778, 0.0
        %v795 = vmax.f32 %v779, 0.0
        %v796 = vmax.f32 %v780, 0.0
        %v797 = vmax.f32 %v781, 0.0
        %v798 = vmax.f32 %v782, 0.0
        %v799 = vmax.f32 %v783, 0.0
        %v800 = vmax.f32 %v784, 0.0
        %v801 = vmax.f32 %v785, 0.0
        %v802 = vmax.f32 %v786, 0.0
        %v803 = vmax.f32 %v787, 0.0
        %v804 = vmax.f32 %v788, 0.0
        %v805 = vmax.f32 %v789, 0.0
        %v806 = vmax.f32 %v790, 0.0
        %v807 = vmax.f32 %v791, 0.0
        %v808 = vpack.c.bf16 %v793, %v792
        %v809 = vpack.c.bf16 %v795, %v794
        %v810 = vpack.c.bf16 %v797, %v796
        %v811 = vpack.c.bf16 %v799, %v798
        %v812 = vpack.c.bf16 %v801, %v800
        %v813 = vpack.c.bf16 %v803, %v802
        %v814 = vpack.c.bf16 %v805, %v804
        %v815 = vpack.c.bf16 %v807, %v806
        %v824 = vunpack.c.l.b16 %v808
        %v825 = vunpack.c.h.b16 %v808
        %v826 = vunpack.c.l.b16 %v809
        %v827 = vunpack.c.h.b16 %v809
        %v828 = vunpack.c.l.b16 %v810
        %v829 = vunpack.c.h.b16 %v810
        %v830 = vunpack.c.l.b16 %v811
        %v831 = vunpack.c.h.b16 %v811
        %v832 = vunpack.c.l.b16 %v812
        %v833 = vunpack.c.h.b16 %v812
        %v834 = vunpack.c.l.b16 %v813
        %v835 = vunpack.c.h.b16 %v813
        %v836 = vunpack.c.l.b16 %v814
        %v837 = vunpack.c.h.b16 %v814
        %v838 = vunpack.c.l.b16 %v815
        %v839 = vunpack.c.h.b16 %v815
        %v840 = vpack.c.b16 %v824, %v824
        %v841 = vpack.c.b16 %v825, %v825
        %v842 = vpack.c.b16 %v826, %v826
        %v843 = vpack.c.b16 %v827, %v827
        %v844 = vpack.c.b16 %v828, %v828
        %v845 = vpack.c.b16 %v829, %v829
        %v846 = vpack.c.b16 %v830, %v830
        %v847 = vpack.c.b16 %v831, %v831
        %v848 = vpack.c.b16 %v832, %v832
        %v849 = vpack.c.b16 %v833, %v833
        %v850 = vpack.c.b16 %v834, %v834
        %v851 = vpack.c.b16 %v835, %v835
        %v852 = vpack.c.b16 %v836, %v836
        %v853 = vpack.c.b16 %v837, %v837
        %v854 = vpack.c.b16 %v838, %v838
        %v855 = vpack.c.b16 %v839, %v839
        %s872 = scalar_lea.vmem [#allocation2], 8
        %873 = vst [vmem:[%s872] sm:$0xf] %v840
        %874 = vst [vmem:[%s872 + $0x4] sm:$0xf] %v841
        %875 = vst [vmem:[%s872 + $0x8] sm:$0xf] %v842
        %876 = vst [vmem:[%s872 + $0xc] sm:$0xf] %v843
        %877 = vst [vmem:[%s872 + $0x10] sm:$0xf] %v844
        %878 = vst [vmem:[%s872 + $0x14] sm:$0xf] %v845
        %879 = vst [vmem:[%s872 + $0x18] sm:$0xf] %v846
        %880 = vst [vmem:[%s872 + $0x1c] sm:$0xf] %v847
        %881 = vst [vmem:[%s872 + $0x20] sm:$0xf] %v848
        %882 = vst [vmem:[%s872 + $0x24] sm:$0xf] %v849
        %883 = vst [vmem:[%s872 + $0x28] sm:$0xf] %v850
        %884 = vst [vmem:[%s872 + $0x2c] sm:$0xf] %v851
        %885 = vst [vmem:[%s872 + $0x30] sm:$0xf] %v852
        %886 = vst [vmem:[%s872 + $0x34] sm:$0xf] %v853
        %887 = vst [vmem:[%s872 + $0x38] sm:$0xf] %v854
        %888 = vst [vmem:[%s872 + $0x3c] sm:$0xf] %v855
        %v889 = vld [vmem:[%s446] sm:$0xf]
        %v890 = vld [vmem:[%s446 + $0x4] sm:$0xf]
        %p891 = scmp.gt.s32.totalorder %s35, 0
        %v892 = vld [vmem:[#allocation9] sm:$0xf]
        %v893 = vld [vmem:[#allocation9 + $0x4] sm:$0xf]
        %v894 = vld [vmem:[#allocation9 + $0x8] sm:$0xf]
        %v895 = vld [vmem:[#allocation9 + $0xc] sm:$0xf]
        %v896 = vld [vmem:[#allocation9 + $0x10] sm:$0xf]
        %v897 = vld [vmem:[#allocation9 + $0x14] sm:$0xf]
        %v898 = vld [vmem:[#allocation9 + $0x18] sm:$0xf]
        %v899 = vld [vmem:[#allocation9 + $0x1c] sm:$0xf]
        %v900 = vld [vmem:[#allocation9 + $0x20] sm:$0xf]
        %v901 = vld [vmem:[#allocation9 + $0x24] sm:$0xf]
        %v902 = vld [vmem:[#allocation9 + $0x28] sm:$0xf]
        %v903 = vld [vmem:[#allocation9 + $0x2c] sm:$0xf]
        %v904 = vld [vmem:[#allocation9 + $0x30] sm:$0xf]
        %v905 = vld [vmem:[#allocation9 + $0x34] sm:$0xf]
        %v906 = vld [vmem:[#allocation9 + $0x38] sm:$0xf]
        %v907 = vld [vmem:[#allocation9 + $0x3c] sm:$0xf]
        %v910 = vunpack.c.l.b16 %v889
        %v911 = vunpack.c.l.b16 %v890
        %v912 = vpack.c.b16 %v911, %v910
        %v930 = vunpack.c.l.b16 %v892
        %v931 = vunpack.c.l.b16 %v893
        %v932 = vunpack.c.l.b16 %v894
        %v933 = vunpack.c.l.b16 %v895
        %v934 = vunpack.c.l.b16 %v896
        %v935 = vunpack.c.l.b16 %v897
        %v936 = vunpack.c.l.b16 %v898
        %v937 = vunpack.c.l.b16 %v899
        %v938 = vunpack.c.l.b16 %v900
        %v939 = vunpack.c.l.b16 %v901
        %v940 = vunpack.c.l.b16 %v902
        %v941 = vunpack.c.l.b16 %v903
        %v942 = vunpack.c.l.b16 %v904
        %v943 = vunpack.c.l.b16 %v905
        %v944 = vunpack.c.l.b16 %v906
        %v945 = vunpack.c.l.b16 %v907
        %v946 = vpack.c.b16 %v931, %v930
        %v947 = vpack.c.b16 %v933, %v932
        %v948 = vpack.c.b16 %v935, %v934
        %v949 = vpack.c.b16 %v937, %v936
        %v950 = vpack.c.b16 %v939, %v938
        %v951 = vpack.c.b16 %v941, %v940
        %v952 = vpack.c.b16 %v943, %v942
        %v953 = vpack.c.b16 %v945, %v944
        %962 = vmatprep.subr.bf16.mxu0 0
        %963 = vmatpush1.bf16.msra.mxu0 %v953
        %964 = vmatprep.subr.bf16.mxu0 0
        %965 = vmatpush1.bf16.msra.mxu0 %v952
        %966 = vmatprep.subr.bf16.mxu0 0
        %967 = vmatpush1.bf16.msra.mxu0 %v951
        %968 = vmatprep.subr.bf16.mxu0 0
        %969 = vmatpush1.bf16.msra.mxu0 %v950
        %970 = vmatprep.subr.bf16.mxu0 0
        %971 = vmatpush1.bf16.msra.mxu0 %v949
        %972 = vmatprep.subr.bf16.mxu0 0
        %973 = vmatpush1.bf16.msra.mxu0 %v948
        %974 = vmatprep.subr.bf16.mxu0 0
        %975 = vmatpush1.bf16.msra.mxu0 %v947
        %976 = vmatprep.subr.bf16.mxu0 0
        %977 = vmatpush1.bf16.msra.mxu0 %v946
        %978 = vmatprep.subr.bf16.mxu0 0
        %979 = vmatpush2.bf16.msra.mxu0 0
        %980 = vmatprep.subr.bf16.mxu0 0
        %981 = vmatpush2.bf16.msra.mxu0 0
        %982 = vmatprep.subr.bf16.mxu0 0
        %983 = vmatpush2.bf16.msra.mxu0 0
        %984 = vmatprep.subr.bf16.mxu0 0
        %985 = vmatpush2.bf16.msra.mxu0 0
        %986 = vmatprep.subr.bf16.mxu0 0
        %987 = vmatpush2.bf16.msra.mxu0 0
        %988 = vmatprep.subr.bf16.mxu0 0
        %989 = vmatpush2.bf16.msra.mxu0 0
        %990 = vmatprep.subr.bf16.mxu0 0
        %991 = vmatpush2.bf16.msra.mxu0 0
        %992 = vmatprep.subr.bf16.mxu0 0
        %993 = vmatpush2.bf16.msra.mxu0 0
        %994 = vmatprep.mubr.bf16.mxu0 0
        %995 = vmatmul.mubr.bf16.gmra.mxu0 %v912
        %v996 = vpop.f32.mrf.mxu0
        %v997 = vadd.f32 0.0, %v996
        %v998 = vpop.f32.mrf.mxu0
        %v999 = vpop.f32.mrf.mxu0
        %v1000 = vadd.f32 0.0, %v999
        %v1001 = vpop.f32.mrf.mxu0
        %1002 = vdwg.mxu0
        %v1003 = vmul.f32 %v997, %v752
        %v1004 = vmul.f32 %v1000, %v752
        %v1005 = vadd.f32 %v1003, %v774
        %v1006 = vadd.f32 %v1004, %v774
        %v1007 = vmax.f32 %v1005, 0.0
        %v1008 = vmax.f32 %v1006, 0.0
        %s1009 = scalar_select %p891, 1, 0
        %s1010 = scvt.s32.f32 %s1009
        %v1011 = vstv %s1010
        %v1012 = vmul.f32 %v1007, %v1011
        %v1013 = vmul.f32 %v1008, %v1011
        %v1014 = vpack.c.bf16 %v1013, %v1012
        %v1016 = vunpack.c.l.b16 %v1014
        %v1017 = vunpack.c.h.b16 %v1014
        %v1018 = vpack.c.b16 %v1016, %v1016
        %v1019 = vpack.c.b16 %v1017, %v1017
        %1022 = vst [vmem:[#allocation2] sm:$0xf] %v1018
        %1023 = vst [vmem:[#allocation2 + $0x4] sm:$0xf] %v1019
        %v1024 = vld [vmem:[%s455] sm:$0xf]
        %v1025 = vld [vmem:[%s455 + $0x4] sm:$0xf]
        %p1026 = scmp.lt.s32.totalorder %s35, 1
        %v1027 = vld [vmem:[#allocation9] sm:$0xf]
        %v1028 = vld [vmem:[#allocation9 + $0x4] sm:$0xf]
        %v1029 = vld [vmem:[#allocation9 + $0x8] sm:$0xf]
        %v1030 = vld [vmem:[#allocation9 + $0xc] sm:$0xf]
        %v1031 = vld [vmem:[#allocation9 + $0x10] sm:$0xf]
        %v1032 = vld [vmem:[#allocation9 + $0x14] sm:$0xf]
        %v1033 = vld [vmem:[#allocation9 + $0x18] sm:$0xf]
        %v1034 = vld [vmem:[#allocation9 + $0x1c] sm:$0xf]
        %v1035 = vld [vmem:[#allocation9 + $0x20] sm:$0xf]
        %v1036 = vld [vmem:[#allocation9 + $0x24] sm:$0xf]
        %v1037 = vld [vmem:[#allocation9 + $0x28] sm:$0xf]
        %v1038 = vld [vmem:[#allocation9 + $0x2c] sm:$0xf]
        %v1039 = vld [vmem:[#allocation9 + $0x30] sm:$0xf]
        %v1040 = vld [vmem:[#allocation9 + $0x34] sm:$0xf]
        %v1041 = vld [vmem:[#allocation9 + $0x38] sm:$0xf]
        %v1042 = vld [vmem:[#allocation9 + $0x3c] sm:$0xf]
        %v1045 = vunpack.c.l.b16 %v1024
        %v1046 = vunpack.c.l.b16 %v1025
        %v1047 = vpack.c.b16 %v1046, %v1045
        %v1065 = vunpack.c.l.b16 %v1027
        %v1066 = vunpack.c.l.b16 %v1028
        %v1067 = vunpack.c.l.b16 %v1029
        %v1068 = vunpack.c.l.b16 %v1030
        %v1069 = vunpack.c.l.b16 %v1031
        %v1070 = vunpack.c.l.b16 %v1032
        %v1071 = vunpack.c.l.b16 %v1033
        %v1072 = vunpack.c.l.b16 %v1034
        %v1073 = vunpack.c.l.b16 %v1035
        %v1074 = vunpack.c.l.b16 %v1036
        %v1075 = vunpack.c.l.b16 %v1037
        %v1076 = vunpack.c.l.b16 %v1038
        %v1077 = vunpack.c.l.b16 %v1039
        %v1078 = vunpack.c.l.b16 %v1040
        %v1079 = vunpack.c.l.b16 %v1041
        %v1080 = vunpack.c.l.b16 %v1042
        %v1081 = vpack.c.b16 %v1066, %v1065
        %v1082 = vpack.c.b16 %v1068, %v1067
        %v1083 = vpack.c.b16 %v1070, %v1069
        %v1084 = vpack.c.b16 %v1072, %v1071
        %v1085 = vpack.c.b16 %v1074, %v1073
        %v1086 = vpack.c.b16 %v1076, %v1075
        %v1087 = vpack.c.b16 %v1078, %v1077
        %v1088 = vpack.c.b16 %v1080, %v1079
        %1097 = vmatprep.subr.bf16.mxu0 0
        %1098 = vmatpush1.bf16.msra.mxu0 %v1088
        %1099 = vmatprep.subr.bf16.mxu0 0
        %1100 = vmatpush1.bf16.msra.mxu0 %v1087
        %1101 = vmatprep.subr.bf16.mxu0 0
        %1102 = vmatpush1.bf16.msra.mxu0 %v1086
        %1103 = vmatprep.subr.bf16.mxu0 0
        %1104 = vmatpush1.bf16.msra.mxu0 %v1085
        %1105 = vmatprep.subr.bf16.mxu0 0
        %1106 = vmatpush1.bf16.msra.mxu0 %v1084
        %1107 = vmatprep.subr.bf16.mxu0 0
        %1108 = vmatpush1.bf16.msra.mxu0 %v1083
        %1109 = vmatprep.subr.bf16.mxu0 0
        %1110 = vmatpush1.bf16.msra.mxu0 %v1082
        %1111 = vmatprep.subr.bf16.mxu0 0
        %1112 = vmatpush1.bf16.msra.mxu0 %v1081
        %1113 = vmatprep.subr.bf16.mxu0 0
        %1114 = vmatpush2.bf16.msra.mxu0 0
        %1115 = vmatprep.subr.bf16.mxu0 0
        %1116 = vmatpush2.bf16.msra.mxu0 0
        %1117 = vmatprep.subr.bf16.mxu0 0
        %1118 = vmatpush2.bf16.msra.mxu0 0
        %1119 = vmatprep.subr.bf16.mxu0 0
        %1120 = vmatpush2.bf16.msra.mxu0 0
        %1121 = vmatprep.subr.bf16.mxu0 0
        %1122 = vmatpush2.bf16.msra.mxu0 0
        %1123 = vmatprep.subr.bf16.mxu0 0
        %1124 = vmatpush2.bf16.msra.mxu0 0
        %1125 = vmatprep.subr.bf16.mxu0 0
        %1126 = vmatpush2.bf16.msra.mxu0 0
        %1127 = vmatprep.subr.bf16.mxu0 0
        %1128 = vmatpush2.bf16.msra.mxu0 0
        %1129 = vmatprep.mubr.bf16.mxu0 0
        %1130 = vmatmul.mubr.bf16.gmra.mxu0 %v1047
        %v1131 = vpop.f32.mrf.mxu0
        %v1132 = vadd.f32 0.0, %v1131
        %v1133 = vpop.f32.mrf.mxu0
        %v1134 = vpop.f32.mrf.mxu0
        %v1135 = vadd.f32 0.0, %v1134
        %v1136 = vpop.f32.mrf.mxu0
        %1137 = vdwg.mxu0
        %v1138 = vmul.f32 %v1132, %v752
        %v1139 = vmul.f32 %v1135, %v752
        %v1140 = vadd.f32 %v1138, %v774
        %v1141 = vadd.f32 %v1139, %v774
        %v1142 = vmax.f32 %v1140, 0.0
        %v1143 = vmax.f32 %v1141, 0.0
        %s1144 = scalar_select %p1026, 1, 0
        %s1145 = scvt.s32.f32 %s1144
        %v1146 = vstv %s1145
        %v1147 = vmul.f32 %v1142, %v1146
        %v1148 = vmul.f32 %v1143, %v1146
        %v1149 = vpack.c.bf16 %v1148, %v1147
        %v1151 = vunpack.c.l.b16 %v1149
        %v1152 = vunpack.c.h.b16 %v1149
        %v1153 = vpack.c.b16 %v1151, %v1151
        %v1154 = vpack.c.b16 %v1152, %v1152
        %1157 = vst [vmem:[#allocation2 + $0x48] sm:$0xf] %v1153
        %1158 = vst [vmem:[#allocation2 + $0x4c] sm:$0xf] %v1154
        %v1159 = vlaneseq
        %v1160 = vshrl.u32 %v1159, 7
        %v1161 = vadd.s32 %v1160, 8
        %v1162 = vadd.s32 %v1160, 16
        %v1163 = vadd.s32 %v1160, 24
        %v1164 = vadd.s32 %v1160, 32
        %v1165 = vadd.s32 %v1160, 40
        %v1166 = vadd.s32 %v1160, 48
        %v1167 = vadd.s32 %v1160, 56
        %v1168 = vadd.s32 %v1160, 64
        %v1169 = vadd.s32 %v1160, 72
        %v1170 = vadd.s32 %v1160, 80
        %v1171 = vadd.s32 %v1160, 88
        %v1172 = vadd.s32 %v1160, 96
        %v1173 = vadd.s32 %v1160, 104
        %v1174 = vadd.s32 %v1160, 112
        %v1175 = vadd.s32 %v1160, 120
        %v1176 = vand.u32 %v1160, 15
        %v1177 = vand.u32 %v1161, 15
        %v1178 = vand.u32 %v1162, 15
        %v1179 = vand.u32 %v1163, 15
        %v1180 = vand.u32 %v1164, 15
        %v1181 = vand.u32 %v1165, 15
        %v1182 = vand.u32 %v1166, 15
        %v1183 = vand.u32 %v1167, 15
        %v1184 = vand.u32 %v1168, 15
        %v1185 = vand.u32 %v1169, 15
        %v1186 = vand.u32 %v1170, 15
        %v1187 = vand.u32 %v1171, 15
        %v1188 = vand.u32 %v1172, 15
        %v1189 = vand.u32 %v1173, 15
        %v1190 = vand.u32 %v1174, 15
        %v1191 = vand.u32 %v1175, 15
        %vm1192 = vcmp.gt.s32.totalorder %v1176, 0
        %vm1193 = vcmp.gt.s32.totalorder %v1177, 0
        %vm1194 = vcmp.gt.s32.totalorder %v1178, 0
        %vm1195 = vcmp.gt.s32.totalorder %v1179, 0
        %vm1196 = vcmp.gt.s32.totalorder %v1180, 0
        %vm1197 = vcmp.gt.s32.totalorder %v1181, 0
        %vm1198 = vcmp.gt.s32.totalorder %v1182, 0
        %vm1199 = vcmp.gt.s32.totalorder %v1183, 0
        %vm1200 = vcmp.gt.s32.totalorder %v1184, 0
        %vm1201 = vcmp.gt.s32.totalorder %v1185, 0
        %vm1202 = vcmp.gt.s32.totalorder %v1186, 0
        %vm1203 = vcmp.gt.s32.totalorder %v1187, 0
        %vm1204 = vcmp.gt.s32.totalorder %v1188, 0
        %vm1205 = vcmp.gt.s32.totalorder %v1189, 0
        %vm1206 = vcmp.gt.s32.totalorder %v1190, 0
        %vm1207 = vcmp.gt.s32.totalorder %v1191, 0
        %vm1208 = vcmp.lt.s32.totalorder %v1176, 15
        %vm1209 = vcmp.lt.s32.totalorder %v1177, 15
        %vm1210 = vcmp.lt.s32.totalorder %v1178, 15
        %vm1211 = vcmp.lt.s32.totalorder %v1179, 15
        %vm1212 = vcmp.lt.s32.totalorder %v1180, 15
        %vm1213 = vcmp.lt.s32.totalorder %v1181, 15
        %vm1214 = vcmp.lt.s32.totalorder %v1182, 15
        %vm1215 = vcmp.lt.s32.totalorder %v1183, 15
        %vm1216 = vcmp.lt.s32.totalorder %v1184, 15
        %vm1217 = vcmp.lt.s32.totalorder %v1185, 15
        %vm1218 = vcmp.lt.s32.totalorder %v1186, 15
        %vm1219 = vcmp.lt.s32.totalorder %v1187, 15
        %vm1220 = vcmp.lt.s32.totalorder %v1188, 15
        %vm1221 = vcmp.lt.s32.totalorder %v1189, 15
        %vm1222 = vcmp.lt.s32.totalorder %v1190, 15
        %vm1223 = vcmp.lt.s32.totalorder %v1191, 15
        %v1224 = vld [vmem:[#allocation2] sm:$0xf]
        %v1225 = vld [vmem:[#allocation2 + $0x4] sm:$0xf]
        %v1226 = vld [vmem:[#allocation2 + $0x8] sm:$0xf]
        %v1227 = vld [vmem:[#allocation2 + $0xc] sm:$0xf]
        %v1228 = vld [vmem:[#allocation2 + $0x10] sm:$0xf]
        %v1229 = vld [vmem:[#allocation2 + $0x14] sm:$0xf]
        %v1230 = vld [vmem:[#allocation2 + $0x18] sm:$0xf]
        %v1231 = vld [vmem:[#allocation2 + $0x1c] sm:$0xf]
        %v1232 = vld [vmem:[#allocation2 + $0x20] sm:$0xf]
        %v1233 = vld [vmem:[#allocation2 + $0x24] sm:$0xf]
        %v1234 = vld [vmem:[#allocation2 + $0x28] sm:$0xf]
        %v1235 = vld [vmem:[#allocation2 + $0x2c] sm:$0xf]
        %v1236 = vld [vmem:[#allocation2 + $0x30] sm:$0xf]
        %v1237 = vld [vmem:[#allocation2 + $0x34] sm:$0xf]
        %v1238 = vld [vmem:[#allocation2 + $0x38] sm:$0xf]
        %v1239 = vld [vmem:[#allocation2 + $0x3c] sm:$0xf]
        %v1240 = vld [vmem:[#allocation11] sm:$0xff]
        %v1241 = vld [vmem:[#allocation11 + $0x8] sm:$0xf]
        %v1242 = vld [vmem:[#allocation11 + $0xc] sm:$0xff]
        %v1243 = vld [vmem:[#allocation11 + $0x14] sm:$0xf]
        %v1244 = vld [vmem:[#allocation11 + $0x18] sm:$0xff]
        %v1245 = vld [vmem:[#allocation11 + $0x20] sm:$0xf]
        %v1246 = vld [vmem:[#allocation11 + $0x24] sm:$0xff]
        %v1247 = vld [vmem:[#allocation11 + $0x2c] sm:$0xf]
        %v1248 = vld [vmem:[#allocation11 + $0x30] sm:$0xff]
        %v1249 = vld [vmem:[#allocation11 + $0x38] sm:$0xf]
        %v1250 = vld [vmem:[#allocation11 + $0x3c] sm:$0xff]
        %v1251 = vld [vmem:[#allocation11 + $0x44] sm:$0xf]
        %v1252 = vld [vmem:[#allocation11 + $0x48] sm:$0xff]
        %v1253 = vld [vmem:[#allocation11 + $0x50] sm:$0xf]
        %v1254 = vld [vmem:[#allocation11 + $0x54] sm:$0xff]
        %v1255 = vld [vmem:[#allocation11 + $0x5c] sm:$0xf]
        %v1256 = vld [vmem:[#allocation11 + $0x60] sm:$0xff]
        %v1257 = vld [vmem:[#allocation11 + $0x68] sm:$0xf]
        %v1258 = vld [vmem:[#allocation11 + $0x6c] sm:$0xff]
        %v1259 = vld [vmem:[#allocation11 + $0x74] sm:$0xf]
        %v1260 = vld [vmem:[#allocation11 + $0x78] sm:$0xff]
        %v1261 = vld [vmem:[#allocation11 + $0x80] sm:$0xf]
        %v1262 = vld [vmem:[#allocation11 + $0x84] sm:$0xff]
        %v1263 = vld [vmem:[#allocation11 + $0x8c] sm:$0xf]
        %v1264 = vld [vmem:[#allocation11 + $0x90] sm:$0xff]
        %v1265 = vld [vmem:[#allocation11 + $0x98] sm:$0xf]
        %v1266 = vld [vmem:[#allocation11 + $0x9c] sm:$0xff]
        %v1267 = vld [vmem:[#allocation11 + $0xa4] sm:$0xf]
        %v1268 = vld [vmem:[#allocation11 + $0xa8] sm:$0xff]
        %v1269 = vld [vmem:[#allocation11 + $0xb0] sm:$0xf]
        %v1270 = vld [vmem:[#allocation11 + $0xb4] sm:$0xff]
        %v1271 = vld [vmem:[#allocation11 + $0xbc] sm:$0xf]
        %v1272 = vld [vmem:[%s872] sm:$0xf]
        %v1273 = vld [vmem:[%s872 + $0x4] sm:$0xf]
        %v1274 = vld [vmem:[%s872 + $0x8] sm:$0xf]
        %v1275 = vld [vmem:[%s872 + $0xc] sm:$0xf]
        %v1276 = vld [vmem:[%s872 + $0x10] sm:$0xf]
        %v1277 = vld [vmem:[%s872 + $0x14] sm:$0xf]
        %v1278 = vld [vmem:[%s872 + $0x18] sm:$0xf]
        %v1279 = vld [vmem:[%s872 + $0x1c] sm:$0xf]
        %v1280 = vld [vmem:[%s872 + $0x20] sm:$0xf]
        %v1281 = vld [vmem:[%s872 + $0x24] sm:$0xf]
        %v1282 = vld [vmem:[%s872 + $0x28] sm:$0xf]
        %v1283 = vld [vmem:[%s872 + $0x2c] sm:$0xf]
        %v1284 = vld [vmem:[%s872 + $0x30] sm:$0xf]
        %v1285 = vld [vmem:[%s872 + $0x34] sm:$0xf]
        %v1286 = vld [vmem:[%s872 + $0x38] sm:$0xf]
        %v1287 = vld [vmem:[%s872 + $0x3c] sm:$0xf]
        %s1288 = scalar_lea.vmem [#allocation11], 192
        %v1289 = vld [vmem:[%s1288] sm:$0xff]
        %v1290 = vld [vmem:[%s1288 + $0x8] sm:$0xf]
        %v1291 = vld [vmem:[%s1288 + $0xc] sm:$0xff]
        %v1292 = vld [vmem:[%s1288 + $0x14] sm:$0xf]
        %v1293 = vld [vmem:[%s1288 + $0x18] sm:$0xff]
        %v1294 = vld [vmem:[%s1288 + $0x20] sm:$0xf]
        %v1295 = vld [vmem:[%s1288 + $0x24] sm:$0xff]
        %v1296 = vld [vmem:[%s1288 + $0x2c] sm:$0xf]
        %v1297 = vld [vmem:[%s1288 + $0x30] sm:$0xff]
        %v1298 = vld [vmem:[%s1288 + $0x38] sm:$0xf]
        %v1299 = vld [vmem:[%s1288 + $0x3c] sm:$0xff]
        %v1300 = vld [vmem:[%s1288 + $0x44] sm:$0xf]
        %v1301 = vld [vmem:[%s1288 + $0x48] sm:$0xff]
        %v1302 = vld [vmem:[%s1288 + $0x50] sm:$0xf]
        %v1303 = vld [vmem:[%s1288 + $0x54] sm:$0xff]
        %v1304 = vld [vmem:[%s1288 + $0x5c] sm:$0xf]
        %v1305 = vld [vmem:[%s1288 + $0x60] sm:$0xff]
        %v1306 = vld [vmem:[%s1288 + $0x68] sm:$0xf]
        %v1307 = vld [vmem:[%s1288 + $0x6c] sm:$0xff]
        %v1308 = vld [vmem:[%s1288 + $0x74] sm:$0xf]
        %v1309 = vld [vmem:[%s1288 + $0x78] sm:$0xff]
        %v1310 = vld [vmem:[%s1288 + $0x80] sm:$0xf]
        %v1311 = vld [vmem:[%s1288 + $0x84] sm:$0xff]
        %v1312 = vld [vmem:[%s1288 + $0x8c] sm:$0xf]
        %v1313 = vld [vmem:[%s1288 + $0x90] sm:$0xff]
        %v1314 = vld [vmem:[%s1288 + $0x98] sm:$0xf]
        %v1315 = vld [vmem:[%s1288 + $0x9c] sm:$0xff]
        %v1316 = vld [vmem:[%s1288 + $0xa4] sm:$0xf]
        %v1317 = vld [vmem:[%s1288 + $0xa8] sm:$0xff]
        %v1318 = vld [vmem:[%s1288 + $0xb0] sm:$0xf]
        %v1319 = vld [vmem:[%s1288 + $0xb4] sm:$0xff]
        %v1320 = vld [vmem:[%s1288 + $0xbc] sm:$0xf]
        %v1337 = vunpack.c.l.b16 %v1272
        %v1338 = vunpack.c.l.b16 %v1273
        %v1339 = vunpack.c.l.b16 %v1274
        %v1340 = vunpack.c.l.b16 %v1275
        %v1341 = vunpack.c.l.b16 %v1276
        %v1342 = vunpack.c.l.b16 %v1277
        %v1343 = vunpack.c.l.b16 %v1278
        %v1344 = vunpack.c.l.b16 %v1279
        %v1345 = vunpack.c.l.b16 %v1280
        %v1346 = vunpack.c.l.b16 %v1281
        %v1347 = vunpack.c.l.b16 %v1282
        %v1348 = vunpack.c.l.b16 %v1283
        %v1349 = vunpack.c.l.b16 %v1284
        %v1350 = vunpack.c.l.b16 %v1285
        %v1351 = vunpack.c.l.b16 %v1286
        %v1352 = vunpack.c.l.b16 %v1287
        %v1353 = vpack.c.b16 %v1338, %v1337
        %v1354 = vpack.c.b16 %v1340, %v1339
        %v1355 = vpack.c.b16 %v1342, %v1341
        %v1356 = vpack.c.b16 %v1344, %v1343
        %v1357 = vpack.c.b16 %v1346, %v1345
        %v1358 = vpack.c.b16 %v1348, %v1347
        %v1359 = vpack.c.b16 %v1350, %v1349
        %v1360 = vpack.c.b16 %v1352, %v1351
        %v1401 = vunpack.c.l.b16 %v1289
        %v1402 = vunpack.c.h.b16 %v1289
        %v1403 = vunpack.c.l.b16 %v1290
        %v1404 = vunpack.c.l.b16 %v1291
        %v1405 = vunpack.c.h.b16 %v1291
        %v1406 = vunpack.c.l.b16 %v1292
        %v1407 = vunpack.c.l.b16 %v1293
        %v1408 = vunpack.c.h.b16 %v1293
        %v1409 = vunpack.c.l.b16 %v1294
        %v1410 = vunpack.c.l.b16 %v1295
        %v1411 = vunpack.c.h.b16 %v1295
        %v1412 = vunpack.c.l.b16 %v1296
        %v1413 = vunpack.c.l.b16 %v1297
        %v1414 = vunpack.c.h.b16 %v1297
        %v1415 = vunpack.c.l.b16 %v1298
        %v1416 = vunpack.c.l.b16 %v1299
        %v1417 = vunpack.c.h.b16 %v1299
        %v1418 = vunpack.c.l.b16 %v1300
        %v1419 = vunpack.c.l.b16 %v1301
        %v1420 = vunpack.c.h.b16 %v1301
        %v1421 = vunpack.c.l.b16 %v1302
        %v1422 = vunpack.c.l.b16 %v1303
        %v1423 = vunpack.c.h.b16 %v1303
        %v1424 = vunpack.c.l.b16 %v1304
        %v1425 = vunpack.c.l.b16 %v1305
        %v1426 = vunpack.c.h.b16 %v1305
        %v1427 = vunpack.c.l.b16 %v1306
        %v1428 = vunpack.c.l.b16 %v1307
        %v1429 = vunpack.c.h.b16 %v1307
        %v1430 = vunpack.c.l.b16 %v1308
        %v1431 = vunpack.c.l.b16 %v1309
        %v1432 = vunpack.c.h.b16 %v1309
        %v1433 = vunpack.c.l.b16 %v1310
        %v1434 = vunpack.c.l.b16 %v1311
        %v1435 = vunpack.c.h.b16 %v1311
        %v1436 = vunpack.c.l.b16 %v1312
        %v1437 = vunpack.c.l.b16 %v1313
        %v1438 = vunpack.c.h.b16 %v1313
        %v1439 = vunpack.c.l.b16 %v1314
        %v1440 = vunpack.c.l.b16 %v1315
        %v1441 = vunpack.c.h.b16 %v1315
        %v1442 = vunpack.c.l.b16 %v1316
        %v1443 = vunpack.c.l.b16 %v1317
        %v1444 = vunpack.c.h.b16 %v1317
        %v1445 = vunpack.c.l.b16 %v1318
        %v1446 = vunpack.c.l.b16 %v1319
        %v1447 = vunpack.c.h.b16 %v1319
        %v1448 = vunpack.c.l.b16 %v1320
        %v1449 = vpack.c.b16 %v1404, %v1401
        %v1450 = vpack.c.b16 %v1405, %v1402
        %v1451 = vpack.c.b16 %v1406, %v1403
        %v1452 = vpack.c.b16 %v1410, %v1407
        %v1453 = vpack.c.b16 %v1411, %v1408
        %v1454 = vpack.c.b16 %v1412, %v1409
        %v1455 = vpack.c.b16 %v1416, %v1413
        %v1456 = vpack.c.b16 %v1417, %v1414
        %v1457 = vpack.c.b16 %v1418, %v1415
        %v1458 = vpack.c.b16 %v1422, %v1419
        %v1459 = vpack.c.b16 %v1423, %v1420
        %v1460 = vpack.c.b16 %v1424, %v1421
        %v1461 = vpack.c.b16 %v1428, %v1425
        %v1462 = vpack.c.b16 %v1429, %v1426
        %v1463 = vpack.c.b16 %v1430, %v1427
        %v1464 = vpack.c.b16 %v1434, %v1431
        %v1465 = vpack.c.b16 %v1435, %v1432
        %v1466 = vpack.c.b16 %v1436, %v1433
        %v1467 = vpack.c.b16 %v1440, %v1437
        %v1468 = vpack.c.b16 %v1441, %v1438
        %v1469 = vpack.c.b16 %v1442, %v1439
        %v1470 = vpack.c.b16 %v1446, %v1443
        %v1471 = vpack.c.b16 %v1447, %v1444
        %v1472 = vpack.c.b16 %v1448, %v1445
        %1497 = vmatprep.subr.bf16.mxu0 %v1471
        %1498 = vmatpush1.bf16.msra.mxu0 %v1470
        %1499 = vmatprep.subr.bf16.mxu0 %v1468
        %1500 = vmatpush1.bf16.msra.mxu0 %v1467
        %1501 = vmatprep.subr.bf16.mxu0 %v1465
        %1502 = vmatpush1.bf16.msra.mxu0 %v1464
        %1503 = vmatprep.subr.bf16.mxu0 %v1462
        %1504 = vmatpush1.bf16.msra.mxu0 %v1461
        %1505 = vmatprep.subr.bf16.mxu0 %v1459
        %1506 = vmatpush1.bf16.msra.mxu0 %v1458
        %1507 = vmatprep.subr.bf16.mxu0 %v1456
        %1508 = vmatpush1.bf16.msra.mxu0 %v1455
        %1509 = vmatprep.subr.bf16.mxu0 %v1453
        %1510 = vmatpush1.bf16.msra.mxu0 %v1452
        %1511 = vmatprep.subr.bf16.mxu0 %v1450
        %1512 = vmatpush1.bf16.msra.mxu0 %v1449
        %1513 = vmatprep.subr.bf16.mxu0 0
        %1514 = vmatpush2.bf16.msra.mxu0 0
        %1515 = vmatprep.subr.bf16.mxu0 0
        %1516 = vmatpush2.bf16.msra.mxu0 0
        %1517 = vmatprep.subr.bf16.mxu0 0
        %1518 = vmatpush2.bf16.msra.mxu0 0
        %1519 = vmatprep.subr.bf16.mxu0 0
        %1520 = vmatpush2.bf16.msra.mxu0 0
        %1521 = vmatprep.subr.bf16.mxu0 0
        %1522 = vmatpush2.bf16.msra.mxu0 0
        %1523 = vmatprep.subr.bf16.mxu0 0
        %1524 = vmatpush2.bf16.msra.mxu0 0
        %1525 = vmatprep.subr.bf16.mxu0 0
        %1526 = vmatpush2.bf16.msra.mxu0 0
        %1527 = vmatprep.subr.bf16.mxu0 0
        %1528 = vmatpush2.bf16.msra.mxu0 0
        %1529 = vmatprep.mubr.bf16.mxu0 0
        %1530 = vmatmul.mubr.bf16.gmra.mxu0 %v1353
        %v1531 = vpop.f32.mrf.mxu0
        %v1532 = vadd.f32 0.0, %v1531
        %v1533 = vpop.f32.mrf.mxu0
        %v1534 = vadd.f32 0.0, %v1533
        %v1535 = vpop.f32.mrf.mxu0
        %v1536 = vadd.f32 0.0, %v1535
        %v1537 = vpop.f32.mrf.mxu0
        %v1538 = vadd.f32 0.0, %v1537
        %1539 = vmatprep.mubr.bf16.mxu0 0
        %1540 = vmatmul.mubr.bf16.gmra.mxu0 %v1354
        %v1541 = vpop.f32.mrf.mxu0
        %v1542 = vadd.f32 0.0, %v1541
        %v1543 = vpop.f32.mrf.mxu0
        %v1544 = vadd.f32 0.0, %v1543
        %v1545 = vpop.f32.mrf.mxu0
        %v1546 = vadd.f32 0.0, %v1545
        %v1547 = vpop.f32.mrf.mxu0
        %v1548 = vadd.f32 0.0, %v1547
        %1549 = vmatprep.mubr.bf16.mxu0 0
        %1550 = vmatmul.mubr.bf16.gmra.mxu0 %v1355
        %v1551 = vpop.f32.mrf.mxu0
        %v1552 = vadd.f32 0.0, %v1551
        %v1553 = vpop.f32.mrf.mxu0
        %v1554 = vadd.f32 0.0, %v1553
        %v1555 = vpop.f32.mrf.mxu0
        %v1556 = vadd.f32 0.0, %v1555
        %v1557 = vpop.f32.mrf.mxu0
        %v1558 = vadd.f32 0.0, %v1557
        %1559 = vmatprep.mubr.bf16.mxu0 0
        %1560 = vmatmul.mubr.bf16.gmra.mxu0 %v1356
        %v1561 = vpop.f32.mrf.mxu0
        %v1562 = vadd.f32 0.0, %v1561
        %v1563 = vpop.f32.mrf.mxu0
        %v1564 = vadd.f32 0.0, %v1563
        %v1565 = vpop.f32.mrf.mxu0
        %v1566 = vadd.f32 0.0, %v1565
        %v1567 = vpop.f32.mrf.mxu0
        %v1568 = vadd.f32 0.0, %v1567
        %1569 = vmatprep.mubr.bf16.mxu0 0
        %1570 = vmatmul.mubr.bf16.gmra.mxu0 %v1357
        %v1571 = vpop.f32.mrf.mxu0
        %v1572 = vadd.f32 0.0, %v1571
        %v1573 = vpop.f32.mrf.mxu0
        %v1574 = vadd.f32 0.0, %v1573
        %v1575 = vpop.f32.mrf.mxu0
        %v1576 = vadd.f32 0.0, %v1575
        %v1577 = vpop.f32.mrf.mxu0
        %v1578 = vadd.f32 0.0, %v1577
        %1579 = vmatprep.mubr.bf16.mxu0 0
        %1580 = vmatmul.mubr.bf16.gmra.mxu0 %v1358
        %v1581 = vpop.f32.mrf.mxu0
        %v1582 = vadd.f32 0.0, %v1581
        %v1583 = vpop.f32.mrf.mxu0
        %v1584 = vadd.f32 0.0, %v1583
        %v1585 = vpop.f32.mrf.mxu0
        %v1586 = vadd.f32 0.0, %v1585
        %v1587 = vpop.f32.mrf.mxu0
        %v1588 = vadd.f32 0.0, %v1587
        %1589 = vmatprep.mubr.bf16.mxu0 0
        %1590 = vmatmul.mubr.bf16.gmra.mxu0 %v1359
        %v1591 = vpop.f32.mrf.mxu0
        %v1592 = vadd.f32 0.0, %v1591
        %v1593 = vpop.f32.mrf.mxu0
        %v1594 = vadd.f32 0.0, %v1593
        %v1595 = vpop.f32.mrf.mxu0
        %v1596 = vadd.f32 0.0, %v1595
        %v1597 = vpop.f32.mrf.mxu0
        %v1598 = vadd.f32 0.0, %v1597
        %1599 = vmatprep.mubr.bf16.mxu0 0
        %1600 = vmatmul.mubr.bf16.gmra.mxu0 %v1360
        %v1601 = vpop.f32.mrf.mxu0
        %v1602 = vadd.f32 0.0, %v1601
        %v1603 = vpop.f32.mrf.mxu0
        %v1604 = vadd.f32 0.0, %v1603
        %v1605 = vpop.f32.mrf.mxu0
        %v1606 = vadd.f32 0.0, %v1605
        %v1607 = vpop.f32.mrf.mxu0
        %v1608 = vadd.f32 0.0, %v1607
        %1609 = vdwg.mxu0
        %1610 = vmatprep.subr.bf16.mxu0 0
        %1611 = vmatpush1.bf16.msra.mxu0 %v1472
        %1612 = vmatprep.subr.bf16.mxu0 0
        %1613 = vmatpush1.bf16.msra.mxu0 %v1469
        %1614 = vmatprep.subr.bf16.mxu0 0
        %1615 = vmatpush1.bf16.msra.mxu0 %v1466
        %1616 = vmatprep.subr.bf16.mxu0 0
        %1617 = vmatpush1.bf16.msra.mxu0 %v1463
        %1618 = vmatprep.subr.bf16.mxu0 0
        %1619 = vmatpush1.bf16.msra.mxu0 %v1460
        %1620 = vmatprep.subr.bf16.mxu0 0
        %1621 = vmatpush1.bf16.msra.mxu0 %v1457
        %1622 = vmatprep.subr.bf16.mxu0 0
        %1623 = vmatpush1.bf16.msra.mxu0 %v1454
        %1624 = vmatprep.subr.bf16.mxu0 0
        %1625 = vmatpush1.bf16.msra.mxu0 %v1451
        %1626 = vmatprep.subr.bf16.mxu0 0
        %1627 = vmatpush2.bf16.msra.mxu0 0
        %1628 = vmatprep.subr.bf16.mxu0 0
        %1629 = vmatpush2.bf16.msra.mxu0 0
        %1630 = vmatprep.subr.bf16.mxu0 0
        %1631 = vmatpush2.bf16.msra.mxu0 0
        %1632 = vmatprep.subr.bf16.mxu0 0
        %1633 = vmatpush2.bf16.msra.mxu0 0
        %1634 = vmatprep.subr.bf16.mxu0 0
        %1635 = vmatpush2.bf16.msra.mxu0 0
        %1636 = vmatprep.subr.bf16.mxu0 0
        %1637 = vmatpush2.bf16.msra.mxu0 0
        %1638 = vmatprep.subr.bf16.mxu0 0
        %1639 = vmatpush2.bf16.msra.mxu0 0
        %1640 = vmatprep.subr.bf16.mxu0 0
        %1641 = vmatpush2.bf16.msra.mxu0 0
        %1642 = vmatprep.mubr.bf16.mxu0 0
        %1643 = vmatmul.mubr.bf16.gmra.mxu0 %v1353
        %v1644 = vpop.f32.mrf.mxu0
        %v1645 = vadd.f32 0.0, %v1644
        %v1646 = vpop.f32.mrf.mxu0
        %v1647 = vpop.f32.mrf.mxu0
        %v1648 = vadd.f32 0.0, %v1647
        %v1649 = vpop.f32.mrf.mxu0
        %1650 = vmatprep.mubr.bf16.mxu0 0
        %1651 = vmatmul.mubr.bf16.gmra.mxu0 %v1354
        %v1652 = vpop.f32.mrf.mxu0
        %v1653 = vadd.f32 0.0, %v1652
        %v1654 = vpop.f32.mrf.mxu0
        %v1655 = vpop.f32.mrf.mxu0
        %v1656 = vadd.f32 0.0, %v1655
        %v1657 = vpop.f32.mrf.mxu0
        %1658 = vmatprep.mubr.bf16.mxu0 0
        %1659 = vmatmul.mubr.bf16.gmra.mxu0 %v1355
        %v1660 = vpop.f32.mrf.mxu0
        %v1661 = vadd.f32 0.0, %v1660
        %v1662 = vpop.f32.mrf.mxu0
        %v1663 = vpop.f32.mrf.mxu0
        %v1664 = vadd.f32 0.0, %v1663
        %v1665 = vpop.f32.mrf.mxu0
        %1666 = vmatprep.mubr.bf16.mxu0 0
        %1667 = vmatmul.mubr.bf16.gmra.mxu0 %v1356
        %v1668 = vpop.f32.mrf.mxu0
        %v1669 = vadd.f32 0.0, %v1668
        %v1670 = vpop.f32.mrf.mxu0
        %v1671 = vpop.f32.mrf.mxu0
        %v1672 = vadd.f32 0.0, %v1671
        %v1673 = vpop.f32.mrf.mxu0
        %1674 = vmatprep.mubr.bf16.mxu0 0
        %1675 = vmatmul.mubr.bf16.gmra.mxu0 %v1357
        %v1676 = vpop.f32.mrf.mxu0
        %v1677 = vadd.f32 0.0, %v1676
        %v1678 = vpop.f32.mrf.mxu0
        %v1679 = vpop.f32.mrf.mxu0
        %v1680 = vadd.f32 0.0, %v1679
        %v1681 = vpop.f32.mrf.mxu0
        %1682 = vmatprep.mubr.bf16.mxu0 0
        %1683 = vmatmul.mubr.bf16.gmra.mxu0 %v1358
        %v1684 = vpop.f32.mrf.mxu0
        %v1685 = vadd.f32 0.0, %v1684
        %v1686 = vpop.f32.mrf.mxu0
        %v1687 = vpop.f32.mrf.mxu0
        %v1688 = vadd.f32 0.0, %v1687
        %v1689 = vpop.f32.mrf.mxu0
        %1690 = vmatprep.mubr.bf16.mxu0 0
        %1691 = vmatmul.mubr.bf16.gmra.mxu0 %v1359
        %v1692 = vpop.f32.mrf.mxu0
        %v1693 = vadd.f32 0.0, %v1692
        %v1694 = vpop.f32.mrf.mxu0
        %v1695 = vpop.f32.mrf.mxu0
        %v1696 = vadd.f32 0.0, %v1695
        %v1697 = vpop.f32.mrf.mxu0
        %1698 = vmatprep.mubr.bf16.mxu0 0
        %1699 = vmatmul.mubr.bf16.gmra.mxu0 %v1360
        %v1700 = vpop.f32.mrf.mxu0
        %v1701 = vadd.f32 0.0, %v1700
        %v1702 = vpop.f32.mrf.mxu0
        %v1703 = vpop.f32.mrf.mxu0
        %v1704 = vadd.f32 0.0, %v1703
        %v1705 = vpop.f32.mrf.mxu0
        %1706 = vdwg.mxu0
        %v1723 = vunpack.c.l.b16 %v1224
        %v1724 = vunpack.c.l.b16 %v1225
        %v1725 = vunpack.c.l.b16 %v1226
        %v1726 = vunpack.c.l.b16 %v1227
        %v1727 = vunpack.c.l.b16 %v1228
        %v1728 = vunpack.c.l.b16 %v1229
        %v1729 = vunpack.c.l.b16 %v1230
        %v1730 = vunpack.c.l.b16 %v1231
        %v1731 = vunpack.c.l.b16 %v1232
        %v1732 = vunpack.c.l.b16 %v1233
        %v1733 = vunpack.c.l.b16 %v1234
        %v1734 = vunpack.c.l.b16 %v1235
        %v1735 = vunpack.c.l.b16 %v1236
        %v1736 = vunpack.c.l.b16 %v1237
        %v1737 = vunpack.c.l.b16 %v1238
        %v1738 = vunpack.c.l.b16 %v1239
        %v1739 = vpack.c.b16 %v1724, %v1723
        %v1740 = vpack.c.b16 %v1726, %v1725
        %v1741 = vpack.c.b16 %v1728, %v1727
        %v1742 = vpack.c.b16 %v1730, %v1729
        %v1743 = vpack.c.b16 %v1732, %v1731
        %v1744 = vpack.c.b16 %v1734, %v1733
        %v1745 = vpack.c.b16 %v1736, %v1735
        %v1746 = vpack.c.b16 %v1738, %v1737
        %v1787 = vunpack.c.l.b16 %v1240
        %v1788 = vunpack.c.h.b16 %v1240
        %v1789 = vunpack.c.l.b16 %v1241
        %v1790 = vunpack.c.l.b16 %v1242
        %v1791 = vunpack.c.h.b16 %v1242
        %v1792 = vunpack.c.l.b16 %v1243
        %v1793 = vunpack.c.l.b16 %v1244
        %v1794 = vunpack.c.h.b16 %v1244
        %v1795 = vunpack.c.l.b16 %v1245
        %v1796 = vunpack.c.l.b16 %v1246
        %v1797 = vunpack.c.h.b16 %v1246
        %v1798 = vunpack.c.l.b16 %v1247
        %v1799 = vunpack.c.l.b16 %v1248
        %v1800 = vunpack.c.h.b16 %v1248
        %v1801 = vunpack.c.l.b16 %v1249
        %v1802 = vunpack.c.l.b16 %v1250
        %v1803 = vunpack.c.h.b16 %v1250
        %v1804 = vunpack.c.l.b16 %v1251
        %v1805 = vunpack.c.l.b16 %v1252
        %v1806 = vunpack.c.h.b16 %v1252
        %v1807 = vunpack.c.l.b16 %v1253
        %v1808 = vunpack.c.l.b16 %v1254
        %v1809 = vunpack.c.h.b16 %v1254
        %v1810 = vunpack.c.l.b16 %v1255
        %v1811 = vunpack.c.l.b16 %v1256
        %v1812 = vunpack.c.h.b16 %v1256
        %v1813 = vunpack.c.l.b16 %v1257
        %v1814 = vunpack.c.l.b16 %v1258
        %v1815 = vunpack.c.h.b16 %v1258
        %v1816 = vunpack.c.l.b16 %v1259
        %v1817 = vunpack.c.l.b16 %v1260
        %v1818 = vunpack.c.h.b16 %v1260
        %v1819 = vunpack.c.l.b16 %v1261
        %v1820 = vunpack.c.l.b16 %v1262
        %v1821 = vunpack.c.h.b16 %v1262
        %v1822 = vunpack.c.l.b16 %v1263
        %v1823 = vunpack.c.l.b16 %v1264
        %v1824 = vunpack.c.h.b16 %v1264
        %v1825 = vunpack.c.l.b16 %v1265
        %v1826 = vunpack.c.l.b16 %v1266
        %v1827 = vunpack.c.h.b16 %v1266
        %v1828 = vunpack.c.l.b16 %v1267
        %v1829 = vunpack.c.l.b16 %v1268
        %v1830 = vunpack.c.h.b16 %v1268
        %v1831 = vunpack.c.l.b16 %v1269
        %v1832 = vunpack.c.l.b16 %v1270
        %v1833 = vunpack.c.h.b16 %v1270
        %v1834 = vunpack.c.l.b16 %v1271
        %v1835 = vpack.c.b16 %v1790, %v1787
        %v1836 = vpack.c.b16 %v1791, %v1788
        %v1837 = vpack.c.b16 %v1792, %v1789
        %v1838 = vpack.c.b16 %v1796, %v1793
        %v1839 = vpack.c.b16 %v1797, %v1794
        %v1840 = vpack.c.b16 %v1798, %v1795
        %v1841 = vpack.c.b16 %v1802, %v1799
        %v1842 = vpack.c.b16 %v1803, %v1800
        %v1843 = vpack.c.b16 %v1804, %v1801
        %v1844 = vpack.c.b16 %v1808, %v1805
        %v1845 = vpack.c.b16 %v1809, %v1806
        %v1846 = vpack.c.b16 %v1810, %v1807
        %v1847 = vpack.c.b16 %v1814, %v1811
        %v1848 = vpack.c.b16 %v1815, %v1812
        %v1849 = vpack.c.b16 %v1816, %v1813
        %v1850 = vpack.c.b16 %v1820, %v1817
        %v1851 = vpack.c.b16 %v1821, %v1818
        %v1852 = vpack.c.b16 %v1822, %v1819
        %v1853 = vpack.c.b16 %v1826, %v1823
        %v1854 = vpack.c.b16 %v1827, %v1824
        %v1855 = vpack.c.b16 %v1828, %v1825
        %v1856 = vpack.c.b16 %v1832, %v1829
        %v1857 = vpack.c.b16 %v1833, %v1830
        %v1858 = vpack.c.b16 %v1834, %v1831
        %1883 = vmatprep.subr.bf16.mxu0 %v1857
        %1884 = vmatpush1.bf16.msra.mxu0 %v1856
        %1885 = vmatprep.subr.bf16.mxu0 %v1854
        %1886 = vmatpush1.bf16.msra.mxu0 %v1853
        %1887 = vmatprep.subr.bf16.mxu0 %v1851
        %1888 = vmatpush1.bf16.msra.mxu0 %v1850
        %1889 = vmatprep.subr.bf16.mxu0 %v1848
        %1890 = vmatpush1.bf16.msra.mxu0 %v1847
        %1891 = vmatprep.subr.bf16.mxu0 %v1845
        %1892 = vmatpush1.bf16.msra.mxu0 %v1844
        %1893 = vmatprep.subr.bf16.mxu0 %v1842
        %1894 = vmatpush1.bf16.msra.mxu0 %v1841
        %1895 = vmatprep.subr.bf16.mxu0 %v1839
        %1896 = vmatpush1.bf16.msra.mxu0 %v1838
        %1897 = vmatprep.subr.bf16.mxu0 %v1836
        %1898 = vmatpush1.bf16.msra.mxu0 %v1835
        %1899 = vmatprep.subr.bf16.mxu0 0
        %1900 = vmatpush2.bf16.msra.mxu0 0
        %1901 = vmatprep.subr.bf16.mxu0 0
        %1902 = vmatpush2.bf16.msra.mxu0 0
        %1903 = vmatprep.subr.bf16.mxu0 0
        %1904 = vmatpush2.bf16.msra.mxu0 0
        %1905 = vmatprep.subr.bf16.mxu0 0
        %1906 = vmatpush2.bf16.msra.mxu0 0
        %1907 = vmatprep.subr.bf16.mxu0 0
        %1908 = vmatpush2.bf16.msra.mxu0 0
        %1909 = vmatprep.subr.bf16.mxu0 0
        %1910 = vmatpush2.bf16.msra.mxu0 0
        %1911 = vmatprep.subr.bf16.mxu0 0
        %1912 = vmatpush2.bf16.msra.mxu0 0
        %1913 = vmatprep.subr.bf16.mxu0 0
        %1914 = vmatpush2.bf16.msra.mxu0 0
        %1915 = vmatprep.mubr.bf16.mxu0 0
        %1916 = vmatmul.mubr.bf16.gmra.mxu0 %v1739
        %v1917 = vpop.f32.mrf.mxu0
        %v1918 = vadd.f32 %v1532, %v1917
        %v1919 = vpop.f32.mrf.mxu0
        %v1920 = vadd.f32 %v1534, %v1919
        %v1921 = vpop.f32.mrf.mxu0
        %v1922 = vadd.f32 %v1536, %v1921
        %v1923 = vpop.f32.mrf.mxu0
        %v1924 = vadd.f32 %v1538, %v1923
        %1925 = vmatprep.mubr.bf16.mxu0 0
        %1926 = vmatmul.mubr.bf16.gmra.mxu0 %v1740
        %v1927 = vpop.f32.mrf.mxu0
        %v1928 = vadd.f32 %v1542, %v1927
        %v1929 = vpop.f32.mrf.mxu0
        %v1930 = vadd.f32 %v1544, %v1929
        %v1931 = vpop.f32.mrf.mxu0
        %v1932 = vadd.f32 %v1546, %v1931
        %v1933 = vpop.f32.mrf.mxu0
        %v1934 = vadd.f32 %v1548, %v1933
        %1935 = vmatprep.mubr.bf16.mxu0 0
        %1936 = vmatmul.mubr.bf16.gmra.mxu0 %v1741
        %v1937 = vpop.f32.mrf.mxu0
        %v1938 = vadd.f32 %v1552, %v1937
        %v1939 = vpop.f32.mrf.mxu0
        %v1940 = vadd.f32 %v1554, %v1939
        %v1941 = vpop.f32.mrf.mxu0
        %v1942 = vadd.f32 %v1556, %v1941
        %v1943 = vpop.f32.mrf.mxu0
        %v1944 = vadd.f32 %v1558, %v1943
        %1945 = vmatprep.mubr.bf16.mxu0 0
        %1946 = vmatmul.mubr.bf16.gmra.mxu0 %v1742
        %v1947 = vpop.f32.mrf.mxu0
        %v1948 = vadd.f32 %v1562, %v1947
        %v1949 = vpop.f32.mrf.mxu0
        %v1950 = vadd.f32 %v1564, %v1949
        %v1951 = vpop.f32.mrf.mxu0
        %v1952 = vadd.f32 %v1566, %v1951
        %v1953 = vpop.f32.mrf.mxu0
        %v1954 = vadd.f32 %v1568, %v1953
        %1955 = vmatprep.mubr.bf16.mxu0 0
        %1956 = vmatmul.mubr.bf16.gmra.mxu0 %v1743
        %v1957 = vpop.f32.mrf.mxu0
        %v1958 = vadd.f32 %v1572, %v1957
        %v1959 = vpop.f32.mrf.mxu0
        %v1960 = vadd.f32 %v1574, %v1959
        %v1961 = vpop.f32.mrf.mxu0
        %v1962 = vadd.f32 %v1576, %v1961
        %v1963 = vpop.f32.mrf.mxu0
        %v1964 = vadd.f32 %v1578, %v1963
        %1965 = vmatprep.mubr.bf16.mxu0 0
        %1966 = vmatmul.mubr.bf16.gmra.mxu0 %v1744
        %v1967 = vpop.f32.mrf.mxu0
        %v1968 = vadd.f32 %v1582, %v1967
        %v1969 = vpop.f32.mrf.mxu0
        %v1970 = vadd.f32 %v1584, %v1969
        %v1971 = vpop.f32.mrf.mxu0
        %v1972 = vadd.f32 %v1586, %v1971
        %v1973 = vpop.f32.mrf.mxu0
        %v1974 = vadd.f32 %v1588, %v1973
        %1975 = vmatprep.mubr.bf16.mxu0 0
        %1976 = vmatmul.mubr.bf16.gmra.mxu0 %v1745
        %v1977 = vpop.f32.mrf.mxu0
        %v1978 = vadd.f32 %v1592, %v1977
        %v1979 = vpop.f32.mrf.mxu0
        %v1980 = vadd.f32 %v1594, %v1979
        %v1981 = vpop.f32.mrf.mxu0
        %v1982 = vadd.f32 %v1596, %v1981
        %v1983 = vpop.f32.mrf.mxu0
        %v1984 = vadd.f32 %v1598, %v1983
        %1985 = vmatprep.mubr.bf16.mxu0 0
        %1986 = vmatmul.mubr.bf16.gmra.mxu0 %v1746
        %v1987 = vpop.f32.mrf.mxu0
        %v1988 = vadd.f32 %v1602, %v1987
        %v1989 = vpop.f32.mrf.mxu0
        %v1990 = vadd.f32 %v1604, %v1989
        %v1991 = vpop.f32.mrf.mxu0
        %v1992 = vadd.f32 %v1606, %v1991
        %v1993 = vpop.f32.mrf.mxu0
        %v1994 = vadd.f32 %v1608, %v1993
        %1995 = vdwg.mxu0
        %1996 = vmatprep.subr.bf16.mxu0 0
        %1997 = vmatpush1.bf16.msra.mxu0 %v1858
        %1998 = vmatprep.subr.bf16.mxu0 0
        %1999 = vmatpush1.bf16.msra.mxu0 %v1855
        %2000 = vmatprep.subr.bf16.mxu0 0
        %2001 = vmatpush1.bf16.msra.mxu0 %v1852
        %2002 = vmatprep.subr.bf16.mxu0 0
        %2003 = vmatpush1.bf16.msra.mxu0 %v1849
        %2004 = vmatprep.subr.bf16.mxu0 0
        %2005 = vmatpush1.bf16.msra.mxu0 %v1846
        %2006 = vmatprep.subr.bf16.mxu0 0
        %2007 = vmatpush1.bf16.msra.mxu0 %v1843
        %2008 = vmatprep.subr.bf16.mxu0 0
        %2009 = vmatpush1.bf16.msra.mxu0 %v1840
        %2010 = vmatprep.subr.bf16.mxu0 0
        %2011 = vmatpush1.bf16.msra.mxu0 %v1837
        %2012 = vmatprep.subr.bf16.mxu0 0
        %2013 = vmatpush2.bf16.msra.mxu0 0
        %2014 = vmatprep.subr.bf16.mxu0 0
        %2015 = vmatpush2.bf16.msra.mxu0 0
        %2016 = vmatprep.subr.bf16.mxu0 0
        %2017 = vmatpush2.bf16.msra.mxu0 0
        %2018 = vmatprep.subr.bf16.mxu0 0
        %2019 = vmatpush2.bf16.msra.mxu0 0
        %2020 = vmatprep.subr.bf16.mxu0 0
        %2021 = vmatpush2.bf16.msra.mxu0 0
        %2022 = vmatprep.subr.bf16.mxu0 0
        %2023 = vmatpush2.bf16.msra.mxu0 0
        %2024 = vmatprep.subr.bf16.mxu0 0
        %2025 = vmatpush2.bf16.msra.mxu0 0
        %2026 = vmatprep.subr.bf16.mxu0 0
        %2027 = vmatpush2.bf16.msra.mxu0 0
        %2028 = vmatprep.mubr.bf16.mxu0 0
        %2029 = vmatmul.mubr.bf16.gmra.mxu0 %v1739
        %v2030 = vpop.f32.mrf.mxu0
        %v2031 = vadd.f32 %v1645, %v2030
        %v2032 = vpop.f32.mrf.mxu0
        %v2033 = vpop.f32.mrf.mxu0
        %v2034 = vadd.f32 %v1648, %v2033
        %v2035 = vpop.f32.mrf.mxu0
        %2036 = vmatprep.mubr.bf16.mxu0 0
        %2037 = vmatmul.mubr.bf16.gmra.mxu0 %v1740
        %v2038 = vpop.f32.mrf.mxu0
        %v2039 = vadd.f32 %v1653, %v2038
        %v2040 = vpop.f32.mrf.mxu0
        %v2041 = vpop.f32.mrf.mxu0
        %v2042 = vadd.f32 %v1656, %v2041
        %v2043 = vpop.f32.mrf.mxu0
        %2044 = vmatprep.mubr.bf16.mxu0 0
        %2045 = vmatmul.mubr.bf16.gmra.mxu0 %v1741
        %v2046 = vpop.f32.mrf.mxu0
        %v2047 = vadd.f32 %v1661, %v2046
        %v2048 = vpop.f32.mrf.mxu0
        %v2049 = vpop.f32.mrf.mxu0
        %v2050 = vadd.f32 %v1664, %v2049
        %v2051 = vpop.f32.mrf.mxu0
        %2052 = vmatprep.mubr.bf16.mxu0 0
        %2053 = vmatmul.mubr.bf16.gmra.mxu0 %v1742
        %v2054 = vpop.f32.mrf.mxu0
        %v2055 = vadd.f32 %v1669, %v2054
        %v2056 = vpop.f32.mrf.mxu0
        %v2057 = vpop.f32.mrf.mxu0
        %v2058 = vadd.f32 %v1672, %v2057
        %v2059 = vpop.f32.mrf.mxu0
        %2060 = vmatprep.mubr.bf16.mxu0 0
        %2061 = vmatmul.mubr.bf16.gmra.mxu0 %v1743
        %v2062 = vpop.f32.mrf.mxu0
        %v2063 = vadd.f32 %v1677, %v2062
        %v2064 = vpop.f32.mrf.mxu0
        %v2065 = vpop.f32.mrf.mxu0
        %v2066 = vadd.f32 %v1680, %v2065
        %v2067 = vpop.f32.mrf.mxu0
        %2068 = vmatprep.mubr.bf16.mxu0 0
        %2069 = vmatmul.mubr.bf16.gmra.mxu0 %v1744
        %v2070 = vpop.f32.mrf.mxu0
        %v2071 = vadd.f32 %v1685, %v2070
        %v2072 = vpop.f32.mrf.mxu0
        %v2073 = vpop.f32.mrf.mxu0
        %v2074 = vadd.f32 %v1688, %v2073
        %v2075 = vpop.f32.mrf.mxu0
        %2076 = vmatprep.mubr.bf16.mxu0 0
        %2077 = vmatmul.mubr.bf16.gmra.mxu0 %v1745
        %v2078 = vpop.f32.mrf.mxu0
        %v2079 = vadd.f32 %v1693, %v2078
        %v2080 = vpop.f32.mrf.mxu0
        %v2081 = vpop.f32.mrf.mxu0
        %v2082 = vadd.f32 %v1696, %v2081
        %v2083 = vpop.f32.mrf.mxu0
        %2084 = vmatprep.mubr.bf16.mxu0 0
        %2085 = vmatmul.mubr.bf16.gmra.mxu0 %v1746
        %v2086 = vpop.f32.mrf.mxu0
        %v2087 = vadd.f32 %v1701, %v2086
        %v2088 = vpop.f32.mrf.mxu0
        %v2089 = vpop.f32.mrf.mxu0
        %v2090 = vadd.f32 %v1704, %v2089
        %v2091 = vpop.f32.mrf.mxu0
        %2092 = vdwg.mxu0
        %s2093 = scalar_lea.vmem [#allocation2], 16
        %v2094 = vld [vmem:[%s2093] sm:$0xf]
        %v2095 = vld [vmem:[%s2093 + $0x4] sm:$0xf]
        %v2096 = vld [vmem:[%s2093 + $0x8] sm:$0xf]
        %v2097 = vld [vmem:[%s2093 + $0xc] sm:$0xf]
        %v2098 = vld [vmem:[%s2093 + $0x10] sm:$0xf]
        %v2099 = vld [vmem:[%s2093 + $0x14] sm:$0xf]
        %v2100 = vld [vmem:[%s2093 + $0x18] sm:$0xf]
        %v2101 = vld [vmem:[%s2093 + $0x1c] sm:$0xf]
        %v2102 = vld [vmem:[%s2093 + $0x20] sm:$0xf]
        %v2103 = vld [vmem:[%s2093 + $0x24] sm:$0xf]
        %v2104 = vld [vmem:[%s2093 + $0x28] sm:$0xf]
        %v2105 = vld [vmem:[%s2093 + $0x2c] sm:$0xf]
        %v2106 = vld [vmem:[%s2093 + $0x30] sm:$0xf]
        %v2107 = vld [vmem:[%s2093 + $0x34] sm:$0xf]
        %v2108 = vld [vmem:[%s2093 + $0x38] sm:$0xf]
        %v2109 = vld [vmem:[%s2093 + $0x3c] sm:$0xf]
        %s2110 = scalar_lea.vmem [#allocation11], 384
        %v2111 = vld [vmem:[%s2110] sm:$0xff]
        %v2112 = vld [vmem:[%s2110 + $0x8] sm:$0xf]
        %v2113 = vld [vmem:[%s2110 + $0xc] sm:$0xff]
        %v2114 = vld [vmem:[%s2110 + $0x14] sm:$0xf]
        %v2115 = vld [vmem:[%s2110 + $0x18] sm:$0xff]
        %v2116 = vld [vmem:[%s2110 + $0x20] sm:$0xf]
        %v2117 = vld [vmem:[%s2110 + $0x24] sm:$0xff]
        %v2118 = vld [vmem:[%s2110 + $0x2c] sm:$0xf]
        %v2119 = vld [vmem:[%s2110 + $0x30] sm:$0xff]
        %v2120 = vld [vmem:[%s2110 + $0x38] sm:$0xf]
        %v2121 = vld [vmem:[%s2110 + $0x3c] sm:$0xff]
        %v2122 = vld [vmem:[%s2110 + $0x44] sm:$0xf]
        %v2123 = vld [vmem:[%s2110 + $0x48] sm:$0xff]
        %v2124 = vld [vmem:[%s2110 + $0x50] sm:$0xf]
        %v2125 = vld [vmem:[%s2110 + $0x54] sm:$0xff]
        %v2126 = vld [vmem:[%s2110 + $0x5c] sm:$0xf]
        %v2127 = vld [vmem:[%s2110 + $0x60] sm:$0xff]
        %v2128 = vld [vmem:[%s2110 + $0x68] sm:$0xf]
        %v2129 = vld [vmem:[%s2110 + $0x6c] sm:$0xff]
        %v2130 = vld [vmem:[%s2110 + $0x74] sm:$0xf]
        %v2131 = vld [vmem:[%s2110 + $0x78] sm:$0xff]
        %v2132 = vld [vmem:[%s2110 + $0x80] sm:$0xf]
        %v2133 = vld [vmem:[%s2110 + $0x84] sm:$0xff]
        %v2134 = vld [vmem:[%s2110 + $0x8c] sm:$0xf]
        %v2135 = vld [vmem:[%s2110 + $0x90] sm:$0xff]
        %v2136 = vld [vmem:[%s2110 + $0x98] sm:$0xf]
        %v2137 = vld [vmem:[%s2110 + $0x9c] sm:$0xff]
        %v2138 = vld [vmem:[%s2110 + $0xa4] sm:$0xf]
        %v2139 = vld [vmem:[%s2110 + $0xa8] sm:$0xff]
        %v2140 = vld [vmem:[%s2110 + $0xb0] sm:$0xf]
        %v2141 = vld [vmem:[%s2110 + $0xb4] sm:$0xff]
        %v2142 = vld [vmem:[%s2110 + $0xbc] sm:$0xf]
        %v2159 = vunpack.c.l.b16 %v2094
        %v2160 = vunpack.c.l.b16 %v2095
        %v2161 = vunpack.c.l.b16 %v2096
        %v2162 = vunpack.c.l.b16 %v2097
        %v2163 = vunpack.c.l.b16 %v2098
        %v2164 = vunpack.c.l.b16 %v2099
        %v2165 = vunpack.c.l.b16 %v2100
        %v2166 = vunpack.c.l.b16 %v2101
        %v2167 = vunpack.c.l.b16 %v2102
        %v2168 = vunpack.c.l.b16 %v2103
        %v2169 = vunpack.c.l.b16 %v2104
        %v2170 = vunpack.c.l.b16 %v2105
        %v2171 = vunpack.c.l.b16 %v2106
        %v2172 = vunpack.c.l.b16 %v2107
        %v2173 = vunpack.c.l.b16 %v2108
        %v2174 = vunpack.c.l.b16 %v2109
        %v2175 = vpack.c.b16 %v2160, %v2159
        %v2176 = vpack.c.b16 %v2162, %v2161
        %v2177 = vpack.c.b16 %v2164, %v2163
        %v2178 = vpack.c.b16 %v2166, %v2165
        %v2179 = vpack.c.b16 %v2168, %v2167
        %v2180 = vpack.c.b16 %v2170, %v2169
        %v2181 = vpack.c.b16 %v2172, %v2171
        %v2182 = vpack.c.b16 %v2174, %v2173
        %v2223 = vunpack.c.l.b16 %v2111
        %v2224 = vunpack.c.h.b16 %v2111
        %v2225 = vunpack.c.l.b16 %v2112
        %v2226 = vunpack.c.l.b16 %v2113
        %v2227 = vunpack.c.h.b16 %v2113
        %v2228 = vunpack.c.l.b16 %v2114
        %v2229 = vunpack.c.l.b16 %v2115
        %v2230 = vunpack.c.h.b16 %v2115
        %v2231 = vunpack.c.l.b16 %v2116
        %v2232 = vunpack.c.l.b16 %v2117
        %v2233 = vunpack.c.h.b16 %v2117
        %v2234 = vunpack.c.l.b16 %v2118
        %v2235 = vunpack.c.l.b16 %v2119
        %v2236 = vunpack.c.h.b16 %v2119
        %v2237 = vunpack.c.l.b16 %v2120
        %v2238 = vunpack.c.l.b16 %v2121
        %v2239 = vunpack.c.h.b16 %v2121
        %v2240 = vunpack.c.l.b16 %v2122
        %v2241 = vunpack.c.l.b16 %v2123
        %v2242 = vunpack.c.h.b16 %v2123
        %v2243 = vunpack.c.l.b16 %v2124
        %v2244 = vunpack.c.l.b16 %v2125
        %v2245 = vunpack.c.h.b16 %v2125
        %v2246 = vunpack.c.l.b16 %v2126
        %v2247 = vunpack.c.l.b16 %v2127
        %v2248 = vunpack.c.h.b16 %v2127
        %v2249 = vunpack.c.l.b16 %v2128
        %v2250 = vunpack.c.l.b16 %v2129
        %v2251 = vunpack.c.h.b16 %v2129
        %v2252 = vunpack.c.l.b16 %v2130
        %v2253 = vunpack.c.l.b16 %v2131
        %v2254 = vunpack.c.h.b16 %v2131
        %v2255 = vunpack.c.l.b16 %v2132
        %v2256 = vunpack.c.l.b16 %v2133
        %v2257 = vunpack.c.h.b16 %v2133
        %v2258 = vunpack.c.l.b16 %v2134
        %v2259 = vunpack.c.l.b16 %v2135
        %v2260 = vunpack.c.h.b16 %v2135
        %v2261 = vunpack.c.l.b16 %v2136
        %v2262 = vunpack.c.l.b16 %v2137
        %v2263 = vunpack.c.h.b16 %v2137
        %v2264 = vunpack.c.l.b16 %v2138
        %v2265 = vunpack.c.l.b16 %v2139
        %v2266 = vunpack.c.h.b16 %v2139
        %v2267 = vunpack.c.l.b16 %v2140
        %v2268 = vunpack.c.l.b16 %v2141
        %v2269 = vunpack.c.h.b16 %v2141
        %v2270 = vunpack.c.l.b16 %v2142
        %v2271 = vpack.c.b16 %v2226, %v2223
        %v2272 = vpack.c.b16 %v2227, %v2224
        %v2273 = vpack.c.b16 %v2228, %v2225
        %v2274 = vpack.c.b16 %v2232, %v2229
        %v2275 = vpack.c.b16 %v2233, %v2230
        %v2276 = vpack.c.b16 %v2234, %v2231
        %v2277 = vpack.c.b16 %v2238, %v2235
        %v2278 = vpack.c.b16 %v2239, %v2236
        %v2279 = vpack.c.b16 %v2240, %v2237
        %v2280 = vpack.c.b16 %v2244, %v2241
        %v2281 = vpack.c.b16 %v2245, %v2242
        %v2282 = vpack.c.b16 %v2246, %v2243
        %v2283 = vpack.c.b16 %v2250, %v2247
        %v2284 = vpack.c.b16 %v2251, %v2248
        %v2285 = vpack.c.b16 %v2252, %v2249
        %v2286 = vpack.c.b16 %v2256, %v2253
        %v2287 = vpack.c.b16 %v2257, %v2254
        %v2288 = vpack.c.b16 %v2258, %v2255
        %v2289 = vpack.c.b16 %v2262, %v2259
        %v2290 = vpack.c.b16 %v2263, %v2260
        %v2291 = vpack.c.b16 %v2264, %v2261
        %v2292 = vpack.c.b16 %v2268, %v2265
        %v2293 = vpack.c.b16 %v2269, %v2266
        %v2294 = vpack.c.b16 %v2270, %v2267
        %2319 = vmatprep.subr.bf16.mxu0 %v2293
        %2320 = vmatpush1.bf16.msra.mxu0 %v2292
        %2321 = vmatprep.subr.bf16.mxu0 %v2290
        %2322 = vmatpush1.bf16.msra.mxu0 %v2289
        %2323 = vmatprep.subr.bf16.mxu0 %v2287
        %2324 = vmatpush1.bf16.msra.mxu0 %v2286
        %2325 = vmatprep.subr.bf16.mxu0 %v2284
        %2326 = vmatpush1.bf16.msra.mxu0 %v2283
        %2327 = vmatprep.subr.bf16.mxu0 %v2281
        %2328 = vmatpush1.bf16.msra.mxu0 %v2280
        %2329 = vmatprep.subr.bf16.mxu0 %v2278
        %2330 = vmatpush1.bf16.msra.mxu0 %v2277
        %2331 = vmatprep.subr.bf16.mxu0 %v2275
        %2332 = vmatpush1.bf16.msra.mxu0 %v2274
        %2333 = vmatprep.subr.bf16.mxu0 %v2272
        %2334 = vmatpush1.bf16.msra.mxu0 %v2271
        %2335 = vmatprep.subr.bf16.mxu0 0
        %2336 = vmatpush2.bf16.msra.mxu0 0
        %2337 = vmatprep.subr.bf16.mxu0 0
        %2338 = vmatpush2.bf16.msra.mxu0 0
        %2339 = vmatprep.subr.bf16.mxu0 0
        %2340 = vmatpush2.bf16.msra.mxu0 0
        %2341 = vmatprep.subr.bf16.mxu0 0
        %2342 = vmatpush2.bf16.msra.mxu0 0
        %2343 = vmatprep.subr.bf16.mxu0 0
        %2344 = vmatpush2.bf16.msra.mxu0 0
        %2345 = vmatprep.subr.bf16.mxu0 0
        %2346 = vmatpush2.bf16.msra.mxu0 0
        %2347 = vmatprep.subr.bf16.mxu0 0
        %2348 = vmatpush2.bf16.msra.mxu0 0
        %2349 = vmatprep.subr.bf16.mxu0 0
        %2350 = vmatpush2.bf16.msra.mxu0 0
        %2351 = vmatprep.mubr.bf16.mxu0 0
        %2352 = vmatmul.mubr.bf16.gmra.mxu0 %v2175
        %v2353 = vpop.f32.mrf.mxu0
        %v2354 = vadd.f32 0.0, %v2353
        %v2355 = vpop.f32.mrf.mxu0
        %v2356 = vadd.f32 0.0, %v2355
        %v2357 = vpop.f32.mrf.mxu0
        %v2358 = vadd.f32 0.0, %v2357
        %v2359 = vpop.f32.mrf.mxu0
        %v2360 = vadd.f32 0.0, %v2359
        %2361 = vmatprep.mubr.bf16.mxu0 0
        %2362 = vmatmul.mubr.bf16.gmra.mxu0 %v2176
        %v2363 = vpop.f32.mrf.mxu0
        %v2364 = vadd.f32 0.0, %v2363
        %v2365 = vpop.f32.mrf.mxu0
        %v2366 = vadd.f32 0.0, %v2365
        %v2367 = vpop.f32.mrf.mxu0
        %v2368 = vadd.f32 0.0, %v2367
        %v2369 = vpop.f32.mrf.mxu0
        %v2370 = vadd.f32 0.0, %v2369
        %2371 = vmatprep.mubr.bf16.mxu0 0
        %2372 = vmatmul.mubr.bf16.gmra.mxu0 %v2177
        %v2373 = vpop.f32.mrf.mxu0
        %v2374 = vadd.f32 0.0, %v2373
        %v2375 = vpop.f32.mrf.mxu0
        %v2376 = vadd.f32 0.0, %v2375
        %v2377 = vpop.f32.mrf.mxu0
        %v2378 = vadd.f32 0.0, %v2377
        %v2379 = vpop.f32.mrf.mxu0
        %v2380 = vadd.f32 0.0, %v2379
        %2381 = vmatprep.mubr.bf16.mxu0 0
        %2382 = vmatmul.mubr.bf16.gmra.mxu0 %v2178
        %v2383 = vpop.f32.mrf.mxu0
        %v2384 = vadd.f32 0.0, %v2383
        %v2385 = vpop.f32.mrf.mxu0
        %v2386 = vadd.f32 0.0, %v2385
        %v2387 = vpop.f32.mrf.mxu0
        %v2388 = vadd.f32 0.0, %v2387
        %v2389 = vpop.f32.mrf.mxu0
        %v2390 = vadd.f32 0.0, %v2389
        %2391 = vmatprep.mubr.bf16.mxu0 0
        %2392 = vmatmul.mubr.bf16.gmra.mxu0 %v2179
        %v2393 = vpop.f32.mrf.mxu0
        %v2394 = vadd.f32 0.0, %v2393
        %v2395 = vpop.f32.mrf.mxu0
        %v2396 = vadd.f32 0.0, %v2395
        %v2397 = vpop.f32.mrf.mxu0
        %v2398 = vadd.f32 0.0, %v2397
        %v2399 = vpop.f32.mrf.mxu0
        %v2400 = vadd.f32 0.0, %v2399
        %2401 = vmatprep.mubr.bf16.mxu0 0
        %2402 = vmatmul.mubr.bf16.gmra.mxu0 %v2180
        %v2403 = vpop.f32.mrf.mxu0
        %v2404 = vadd.f32 0.0, %v2403
        %v2405 = vpop.f32.mrf.mxu0
        %v2406 = vadd.f32 0.0, %v2405
        %v2407 = vpop.f32.mrf.mxu0
        %v2408 = vadd.f32 0.0, %v2407
        %v2409 = vpop.f32.mrf.mxu0
        %v2410 = vadd.f32 0.0, %v2409
        %2411 = vmatprep.mubr.bf16.mxu0 0
        %2412 = vmatmul.mubr.bf16.gmra.mxu0 %v2181
        %v2413 = vpop.f32.mrf.mxu0
        %v2414 = vadd.f32 0.0, %v2413
        %v2415 = vpop.f32.mrf.mxu0
        %v2416 = vadd.f32 0.0, %v2415
        %v2417 = vpop.f32.mrf.mxu0
        %v2418 = vadd.f32 0.0, %v2417
        %v2419 = vpop.f32.mrf.mxu0
        %v2420 = vadd.f32 0.0, %v2419
        %2421 = vmatprep.mubr.bf16.mxu0 0
        %2422 = vmatmul.mubr.bf16.gmra.mxu0 %v2182
        %v2423 = vpop.f32.mrf.mxu0
        %v2424 = vadd.f32 0.0, %v2423
        %v2425 = vpop.f32.mrf.mxu0
        %v2426 = vadd.f32 0.0, %v2425
        %v2427 = vpop.f32.mrf.mxu0
        %v2428 = vadd.f32 0.0, %v2427
        %v2429 = vpop.f32.mrf.mxu0
        %v2430 = vadd.f32 0.0, %v2429
        %2431 = vdwg.mxu0
        %2432 = vmatprep.subr.bf16.mxu0 0
        %2433 = vmatpush1.bf16.msra.mxu0 %v2294
        %2434 = vmatprep.subr.bf16.mxu0 0
        %2435 = vmatpush1.bf16.msra.mxu0 %v2291
        %2436 = vmatprep.subr.bf16.mxu0 0
        %2437 = vmatpush1.bf16.msra.mxu0 %v2288
        %2438 = vmatprep.subr.bf16.mxu0 0
        %2439 = vmatpush1.bf16.msra.mxu0 %v2285
        %2440 = vmatprep.subr.bf16.mxu0 0
        %2441 = vmatpush1.bf16.msra.mxu0 %v2282
        %2442 = vmatprep.subr.bf16.mxu0 0
        %2443 = vmatpush1.bf16.msra.mxu0 %v2279
        %2444 = vmatprep.subr.bf16.mxu0 0
        %2445 = vmatpush1.bf16.msra.mxu0 %v2276
        %2446 = vmatprep.subr.bf16.mxu0 0
        %2447 = vmatpush1.bf16.msra.mxu0 %v2273
        %2448 = vmatprep.subr.bf16.mxu0 0
        %2449 = vmatpush2.bf16.msra.mxu0 0
        %2450 = vmatprep.subr.bf16.mxu0 0
        %2451 = vmatpush2.bf16.msra.mxu0 0
        %2452 = vmatprep.subr.bf16.mxu0 0
        %2453 = vmatpush2.bf16.msra.mxu0 0
        %2454 = vmatprep.subr.bf16.mxu0 0
        %2455 = vmatpush2.bf16.msra.mxu0 0
        %2456 = vmatprep.subr.bf16.mxu0 0
        %2457 = vmatpush2.bf16.msra.mxu0 0
        %2458 = vmatprep.subr.bf16.mxu0 0
        %2459 = vmatpush2.bf16.msra.mxu0 0
        %2460 = vmatprep.subr.bf16.mxu0 0
        %2461 = vmatpush2.bf16.msra.mxu0 0
        %2462 = vmatprep.subr.bf16.mxu0 0
        %2463 = vmatpush2.bf16.msra.mxu0 0
        %2464 = vmatprep.mubr.bf16.mxu0 0
        %2465 = vmatmul.mubr.bf16.gmra.mxu0 %v2175
        %v2466 = vpop.f32.mrf.mxu0
        %v2467 = vadd.f32 0.0, %v2466
        %v2468 = vpop.f32.mrf.mxu0
        %v2469 = vpop.f32.mrf.mxu0
        %v2470 = vadd.f32 0.0, %v2469
        %v2471 = vpop.f32.mrf.mxu0
        %2472 = vmatprep.mubr.bf16.mxu0 0
        %2473 = vmatmul.mubr.bf16.gmra.mxu0 %v2176
        %v2474 = vpop.f32.mrf.mxu0
        %v2475 = vadd.f32 0.0, %v2474
        %v2476 = vpop.f32.mrf.mxu0
        %v2477 = vpop.f32.mrf.mxu0
        %v2478 = vadd.f32 0.0, %v2477
        %v2479 = vpop.f32.mrf.mxu0
        %2480 = vmatprep.mubr.bf16.mxu0 0
        %2481 = vmatmul.mubr.bf16.gmra.mxu0 %v2177
        %v2482 = vpop.f32.mrf.mxu0
        %v2483 = vadd.f32 0.0, %v2482
        %v2484 = vpop.f32.mrf.mxu0
        %v2485 = vpop.f32.mrf.mxu0
        %v2486 = vadd.f32 0.0, %v2485
        %v2487 = vpop.f32.mrf.mxu0
        %2488 = vmatprep.mubr.bf16.mxu0 0
        %2489 = vmatmul.mubr.bf16.gmra.mxu0 %v2178
        %v2490 = vpop.f32.mrf.mxu0
        %v2491 = vadd.f32 0.0, %v2490
        %v2492 = vpop.f32.mrf.mxu0
        %v2493 = vpop.f32.mrf.mxu0
        %v2494 = vadd.f32 0.0, %v2493
        %v2495 = vpop.f32.mrf.mxu0
        %2496 = vmatprep.mubr.bf16.mxu0 0
        %2497 = vmatmul.mubr.bf16.gmra.mxu0 %v2179
        %v2498 = vpop.f32.mrf.mxu0
        %v2499 = vadd.f32 0.0, %v2498
        %v2500 = vpop.f32.mrf.mxu0
        %v2501 = vpop.f32.mrf.mxu0
        %v2502 = vadd.f32 0.0, %v2501
        %v2503 = vpop.f32.mrf.mxu0
        %2504 = vmatprep.mubr.bf16.mxu0 0
        %2505 = vmatmul.mubr.bf16.gmra.mxu0 %v2180
        %v2506 = vpop.f32.mrf.mxu0
        %v2507 = vadd.f32 0.0, %v2506
        %v2508 = vpop.f32.mrf.mxu0
        %v2509 = vpop.f32.mrf.mxu0
        %v2510 = vadd.f32 0.0, %v2509
        %v2511 = vpop.f32.mrf.mxu0
        %2512 = vmatprep.mubr.bf16.mxu0 0
        %2513 = vmatmul.mubr.bf16.gmra.mxu0 %v2181
        %v2514 = vpop.f32.mrf.mxu0
        %v2515 = vadd.f32 0.0, %v2514
        %v2516 = vpop.f32.mrf.mxu0
        %v2517 = vpop.f32.mrf.mxu0
        %v2518 = vadd.f32 0.0, %v2517
        %v2519 = vpop.f32.mrf.mxu0
        %2520 = vmatprep.mubr.bf16.mxu0 0
        %2521 = vmatmul.mubr.bf16.gmra.mxu0 %v2182
        %v2522 = vpop.f32.mrf.mxu0
        %v2523 = vadd.f32 0.0, %v2522
        %v2524 = vpop.f32.mrf.mxu0
        %v2525 = vpop.f32.mrf.mxu0
        %v2526 = vadd.f32 0.0, %v2525
        %v2527 = vpop.f32.mrf.mxu0
        %2528 = vdwg.mxu0
        %v2529 = vadd.f32 %v1918, %v2354
        %v2530 = vadd.f32 %v1920, %v2356
        %v2531 = vadd.f32 %v2031, %v2467
        %v2532 = vadd.f32 %v1922, %v2358
        %v2533 = vadd.f32 %v1924, %v2360
        %v2534 = vadd.f32 %v2034, %v2470
        %v2535 = vadd.f32 %v1928, %v2364
        %v2536 = vadd.f32 %v1930, %v2366
        %v2537 = vadd.f32 %v2039, %v2475
        %v2538 = vadd.f32 %v1932, %v2368
        %v2539 = vadd.f32 %v1934, %v2370
        %v2540 = vadd.f32 %v2042, %v2478
        %v2541 = vadd.f32 %v1938, %v2374
        %v2542 = vadd.f32 %v1940, %v2376
        %v2543 = vadd.f32 %v2047, %v2483
        %v2544 = vadd.f32 %v1942, %v2378
        %v2545 = vadd.f32 %v1944, %v2380
        %v2546 = vadd.f32 %v2050, %v2486
        %v2547 = vadd.f32 %v1948, %v2384
        %v2548 = vadd.f32 %v1950, %v2386
        %v2549 = vadd.f32 %v2055, %v2491
        %v2550 = vadd.f32 %v1952, %v2388
        %v2551 = vadd.f32 %v1954, %v2390
        %v2552 = vadd.f32 %v2058, %v2494
        %v2553 = vadd.f32 %v1958, %v2394
        %v2554 = vadd.f32 %v1960, %v2396
        %v2555 = vadd.f32 %v2063, %v2499
        %v2556 = vadd.f32 %v1962, %v2398
        %v2557 = vadd.f32 %v1964, %v2400
        %v2558 = vadd.f32 %v2066, %v2502
        %v2559 = vadd.f32 %v1968, %v2404
        %v2560 = vadd.f32 %v1970, %v2406
        %v2561 = vadd.f32 %v2071, %v2507
        %v2562 = vadd.f32 %v1972, %v2408
        %v2563 = vadd.f32 %v1974, %v2410
        %v2564 = vadd.f32 %v2074, %v2510
        %v2565 = vadd.f32 %v1978, %v2414
        %v2566 = vadd.f32 %v1980, %v2416
        %v2567 = vadd.f32 %v2079, %v2515
        %v2568 = vadd.f32 %v1982, %v2418
        %v2569 = vadd.f32 %v1984, %v2420
        %v2570 = vadd.f32 %v2082, %v2518
        %v2571 = vadd.f32 %v1988, %v2424
        %v2572 = vadd.f32 %v1990, %v2426
        %v2573 = vadd.f32 %v2087, %v2523
        %v2574 = vadd.f32 %v1992, %v2428
        %v2575 = vadd.f32 %v1994, %v2430
        %v2576 = vadd.f32 %v2090, %v2526
        %v2577 = vrot.slane %v2530, 7
        %v2578 = vrot.slane %v2533, 7
        %v2579 = vrot.slane %v2536, 7
        %v2580 = vrot.slane %v2539, 7
        %v2581 = vrot.slane %v2542, 7
        %v2582 = vrot.slane %v2545, 7
        %v2583 = vrot.slane %v2548, 7
        %v2584 = vrot.slane %v2551, 7
        %v2585 = vrot.slane %v2554, 7
        %v2586 = vrot.slane %v2557, 7
        %v2587 = vrot.slane %v2560, 7
        %v2588 = vrot.slane %v2563, 7
        %v2589 = vrot.slane %v2566, 7
        %v2590 = vrot.slane %v2569, 7
        %v2591 = vrot.slane %v2572, 7
        %v2592 = vrot.slane %v2575, 7
        %vm2593 = vcmp.lt.s32.totalorder %v1160, 1
        %v2594 = vsel %vm2593, %v2591, %v2592
        %v2595 = vsel %vm2593, %v2590, %v2591
        %v2596 = vsel %vm2593, %v2589, %v2590
        %v2597 = vsel %vm2593, %v2588, %v2589
        %v2598 = vsel %vm2593, %v2587, %v2588
        %v2599 = vsel %vm2593, %v2586, %v2587
        %v2600 = vsel %vm2593, %v2585, %v2586
        %v2601 = vsel %vm2593, %v2584, %v2585
        %v2602 = vsel %vm2593, %v2583, %v2584
        %v2603 = vsel %vm2593, %v2582, %v2583
        %v2604 = vsel %vm2593, %v2581, %v2582
        %v2605 = vsel %vm2593, %v2580, %v2581
        %v2606 = vsel %vm2593, %v2579, %v2580
        %v2607 = vsel %vm2593, %v2578, %v2579
        %v2608 = vsel %vm2593, %v2577, %v2578
        %v2609 = vsel %vm2593, %v2592, %v2577
        %v2610 = vsel %vm1192, 1, 0
        %v2611 = vsel %vm1193, 1, 0
        %v2612 = vsel %vm1194, 1, 0
        %v2613 = vsel %vm1195, 1, 0
        %v2614 = vsel %vm1196, 1, 0
        %v2615 = vsel %vm1197, 1, 0
        %v2616 = vsel %vm1198, 1, 0
        %v2617 = vsel %vm1199, 1, 0
        %v2618 = vsel %vm1200, 1, 0
        %v2619 = vsel %vm1201, 1, 0
        %v2620 = vsel %vm1202, 1, 0
        %v2621 = vsel %vm1203, 1, 0
        %v2622 = vsel %vm1204, 1, 0
        %v2623 = vsel %vm1205, 1, 0
        %v2624 = vsel %vm1206, 1, 0
        %v2625 = vsel %vm1207, 1, 0
        %vm2626 = vcmp.eq.s32.totalorder %v2610, 1
        %vm2627 = vcmp.eq.s32.totalorder %v2611, 1
        %vm2628 = vcmp.eq.s32.totalorder %v2612, 1
        %vm2629 = vcmp.eq.s32.totalorder %v2613, 1
        %vm2630 = vcmp.eq.s32.totalorder %v2614, 1
        %vm2631 = vcmp.eq.s32.totalorder %v2615, 1
        %vm2632 = vcmp.eq.s32.totalorder %v2616, 1
        %vm2633 = vcmp.eq.s32.totalorder %v2617, 1
        %vm2634 = vcmp.eq.s32.totalorder %v2618, 1
        %vm2635 = vcmp.eq.s32.totalorder %v2619, 1
        %vm2636 = vcmp.eq.s32.totalorder %v2620, 1
        %vm2637 = vcmp.eq.s32.totalorder %v2621, 1
        %vm2638 = vcmp.eq.s32.totalorder %v2622, 1
        %vm2639 = vcmp.eq.s32.totalorder %v2623, 1
        %vm2640 = vcmp.eq.s32.totalorder %v2624, 1
        %vm2641 = vcmp.eq.s32.totalorder %v2625, 1
        %v2642 = vsel %vm2626, %v2609, 0.0
        %v2643 = vsel %vm2627, %v2608, 0.0
        %v2644 = vsel %vm2628, %v2607, 0.0
        %v2645 = vsel %vm2629, %v2606, 0.0
        %v2646 = vsel %vm2630, %v2605, 0.0
        %v2647 = vsel %vm2631, %v2604, 0.0
        %v2648 = vsel %vm2632, %v2603, 0.0
        %v2649 = vsel %vm2633, %v2602, 0.0
        %v2650 = vsel %vm2634, %v2601, 0.0
        %v2651 = vsel %vm2635, %v2600, 0.0
        %v2652 = vsel %vm2636, %v2599, 0.0
        %v2653 = vsel %vm2637, %v2598, 0.0
        %v2654 = vsel %vm2638, %v2597, 0.0
        %v2655 = vsel %vm2639, %v2596, 0.0
        %v2656 = vsel %vm2640, %v2595, 0.0
        %v2657 = vsel %vm2641, %v2594, 0.0
        %v2658 = vadd.f32 %v2529, %v2642
        %v2659 = vadd.f32 %v2532, %v2643
        %v2660 = vadd.f32 %v2535, %v2644
        %v2661 = vadd.f32 %v2538, %v2645
        %v2662 = vadd.f32 %v2541, %v2646
        %v2663 = vadd.f32 %v2544, %v2647
        %v2664 = vadd.f32 %v2547, %v2648
        %v2665 = vadd.f32 %v2550, %v2649
        %v2666 = vadd.f32 %v2553, %v2650
        %v2667 = vadd.f32 %v2556, %v2651
        %v2668 = vadd.f32 %v2559, %v2652
        %v2669 = vadd.f32 %v2562, %v2653
        %v2670 = vadd.f32 %v2565, %v2654
        %v2671 = vadd.f32 %v2568, %v2655
        %v2672 = vadd.f32 %v2571, %v2656
        %v2673 = vadd.f32 %v2574, %v2657
        %v2674 = vrot.slane %v2531, 1
        %v2675 = vrot.slane %v2534, 1
        %v2676 = vrot.slane %v2537, 1
        %v2677 = vrot.slane %v2540, 1
        %v2678 = vrot.slane %v2543, 1
        %v2679 = vrot.slane %v2546, 1
        %v2680 = vrot.slane %v2549, 1
        %v2681 = vrot.slane %v2552, 1
        %v2682 = vrot.slane %v2555, 1
        %v2683 = vrot.slane %v2558, 1
        %v2684 = vrot.slane %v2561, 1
        %v2685 = vrot.slane %v2564, 1
        %v2686 = vrot.slane %v2567, 1
        %v2687 = vrot.slane %v2570, 1
        %v2688 = vrot.slane %v2573, 1
        %v2689 = vrot.slane %v2576, 1
        %vm2690 = vcmp.lt.s32.totalorder %v1160, 7
        %v2691 = vsel %vm2690, %v2688, %v2689
        %v2692 = vsel %vm2690, %v2687, %v2688
        %v2693 = vsel %vm2690, %v2686, %v2687
        %v2694 = vsel %vm2690, %v2685, %v2686
        %v2695 = vsel %vm2690, %v2684, %v2685
        %v2696 = vsel %vm2690, %v2683, %v2684
        %v2697 = vsel %vm2690, %v2682, %v2683
        %v2698 = vsel %vm2690, %v2681, %v2682
        %v2699 = vsel %vm2690, %v2680, %v2681
        %v2700 = vsel %vm2690, %v2679, %v2680
        %v2701 = vsel %vm2690, %v2678, %v2679
        %v2702 = vsel %vm2690, %v2677, %v2678
        %v2703 = vsel %vm2690, %v2676, %v2677
        %v2704 = vsel %vm2690, %v2675, %v2676
        %v2705 = vsel %vm2690, %v2674, %v2675
        %v2706 = vsel %vm2690, %v2689, %v2674
        %v2707 = vsel %vm1208, 1, 0
        %v2708 = vsel %vm1209, 1, 0
        %v2709 = vsel %vm1210, 1, 0
        %v2710 = vsel %vm1211, 1, 0
        %v2711 = vsel %vm1212, 1, 0
        %v2712 = vsel %vm1213, 1, 0
        %v2713 = vsel %vm1214, 1, 0
        %v2714 = vsel %vm1215, 1, 0
        %v2715 = vsel %vm1216, 1, 0
        %v2716 = vsel %vm1217, 1, 0
        %v2717 = vsel %vm1218, 1, 0
        %v2718 = vsel %vm1219, 1, 0
        %v2719 = vsel %vm1220, 1, 0
        %v2720 = vsel %vm1221, 1, 0
        %v2721 = vsel %vm1222, 1, 0
        %v2722 = vsel %vm1223, 1, 0
        %vm2723 = vcmp.eq.s32.totalorder %v2707, 1
        %vm2724 = vcmp.eq.s32.totalorder %v2708, 1
        %vm2725 = vcmp.eq.s32.totalorder %v2709, 1
        %vm2726 = vcmp.eq.s32.totalorder %v2710, 1
        %vm2727 = vcmp.eq.s32.totalorder %v2711, 1
        %vm2728 = vcmp.eq.s32.totalorder %v2712, 1
        %vm2729 = vcmp.eq.s32.totalorder %v2713, 1
        %vm2730 = vcmp.eq.s32.totalorder %v2714, 1
        %vm2731 = vcmp.eq.s32.totalorder %v2715, 1
        %vm2732 = vcmp.eq.s32.totalorder %v2716, 1
        %vm2733 = vcmp.eq.s32.totalorder %v2717, 1
        %vm2734 = vcmp.eq.s32.totalorder %v2718, 1
        %vm2735 = vcmp.eq.s32.totalorder %v2719, 1
        %vm2736 = vcmp.eq.s32.totalorder %v2720, 1
        %vm2737 = vcmp.eq.s32.totalorder %v2721, 1
        %vm2738 = vcmp.eq.s32.totalorder %v2722, 1
        %v2739 = vsel %vm2723, %v2705, 0.0
        %v2740 = vsel %vm2724, %v2704, 0.0
        %v2741 = vsel %vm2725, %v2703, 0.0
        %v2742 = vsel %vm2726, %v2702, 0.0
        %v2743 = vsel %vm2727, %v2701, 0.0
        %v2744 = vsel %vm2728, %v2700, 0.0
        %v2745 = vsel %vm2729, %v2699, 0.0
        %v2746 = vsel %vm2730, %v2698, 0.0
        %v2747 = vsel %vm2731, %v2697, 0.0
        %v2748 = vsel %vm2732, %v2696, 0.0
        %v2749 = vsel %vm2733, %v2695, 0.0
        %v2750 = vsel %vm2734, %v2694, 0.0
        %v2751 = vsel %vm2735, %v2693, 0.0
        %v2752 = vsel %vm2736, %v2692, 0.0
        %v2753 = vsel %vm2737, %v2691, 0.0
        %v2754 = vsel %vm2738, %v2706, 0.0
        %v2755 = vadd.f32 %v2658, %v2739
        %v2756 = vadd.f32 %v2659, %v2740
        %v2757 = vadd.f32 %v2660, %v2741
        %v2758 = vadd.f32 %v2661, %v2742
        %v2759 = vadd.f32 %v2662, %v2743
        %v2760 = vadd.f32 %v2663, %v2744
        %v2761 = vadd.f32 %v2664, %v2745
        %v2762 = vadd.f32 %v2665, %v2746
        %v2763 = vadd.f32 %v2666, %v2747
        %v2764 = vadd.f32 %v2667, %v2748
        %v2765 = vadd.f32 %v2668, %v2749
        %v2766 = vadd.f32 %v2669, %v2750
        %v2767 = vadd.f32 %v2670, %v2751
        %v2768 = vadd.f32 %v2671, %v2752
        %v2769 = vadd.f32 %v2672, %v2753
        %v2770 = vadd.f32 %v2673, %v2754
        %v2772 = vlaneseq
        %v2773 = vshrl.u32 %v2772, 7
        %v2774 = vsub.s32 0, %v2773
        %v2775 = vrot.slane %v521, %v2774
        %v2777 = vmul.f32 %v2755, %v2775
        %v2778 = vmul.f32 %v2756, %v2775
        %v2779 = vmul.f32 %v2757, %v2775
        %v2780 = vmul.f32 %v2758, %v2775
        %v2781 = vmul.f32 %v2759, %v2775
        %v2782 = vmul.f32 %v2760, %v2775
        %v2783 = vmul.f32 %v2761, %v2775
        %v2784 = vmul.f32 %v2762, %v2775
        %v2785 = vmul.f32 %v2763, %v2775
        %v2786 = vmul.f32 %v2764, %v2775
        %v2787 = vmul.f32 %v2765, %v2775
        %v2788 = vmul.f32 %v2766, %v2775
        %v2789 = vmul.f32 %v2767, %v2775
        %v2790 = vmul.f32 %v2768, %v2775
        %v2791 = vmul.f32 %v2769, %v2775
        %v2792 = vmul.f32 %v2770, %v2775
        %v2794 = vlaneseq
        %v2795 = vshrl.u32 %v2794, 7
        %v2796 = vsub.s32 0, %v2795
        %v2797 = vrot.slane %v522, %v2796
        %v2799 = vadd.f32 %v2777, %v2797
        %v2800 = vadd.f32 %v2778, %v2797
        %v2801 = vadd.f32 %v2779, %v2797
        %v2802 = vadd.f32 %v2780, %v2797
        %v2803 = vadd.f32 %v2781, %v2797
        %v2804 = vadd.f32 %v2782, %v2797
        %v2805 = vadd.f32 %v2783, %v2797
        %v2806 = vadd.f32 %v2784, %v2797
        %v2807 = vadd.f32 %v2785, %v2797
        %v2808 = vadd.f32 %v2786, %v2797
        %v2809 = vadd.f32 %v2787, %v2797
        %v2810 = vadd.f32 %v2788, %v2797
        %v2811 = vadd.f32 %v2789, %v2797
        %v2812 = vadd.f32 %v2790, %v2797
        %v2813 = vadd.f32 %v2791, %v2797
        %v2814 = vadd.f32 %v2792, %v2797
        %v2815 = vmax.f32 %v2799, 0.0
        %v2816 = vmax.f32 %v2800, 0.0
        %v2817 = vmax.f32 %v2801, 0.0
        %v2818 = vmax.f32 %v2802, 0.0
        %v2819 = vmax.f32 %v2803, 0.0
        %v2820 = vmax.f32 %v2804, 0.0
        %v2821 = vmax.f32 %v2805, 0.0
        %v2822 = vmax.f32 %v2806, 0.0
        %v2823 = vmax.f32 %v2807, 0.0
        %v2824 = vmax.f32 %v2808, 0.0
        %v2825 = vmax.f32 %v2809, 0.0
        %v2826 = vmax.f32 %v2810, 0.0
        %v2827 = vmax.f32 %v2811, 0.0
        %v2828 = vmax.f32 %v2812, 0.0
        %v2829 = vmax.f32 %v2813, 0.0
        %v2830 = vmax.f32 %v2814, 0.0
        %v2831 = vld [vmem:[%s437] sm:$0xf]
        %v2832 = vld [vmem:[%s437 + $0x4] sm:$0xf]
        %v2833 = vld [vmem:[%s437 + $0x8] sm:$0xf]
        %v2834 = vld [vmem:[%s437 + $0xc] sm:$0xf]
        %v2835 = vld [vmem:[%s437 + $0x10] sm:$0xf]
        %v2836 = vld [vmem:[%s437 + $0x14] sm:$0xf]
        %v2837 = vld [vmem:[%s437 + $0x18] sm:$0xf]
        %v2838 = vld [vmem:[%s437 + $0x1c] sm:$0xf]
        %v2839 = vld [vmem:[%s437 + $0x20] sm:$0xf]
        %v2840 = vld [vmem:[%s437 + $0x24] sm:$0xf]
        %v2841 = vld [vmem:[%s437 + $0x28] sm:$0xf]
        %v2842 = vld [vmem:[%s437 + $0x2c] sm:$0xf]
        %v2843 = vld [vmem:[%s437 + $0x30] sm:$0xf]
        %v2844 = vld [vmem:[%s437 + $0x34] sm:$0xf]
        %v2845 = vld [vmem:[%s437 + $0x38] sm:$0xf]
        %v2846 = vld [vmem:[%s437 + $0x3c] sm:$0xf]
        %v2847 = vunpack.c.l.bf16 %v2831
        %v2848 = vunpack.c.l.bf16 %v2832
        %v2849 = vunpack.c.l.bf16 %v2833
        %v2850 = vunpack.c.l.bf16 %v2834
        %v2851 = vunpack.c.l.bf16 %v2835
        %v2852 = vunpack.c.l.bf16 %v2836
        %v2853 = vunpack.c.l.bf16 %v2837
        %v2854 = vunpack.c.l.bf16 %v2838
        %v2855 = vunpack.c.l.bf16 %v2839
        %v2856 = vunpack.c.l.bf16 %v2840
        %v2857 = vunpack.c.l.bf16 %v2841
        %v2858 = vunpack.c.l.bf16 %v2842
        %v2859 = vunpack.c.l.bf16 %v2843
        %v2860 = vunpack.c.l.bf16 %v2844
        %v2861 = vunpack.c.l.bf16 %v2845
        %v2862 = vunpack.c.l.bf16 %v2846
        %v2863 = vadd.f32 %v2847, %v2815
        %v2864 = vadd.f32 %v2848, %v2816
        %v2865 = vadd.f32 %v2849, %v2817
        %v2866 = vadd.f32 %v2850, %v2818
        %v2867 = vadd.f32 %v2851, %v2819
        %v2868 = vadd.f32 %v2852, %v2820
        %v2869 = vadd.f32 %v2853, %v2821
        %v2870 = vadd.f32 %v2854, %v2822
        %v2871 = vadd.f32 %v2855, %v2823
        %v2872 = vadd.f32 %v2856, %v2824
        %v2873 = vadd.f32 %v2857, %v2825
        %v2874 = vadd.f32 %v2858, %v2826
        %v2875 = vadd.f32 %v2859, %v2827
        %v2876 = vadd.f32 %v2860, %v2828
        %v2877 = vadd.f32 %v2861, %v2829
        %v2878 = vadd.f32 %v2862, %v2830
        %2879 = vst [vmem:[%s507] sm:$0xff] %v2863
        %2880 = vst [vmem:[%s507 + $0x8] sm:$0xff] %v2864
        %2881 = vst [vmem:[%s507 + $0x10] sm:$0xff] %v2865
        %2882 = vst [vmem:[%s507 + $0x18] sm:$0xff] %v2866
        %2883 = vst [vmem:[%s507 + $0x20] sm:$0xff] %v2867
        %2884 = vst [vmem:[%s507 + $0x28] sm:$0xff] %v2868
        %2885 = vst [vmem:[%s507 + $0x30] sm:$0xff] %v2869
        %2886 = vst [vmem:[%s507 + $0x38] sm:$0xff] %v2870
        %2887 = vst [vmem:[%s507 + $0x40] sm:$0xff] %v2871
        %2888 = vst [vmem:[%s507 + $0x48] sm:$0xff] %v2872
        %2889 = vst [vmem:[%s507 + $0x50] sm:$0xff] %v2873
        %2890 = vst [vmem:[%s507 + $0x58] sm:$0xff] %v2874
        %2891 = vst [vmem:[%s507 + $0x60] sm:$0xff] %v2875
        %2892 = vst [vmem:[%s507 + $0x68] sm:$0xff] %v2876
        %2893 = vst [vmem:[%s507 + $0x70] sm:$0xff] %v2877
        %2894 = vst [vmem:[%s507 + $0x78] sm:$0xff] %v2878
        %s2895 = sand.u32 %s278, 1
        %s2896 = scalar_lea.sflag [#allocation5], %s2895
        %s2897 = sand.u32 %s278, 1
        %s2898 = smul.addr %s2897, 128
        %s2899 = scalar_lea.vmem [#allocation12], %s2898
        // Predicated region
        $region77: #{tpu_custom_call.1} parent=55 // pred_check
          %p2900 = pneg %p288
        $region78: #{tpu_custom_call.1} parent=55 // pred_check_branch
          %2902 = sbr.rel (%p2900) target = $region80
        $region79: #{tpu_custom_call.1} parent=55 // pred_region
          %s2903 = smul.u32 8, %s35
          %s2905 = ssub.s32 2048, 2048
          %2906 = vsyncadd %s2896, %s2905
          %s2907 = smul.addr %s2903, 2
          %s2908 = smul.addr %s34, 32
          %s2909 = sadd.s32 %s2907, %s2908
          %s2910 = smul.addr %s2909, 128
          %s2911 = scalar_lea.hbm %s9, %s2910
          %s2912 = sshll.u32 %s2899, 4
          %s2913 = int_to_ptr.vmem [resolvable:$true] %s2912
          %2918 = dma.vmem_to_hbm [thread:$0]  %s2913, 2048, %s2911, %s2896, 128, 128, 8
        $region80: #{tpu_custom_call.1} parent=55 // pred_fallthru
          _
      $region56: #{tpu_custom_call.1} parent=5 // pred_fallthru
        _
      %p2919 = scmp.le.s32.totalorder 2, %s25
      // Predicated region
      $region81: #{tpu_custom_call.1} parent=5 // pred_check
        %p2920 = pneg %p2919
      $region82: #{tpu_custom_call.1} parent=5 // pred_check_branch
        %2922 = sbr.rel (%p2920) target = $region84
      $region83: #{tpu_custom_call.1} parent=5 // pred_region
        %s2923 = ssub.s32 %s25, 2
        // Predicated region
        $region85: #{tpu_custom_call.1} parent=83 // pred_check
          %p2924 = pneg %p294
        $region86: #{tpu_custom_call.1} parent=83 // pred_check_branch
          %2926 = sbr.rel (%p2924) target = $region88
        $region87: #{tpu_custom_call.1} parent=83 // pred_region
          %s2927 = sand.u32 %s279, 1
          %s2928 = scalar_lea.sflag [#allocation5], %s2927
          %s2929 = sand.u32 %s279, 1
          %s2930 = smul.addr %s2929, 128
          %s2931 = scalar_lea.vmem [#allocation12], %s2930
          %2932 = dma.done %s2928, 2048
        $region88: #{tpu_custom_call.1} parent=83 // pred_fallthru
          _
      $region84: #{tpu_custom_call.1} parent=5 // pred_fallthru
        _
    $region6: #{tpu_custom_call.1} parent=1 // loop_footer
      %s29 = sadd.s32 1, %s25
    $region7: #{tpu_custom_call.1} parent=1 // loop_footer_branch
      %24 = sbr.rel target = $region3
    $region8: #{tpu_custom_call.1} parent=1 // loop_exit
      _
    %2933 = vsyncpa [#allocation4], 1
    %s2934 = scalar_lea.sflag [#allocation4], 1
    %2935 = vsyncpa %s2934, 1
    %2936 = vsyncpa [#allocation7], 1
    %s2937 = scalar_lea.sflag [#allocation7], 1
    %2938 = vsyncpa %s2937, 1
    %2939 = vsyncpa [#allocation10], 1
    %2940 = vsyncpa [#allocation5], 1
    %s2941 = scalar_lea.sflag [#allocation5], 1
    %2942 = vsyncpa %s2941, 1

</llo_original>
